<compile_context>
chip_gen: v7x
topology: tpu7x:2x2x1
jax: 0.10.0
libtpu: 0.0.40
codegen_flags: <defaults>
</compile_context>

<pallas_src>
import functools

import jax
import jax.numpy as jnp
from jax.experimental import pallas as pl
from jax.experimental.pallas import tpu as pltpu

# Logical sizes
D_IN = 32 * 32 * 3          # 3072 (already a multiple of 128)
H1, H2, D_OUT = 300, 100, 10
# Lane-padded sizes
H1_P, H2_P, D_OUT_P = 384, 128, 128


def lenet_kernel(x_ref, w1_ref, b1_ref, w2_ref, b2_ref, w3_ref, b3_ref, o_ref):
    # x_ref: [TB, 3072] bf16 ; w1: [3072, 384] bf16 ; w2: [384, 128] bf16
    # w3: [128, 128] bf16 ; biases: [1, N] f32 ; o_ref: [TB, 128] f32
    x = x_ref[...]
    h1 = jnp.dot(x, w1_ref[...], preferred_element_type=jnp.float32) + b1_ref[...]
    h1 = jnp.maximum(h1, 0.0).astype(jnp.bfloat16)                     # ReLU
    h2 = jnp.dot(h1, w2_ref[...], preferred_element_type=jnp.float32) + b2_ref[...]
    h2 = jnp.maximum(h2, 0.0).astype(jnp.bfloat16)                     # ReLU
    o_ref[...] = (
        jnp.dot(h2, w3_ref[...], preferred_element_type=jnp.float32) + b3_ref[...]
    )


def _pick_tile(batch):
    """Batch tile: 512 for big batches, else batch rounded up to a sublane multiple."""
    if batch >= 512:
        return 512
    return max(8, ((batch + 7) // 8) * 8)


@functools.partial(jax.jit, static_argnames=())
def lenet_300_100_cifar(x, params):
    """x: [B, 3, 32, 32] float32 (NCHW). Returns logits [B, 10] float32."""
    w1, b1, w2, b2, w3, b3 = params        # padded, w* in bf16, b* in f32
    B = x.shape[0]
    x_flat = x.reshape(B, D_IN).astype(jnp.bfloat16)   # same flatten as torch .view

    TB = _pick_tile(B)
    grid_b = pl.cdiv(B, TB)
    B_pad = grid_b * TB
    if B_pad != B:
        x_flat = jnp.pad(x_flat, ((0, B_pad - B), (0, 0)))

    const = lambda i: (0, 0)               # weights/biases resident across grid
    out_padded = pl.pallas_call(
        lenet_kernel,
        out_shape=jax.ShapeDtypeStruct((B_pad, D_OUT_P), jnp.float32),
        grid=(grid_b,),
        in_specs=[
            pl.BlockSpec((TB, D_IN), lambda i: (i, 0)),       # x tile streams
            pl.BlockSpec((D_IN, H1_P), const),                # w1
            pl.BlockSpec((1, H1_P), const),                   # b1
            pl.BlockSpec((H1_P, H2_P), const),                # w2
            pl.BlockSpec((1, H2_P), const),                   # b2
            pl.BlockSpec((H2_P, D_OUT_P), const),             # w3
            pl.BlockSpec((1, D_OUT_P), const),                # b3
        ],
        out_specs=pl.BlockSpec((TB, D_OUT_P), lambda i: (i, 0)),
        compiler_params=pltpu.CompilerParams(
            dimension_semantics=("parallel",),                # megacore on v7x
            vmem_limit_bytes=48 * 1024 * 1024,                # headroom on v7x 64 MiB
        ),
    )(x_flat, w1, b1, w2, b2, w3, b3)

    return out_padded[:B, :D_OUT]


def init_params(key):
    """Deterministic init (torch nn.Linear-style uniform bounds), then
    zero-pad feature dims to lane multiples and cast weights to bf16 once."""
    def linear(key, fan_in, fan_out, fan_in_pad, fan_out_pad):
        kw, kb = jax.random.split(key)
        bound = 1.0 / (fan_in ** 0.5)
        w = jax.random.uniform(kw, (fan_in, fan_out), jnp.float32, -bound, bound)
        b = jax.random.uniform(kb, (1, fan_out), jnp.float32, -bound, bound)
        # zero-pad (exact: padded lanes produce 0 pre-ReLU contribution)
        w = jnp.pad(w, ((0, fan_in_pad - fan_in), (0, fan_out_pad - fan_out)))
        b = jnp.pad(b, ((0, 0), (0, fan_out_pad - fan_out)))
        return w.astype(jnp.bfloat16), b   # weights bf16, bias f32

    k1, k2, k3 = jax.random.split(key, 3)
    w1, b1 = linear(k1, D_IN, H1, D_IN, H1_P)
    w2, b2 = linear(k2, H1, H2, H1_P, H2_P)
    w3, b3 = linear(k3, H2, D_OUT, H2_P, D_OUT_P)
    return (w1, b1, w2, b2, w3, b3)


def reference_forward(x, params):
    """Plain-JAX reference with the same numerics (bf16 operands, f32 accum)."""
    w1, b1, w2, b2, w3, b3 = params
    h = x.reshape(x.shape[0], D_IN).astype(jnp.bfloat16)
    h = jnp.maximum(jnp.dot(h, w1, preferred_element_type=jnp.float32) + b1, 0.0)
    h = jnp.maximum(
        jnp.dot(h.astype(jnp.bfloat16), w2, preferred_element_type=jnp.float32) + b2,
        0.0,
    )
    out = jnp.dot(h.astype(jnp.bfloat16), w3, preferred_element_type=jnp.float32) + b3
    return out[:, :D_OUT]


if __name__ == "__main__":
    key = jax.random.PRNGKey(0)
    kx, kp = jax.random.split(key)

    B = 2
    x = jax.random.normal(kx, (B, 3, 32, 32), jnp.float32)   # NCHW like PyTorch
    params = init_params(kp)

    out = jax.block_until_ready(lenet_300_100_cifar(x, params))
    ref = jax.block_until_ready(reference_forward(x, params))

    assert out.shape == (B, 10), out.shape
    assert jnp.allclose(out, ref, atol=2e-2, rtol=2e-2), "mismatch vs reference"
    print("KERNEL_OK")
</pallas_src>

<mosaic_0001>
module attributes {stable_mosaic.version = 11 : i64} {
  func.func @lenet_kernel(%arg0: i32, %arg1: memref<8x3072xbf16, #tpu.memory_space<vmem>>, %arg2: memref<3072x384xbf16, #tpu.memory_space<vmem>>, %arg3: memref<1x384xf32, #tpu.memory_space<vmem>>, %arg4: memref<384x128xbf16, #tpu.memory_space<vmem>>, %arg5: memref<1x128xf32, #tpu.memory_space<vmem>>, %arg6: memref<128x128xbf16, #tpu.memory_space<vmem>>, %arg7: memref<1x128xf32, #tpu.memory_space<vmem>>, %arg8: memref<8x128xf32, #tpu.memory_space<vmem>>) attributes {dimension_semantics = [#tpu.dimension_semantics<parallel>], iteration_bounds = array<i64: 1>, scalar_prefetch = 0 : i64, scratch_operands = 0 : i64, tpu.core_type = #tpu.core_type<tc>, window_params = [{transform_indices = @transform_0, window_bounds = array<i64: 8, 3072>}, {pipeline_mode = #tpu.pipeline_mode<synchronous>, transform_indices = @transform_1, window_bounds = array<i64: 3072, 384>}, {pipeline_mode = #tpu.pipeline_mode<synchronous>, transform_indices = @transform_2, window_bounds = array<i64: 1, 384>}, {pipeline_mode = #tpu.pipeline_mode<synchronous>, transform_indices = @transform_3, window_bounds = array<i64: 384, 128>}, {pipeline_mode = #tpu.pipeline_mode<synchronous>, transform_indices = @transform_4, window_bounds = array<i64: 1, 128>}, {pipeline_mode = #tpu.pipeline_mode<synchronous>, transform_indices = @transform_5, window_bounds = array<i64: 128, 128>}, {pipeline_mode = #tpu.pipeline_mode<synchronous>, transform_indices = @transform_6, window_bounds = array<i64: 1, 128>}, {transform_indices = @transform_7, window_bounds = array<i64: 8, 128>}]} {
    %c0 = arith.constant 0 : index
    %c0_0 = arith.constant 0 : index
    %0 = vector.load %arg1[%c0, %c0_0] : memref<8x3072xbf16, #tpu.memory_space<vmem>>, vector<8x3072xbf16>
    %c0_1 = arith.constant 0 : index
    %c0_2 = arith.constant 0 : index
    %1 = vector.load %arg2[%c0_1, %c0_2] : memref<3072x384xbf16, #tpu.memory_space<vmem>>, vector<3072x384xbf16>
    %cst = arith.constant dense<0.000000e+00> : vector<8x384xf32>
    %2 = tpu.matmul %0, %1, %cst {dimension_numbers = #tpu.dot_dimension_numbers<[1], [0], [0], [1], [0, 0, 1, 1], [], []>} : vector<8x3072xbf16>, vector<3072x384xbf16>, vector<8x384xf32> -> vector<8x384xf32>
    %c0_3 = arith.constant 0 : index
    %c0_4 = arith.constant 0 : index
    %3 = vector.load %arg3[%c0_3, %c0_4] : memref<1x384xf32, #tpu.memory_space<vmem>>, vector<1x384xf32>
    %4 = vector.broadcast %3 : vector<1x384xf32> to vector<8x384xf32>
    %5 = arith.addf %2, %4 : vector<8x384xf32>
    %cst_5 = arith.constant 0.000000e+00 : f32
    %6 = vector.broadcast %cst_5 : f32 to vector<8x384xf32>
    %7 = arith.maximumf %5, %6 : vector<8x384xf32>
    %8 = arith.truncf %7 : vector<8x384xf32> to vector<8x384xbf16>
    %c0_6 = arith.constant 0 : index
    %c0_7 = arith.constant 0 : index
    %9 = vector.load %arg4[%c0_6, %c0_7] : memref<384x128xbf16, #tpu.memory_space<vmem>>, vector<384x128xbf16>
    %cst_8 = arith.constant dense<0.000000e+00> : vector<8x128xf32>
    %10 = tpu.matmul %8, %9, %cst_8 {dimension_numbers = #tpu.dot_dimension_numbers<[1], [0], [0], [1], [0, 0, 1, 1], [], []>} : vector<8x384xbf16>, vector<384x128xbf16>, vector<8x128xf32> -> vector<8x128xf32>
    %c0_9 = arith.constant 0 : index
    %c0_10 = arith.constant 0 : index
    %11 = vector.load %arg5[%c0_9, %c0_10] : memref<1x128xf32, #tpu.memory_space<vmem>>, vector<1x128xf32>
    %12 = vector.broadcast %11 : vector<1x128xf32> to vector<8x128xf32>
    %13 = arith.addf %10, %12 : vector<8x128xf32>
    %cst_11 = arith.constant 0.000000e+00 : f32
    %14 = vector.broadcast %cst_11 : f32 to vector<8x128xf32>
    %15 = arith.maximumf %13, %14 : vector<8x128xf32>
    %16 = arith.truncf %15 : vector<8x128xf32> to vector<8x128xbf16>
    %c0_12 = arith.constant 0 : index
    %c0_13 = arith.constant 0 : index
    %17 = vector.load %arg6[%c0_12, %c0_13] : memref<128x128xbf16, #tpu.memory_space<vmem>>, vector<128x128xbf16>
    %cst_14 = arith.constant dense<0.000000e+00> : vector<8x128xf32>
    %18 = tpu.matmul %16, %17, %cst_14 {dimension_numbers = #tpu.dot_dimension_numbers<[1], [0], [0], [1], [0, 0, 1, 1], [], []>} : vector<8x128xbf16>, vector<128x128xbf16>, vector<8x128xf32> -> vector<8x128xf32>
    %c0_15 = arith.constant 0 : index
    %c0_16 = arith.constant 0 : index
    %19 = vector.load %arg7[%c0_15, %c0_16] : memref<1x128xf32, #tpu.memory_space<vmem>>, vector<1x128xf32>
    %20 = vector.broadcast %19 : vector<1x128xf32> to vector<8x128xf32>
    %21 = arith.addf %18, %20 : vector<8x128xf32>
    %c0_17 = arith.constant 0 : index
    %c0_18 = arith.constant 0 : index
    %22 = vector.load %arg8[%c0_17, %c0_18] : memref<8x128xf32, #tpu.memory_space<vmem>>, vector<8x128xf32>
    tpu.vector_store %arg8[%c0_17, %c0_18], %21 {strides = array<i32>} : memref<8x128xf32, #tpu.memory_space<vmem>>, vector<8x128xf32>,
    return
  }
  func.func @transform_0(%arg0: i32) -> (i32, i32) {
    %c0_i32 = arith.constant 0 : i32
    %c0_i32_0 = arith.constant 0 : i32
    return %arg0, %c0_i32 : i32, i32
  }
  func.func @transform_1(%arg0: i32) -> (i32, i32) {
    %c0_i32 = arith.constant 0 : i32
    %c0_i32_0 = arith.constant 0 : i32
    %c0_i32_1 = arith.constant 0 : i32
    return %c0_i32, %c0_i32_0 : i32, i32
  }
  func.func @transform_2(%arg0: i32) -> (i32, i32) {
    %c0_i32 = arith.constant 0 : i32
    %c0_i32_0 = arith.constant 0 : i32
    %c0_i32_1 = arith.constant 0 : i32
    return %c0_i32, %c0_i32_0 : i32, i32
  }
  func.func @transform_3(%arg0: i32) -> (i32, i32) {
    %c0_i32 = arith.constant 0 : i32
    %c0_i32_0 = arith.constant 0 : i32
    %c0_i32_1 = arith.constant 0 : i32
    return %c0_i32, %c0_i32_0 : i32, i32
  }
  func.func @transform_4(%arg0: i32) -> (i32, i32) {
    %c0_i32 = arith.constant 0 : i32
    %c0_i32_0 = arith.constant 0 : i32
    %c0_i32_1 = arith.constant 0 : i32
    return %c0_i32, %c0_i32_0 : i32, i32
  }
  func.func @transform_5(%arg0: i32) -> (i32, i32) {
    %c0_i32 = arith.constant 0 : i32
    %c0_i32_0 = arith.constant 0 : i32
    %c0_i32_1 = arith.constant 0 : i32
    return %c0_i32, %c0_i32_0 : i32, i32
  }
  func.func @transform_6(%arg0: i32) -> (i32, i32) {
    %c0_i32 = arith.constant 0 : i32
    %c0_i32_0 = arith.constant 0 : i32
    %c0_i32_1 = arith.constant 0 : i32
    return %c0_i32, %c0_i32_0 : i32, i32
  }
  func.func @transform_7(%arg0: i32) -> (i32, i32) {
    %c0_i32 = arith.constant 0 : i32
    %c0_i32_0 = arith.constant 0 : i32
    return %arg0, %c0_i32 : i32, i32
  }
}

</mosaic_0001>

<llo_original>
// kernel: lenet_300_100_cifar.1
$region0: #{lenet_300_100_cifar.1}
  #allocation0 [shape = 'u32[]', space=smem, size = 0x4, offset = 0x4, fixed_abs, tag = 'smem constant byte address 0x4 - core index']
  #allocation1 [shape = 'u32[144,128]{1,0:T(1,128)}', space=vmem, size = 0x12000, scoped, tag = 'internal scratch']
  %s0 = inlined_call_operand.vmem [shape: bf16[8,3072], index: 0, kind: input, shape index: {}]
  %s1 = inlined_call_operand.hbm [shape: bf16[3072,384], index: 1, kind: input, shape index: {}]
  %s2 = inlined_call_operand.hbm [shape: f32[1,384], index: 2, kind: input, shape index: {}]
  %s3 = inlined_call_operand.hbm [shape: bf16[384,128], index: 3, kind: input, shape index: {}]
  %s4 = inlined_call_operand.hbm [shape: f32[1,128], index: 4, kind: input, shape index: {}]
  %s5 = inlined_call_operand.hbm [shape: bf16[128,128], index: 5, kind: input, shape index: {}]
  %s6 = inlined_call_operand.hbm [shape: f32[1,128], index: 6, kind: input, shape index: {}]
  %s7 = inlined_call_operand.vmem [shape: f32[8,128], index: 7, kind: output, shape index: {}]
  %s8 = sld [smem:[#allocation0]]
  $region62: #{lenet_300_100_cifar.1} parent=0
    _
  %s10 = ssub.s32 1, %s8
  %s11 = scalar_select 0, %s10, %s8
  $region1: #{lenet_300_100_cifar.1} parent=0
    #allocation2 [shape = 'u8[2359296]{0}', space=vmem, size = 0x240000, scoped, tag = 'input window, operand 1, single buffered']
    #allocation3 [shape = 's32[1]{0}', space=sflag, size = 0x4, scoped, tag = 'scoped memory for lenet_300_100_cifar.1']
    #allocation4 [shape = 'u8[1536]{0}', space=vmem, size = 0x800, scoped, tag = 'input window, operand 2, single buffered']
    #allocation5 [shape = 's32[1]{0}', space=sflag, size = 0x4, scoped, tag = 'scoped memory for lenet_300_100_cifar.1']
    #allocation6 [shape = 'u8[98304]{0}', space=vmem, size = 0x18000, scoped, tag = 'input window, operand 3, single buffered']
    #allocation7 [shape = 'u8[512]{0}', space=vmem, size = 0x400, scoped, tag = 'input window, operand 4, single buffered']
    #allocation8 [shape = 's32[1]{0}', space=sflag, size = 0x4, scoped, tag = 'scoped memory for lenet_300_100_cifar.1']
    #allocation9 [shape = 'u8[32768]{0}', space=vmem, size = 0x8000, scoped, tag = 'input window, operand 5, single buffered']
    #allocation10 [shape = 'u8[512]{0}', space=vmem, size = 0x400, scoped, tag = 'input window, operand 6, single buffered']
    #allocation11 [shape = 's32[1]{0}', space=sflag, size = 0x4, scoped, tag = 'scoped memory for lenet_300_100_cifar.1']
    %12 = vsyncpa [#allocation3], 0
    %13 = vsyncpa [#allocation5], 0
    %14 = vsyncpa [#allocation8], 0
    %15 = vsyncpa [#allocation11], 0
    // Predicated region
    $region2: #{lenet_300_100_cifar.1} parent=1 // pred_check
      _
    $region3: #{lenet_300_100_cifar.1} parent=1 // pred_check_branch
      %17 = sbr.rel (0) target = $region5
    $region4: #{lenet_300_100_cifar.1} parent=1 // pred_region
      _
    $region5: #{lenet_300_100_cifar.1} parent=1 // pred_fallthru
      _
    // Predicated region
    $region6: #{lenet_300_100_cifar.1} parent=1 // pred_check
      _
    $region7: #{lenet_300_100_cifar.1} parent=1 // pred_check_branch
      %19 = sbr.rel (0) target = $region9
    $region8: #{lenet_300_100_cifar.1} parent=1 // pred_region
      %s21 = ssub.s32 73728, 73728
      %22 = vsyncadd [#allocation3], %s21
      %s23 = sshll.u32 [#allocation2], 4
      %s24 = int_to_ptr.vmem [resolvable:$true] %s23
      %29 = dma.hbm_to_vmem [thread:$0]  %s1, 73728, %s24, [#allocation3], 192, 192, 12
    $region9: #{lenet_300_100_cifar.1} parent=1 // pred_fallthru
      _
    // Predicated region
    $region10: #{lenet_300_100_cifar.1} parent=1 // pred_check
      _
    $region11: #{lenet_300_100_cifar.1} parent=1 // pred_check_branch
      %31 = sbr.rel (0) target = $region13
    $region12: #{lenet_300_100_cifar.1} parent=1 // pred_region
      %s33 = ssub.s32 48, 48
      %34 = vsyncadd [#allocation5], %s33
      %s36 = sshll.u32 [#allocation4], 4
      %s37 = int_to_ptr.vmem [resolvable:$true] %s36
      %39 = dma.hbm_to_vmem [thread:$0]  %s2, 48, %s37, [#allocation5]
    $region13: #{lenet_300_100_cifar.1} parent=1 // pred_fallthru
      _
    // Predicated region
    $region14: #{lenet_300_100_cifar.1} parent=1 // pred_check
      _
    $region15: #{lenet_300_100_cifar.1} parent=1 // pred_check_branch
      %41 = sbr.rel (0) target = $region17
    $region16: #{lenet_300_100_cifar.1} parent=1 // pred_region
      %s43 = ssub.s32 3072, 3072
      %44 = vsyncadd [#allocation5], %s43
      %s45 = sshll.u32 [#allocation6], 4
      %s46 = int_to_ptr.vmem [resolvable:$true] %s45
      %51 = dma.hbm_to_vmem [thread:$0]  %s3, 3072, %s46, [#allocation5], 64, 64, 4
    $region17: #{lenet_300_100_cifar.1} parent=1 // pred_fallthru
      _
    // Predicated region
    $region18: #{lenet_300_100_cifar.1} parent=1 // pred_check
      _
    $region19: #{lenet_300_100_cifar.1} parent=1 // pred_check_branch
      %53 = sbr.rel (0) target = $region21
    $region20: #{lenet_300_100_cifar.1} parent=1 // pred_region
      %s55 = ssub.s32 16, 16
      %56 = vsyncadd [#allocation8], %s55
      %s58 = sshll.u32 [#allocation7], 4
      %s59 = int_to_ptr.vmem [resolvable:$true] %s58
      %61 = dma.hbm_to_vmem [thread:$0]  %s4, 16, %s59, [#allocation8]
    $region21: #{lenet_300_100_cifar.1} parent=1 // pred_fallthru
      _
    // Predicated region
    $region22: #{lenet_300_100_cifar.1} parent=1 // pred_check
      _
    $region23: #{lenet_300_100_cifar.1} parent=1 // pred_check_branch
      %63 = sbr.rel (0) target = $region25
    $region24: #{lenet_300_100_cifar.1} parent=1 // pred_region
      %s65 = ssub.s32 1024, 1024
      %66 = vsyncadd [#allocation8], %s65
      %s67 = sshll.u32 [#allocation9], 4
      %s68 = int_to_ptr.vmem [resolvable:$true] %s67
      %73 = dma.hbm_to_vmem [thread:$0]  %s5, 1024, %s68, [#allocation8], 64, 64, 4
    $region25: #{lenet_300_100_cifar.1} parent=1 // pred_fallthru
      _
    // Predicated region
    $region26: #{lenet_300_100_cifar.1} parent=1 // pred_check
      _
    $region27: #{lenet_300_100_cifar.1} parent=1 // pred_check_branch
      %75 = sbr.rel (0) target = $region29
    $region28: #{lenet_300_100_cifar.1} parent=1 // pred_region
      %s77 = ssub.s32 16, 16
      %78 = vsyncadd [#allocation11], %s77
      %s80 = sshll.u32 [#allocation10], 4
      %s81 = int_to_ptr.vmem [resolvable:$true] %s80
      %83 = dma.hbm_to_vmem [thread:$0]  %s6, 16, %s81, [#allocation11]
    $region29: #{lenet_300_100_cifar.1} parent=1 // pred_fallthru
      _
    // Predicated region
    $region30: #{lenet_300_100_cifar.1} parent=1 // pred_check
      _
    $region31: #{lenet_300_100_cifar.1} parent=1 // pred_check_branch
      %85 = sbr.rel (0) target = $region33
    $region32: #{lenet_300_100_cifar.1} parent=1 // pred_region
      %86 = dma.done [#allocation3], 73728
    $region33: #{lenet_300_100_cifar.1} parent=1 // pred_fallthru
      _
    // Predicated region
    $region34: #{lenet_300_100_cifar.1} parent=1 // pred_check
      _
    $region35: #{lenet_300_100_cifar.1} parent=1 // pred_check_branch
      %88 = sbr.rel (0) target = $region37
    $region36: #{lenet_300_100_cifar.1} parent=1 // pred_region
      %89 = dma.done [#allocation5], 48
    $region37: #{lenet_300_100_cifar.1} parent=1 // pred_fallthru
      _
    // Predicated region
    $region38: #{lenet_300_100_cifar.1} parent=1 // pred_check
      _
    $region39: #{lenet_300_100_cifar.1} parent=1 // pred_check_branch
      %91 = sbr.rel (0) target = $region41
    $region40: #{lenet_300_100_cifar.1} parent=1 // pred_region
      %92 = dma.done [#allocation5], 3072
    $region41: #{lenet_300_100_cifar.1} parent=1 // pred_fallthru
      _
    // Predicated region
    $region42: #{lenet_300_100_cifar.1} parent=1 // pred_check
      _
    $region43: #{lenet_300_100_cifar.1} parent=1 // pred_check_branch
      %94 = sbr.rel (0) target = $region45
    $region44: #{lenet_300_100_cifar.1} parent=1 // pred_region
      %95 = dma.done [#allocation8], 16
    $region45: #{lenet_300_100_cifar.1} parent=1 // pred_fallthru
      _
    // Predicated region
    $region46: #{lenet_300_100_cifar.1} parent=1 // pred_check
      _
    $region47: #{lenet_300_100_cifar.1} parent=1 // pred_check_branch
      %97 = sbr.rel (0) target = $region49
    $region48: #{lenet_300_100_cifar.1} parent=1 // pred_region
      %98 = dma.done [#allocation8], 1024
    $region49: #{lenet_300_100_cifar.1} parent=1 // pred_fallthru
      _
    // Predicated region
    $region50: #{lenet_300_100_cifar.1} parent=1 // pred_check
      _
    $region51: #{lenet_300_100_cifar.1} parent=1 // pred_check_branch
      %100 = sbr.rel (0) target = $region53
    $region52: #{lenet_300_100_cifar.1} parent=1 // pred_region
      %101 = dma.done [#allocation11], 16
    $region53: #{lenet_300_100_cifar.1} parent=1 // pred_fallthru
      _
    %v103 = vld [vmem:[%s0] sm:$0xff]
    %v104 = vld [vmem:[%s0 + $0x8] sm:$0xff]
    %v105 = vld [vmem:[%s0 + $0x10] sm:$0xff]
    %v106 = vld [vmem:[%s0 + $0x18] sm:$0xff]
    %v107 = vld [vmem:[%s0 + $0x20] sm:$0xff]
    %v108 = vld [vmem:[%s0 + $0x28] sm:$0xff]
    %v109 = vld [vmem:[%s0 + $0x30] sm:$0xff]
    %v110 = vld [vmem:[%s0 + $0x38] sm:$0xff]
    %v111 = vld [vmem:[%s0 + $0x40] sm:$0xff]
    %v112 = vld [vmem:[%s0 + $0x48] sm:$0xff]
    %v113 = vld [vmem:[%s0 + $0x50] sm:$0xff]
    %v114 = vld [vmem:[%s0 + $0x58] sm:$0xff]
    %v115 = vld [vmem:[#allocation2] sm:$0xff]
    %v116 = vld [vmem:[#allocation2 + $0x8] sm:$0xf]
    %v117 = vld [vmem:[#allocation2 + $0xc] sm:$0xff]
    %v118 = vld [vmem:[#allocation2 + $0x14] sm:$0xf]
    %v119 = vld [vmem:[#allocation2 + $0x18] sm:$0xff]
    %v120 = vld [vmem:[#allocation2 + $0x20] sm:$0xf]
    %v121 = vld [vmem:[#allocation2 + $0x24] sm:$0xff]
    %v122 = vld [vmem:[#allocation2 + $0x2c] sm:$0xf]
    %v123 = vld [vmem:[#allocation2 + $0x30] sm:$0xff]
    %v124 = vld [vmem:[#allocation2 + $0x38] sm:$0xf]
    %v125 = vld [vmem:[#allocation2 + $0x3c] sm:$0xff]
    %v126 = vld [vmem:[#allocation2 + $0x44] sm:$0xf]
    %v127 = vld [vmem:[#allocation2 + $0x48] sm:$0xff]
    %v128 = vld [vmem:[#allocation2 + $0x50] sm:$0xf]
    %v129 = vld [vmem:[#allocation2 + $0x54] sm:$0xff]
    %v130 = vld [vmem:[#allocation2 + $0x5c] sm:$0xf]
    %v131 = vld [vmem:[#allocation2 + $0x60] sm:$0xff]
    %v132 = vld [vmem:[#allocation2 + $0x68] sm:$0xf]
    %v133 = vld [vmem:[#allocation2 + $0x6c] sm:$0xff]
    %v134 = vld [vmem:[#allocation2 + $0x74] sm:$0xf]
    %v135 = vld [vmem:[#allocation2 + $0x78] sm:$0xff]
    %v136 = vld [vmem:[#allocation2 + $0x80] sm:$0xf]
    %v137 = vld [vmem:[#allocation2 + $0x84] sm:$0xff]
    %v138 = vld [vmem:[#allocation2 + $0x8c] sm:$0xf]
    %v139 = vld [vmem:[#allocation2 + $0x90] sm:$0xff]
    %v140 = vld [vmem:[#allocation2 + $0x98] sm:$0xf]
    %v141 = vld [vmem:[#allocation2 + $0x9c] sm:$0xff]
    %v142 = vld [vmem:[#allocation2 + $0xa4] sm:$0xf]
    %v143 = vld [vmem:[#allocation2 + $0xa8] sm:$0xff]
    %v144 = vld [vmem:[#allocation2 + $0xb0] sm:$0xf]
    %v145 = vld [vmem:[#allocation2 + $0xb4] sm:$0xff]
    %v146 = vld [vmem:[#allocation2 + $0xbc] sm:$0xf]
    %v147 = vld [vmem:[#allocation2 + $0xc0] sm:$0xff]
    %v148 = vld [vmem:[#allocation2 + $0xc8] sm:$0xf]
    %v149 = vld [vmem:[#allocation2 + $0xcc] sm:$0xff]
    %v150 = vld [vmem:[#allocation2 + $0xd4] sm:$0xf]
    %v151 = vld [vmem:[#allocation2 + $0xd8] sm:$0xff]
    %v152 = vld [vmem:[#allocation2 + $0xe0] sm:$0xf]
    %v153 = vld [vmem:[#allocation2 + $0xe4] sm:$0xff]
    %v154 = vld [vmem:[#allocation2 + $0xec] sm:$0xf]
    %v155 = vld [vmem:[#allocation2 + $0xf0] sm:$0xff]
    %v156 = vld [vmem:[#allocation2 + $0xf8] sm:$0xf]
    %v157 = vld [vmem:[#allocation2 + $0xfc] sm:$0xff]
    %v158 = vld [vmem:[#allocation2 + $0x104] sm:$0xf]
    %v159 = vld [vmem:[#allocation2 + $0x108] sm:$0xff]
    %v160 = vld [vmem:[#allocation2 + $0x110] sm:$0xf]
    %v161 = vld [vmem:[#allocation2 + $0x114] sm:$0xff]
    %v162 = vld [vmem:[#allocation2 + $0x11c] sm:$0xf]
    %v163 = vld [vmem:[#allocation2 + $0x120] sm:$0xff]
    %v164 = vld [vmem:[#allocation2 + $0x128] sm:$0xf]
    %v165 = vld [vmem:[#allocation2 + $0x12c] sm:$0xff]
    %v166 = vld [vmem:[#allocation2 + $0x134] sm:$0xf]
    %v167 = vld [vmem:[#allocation2 + $0x138] sm:$0xff]
    %v168 = vld [vmem:[#allocation2 + $0x140] sm:$0xf]
    %v169 = vld [vmem:[#allocation2 + $0x144] sm:$0xff]
    %v170 = vld [vmem:[#allocation2 + $0x14c] sm:$0xf]
    %v171 = vld [vmem:[#allocation2 + $0x150] sm:$0xff]
    %v172 = vld [vmem:[#allocation2 + $0x158] sm:$0xf]
    %v173 = vld [vmem:[#allocation2 + $0x15c] sm:$0xff]
    %v174 = vld [vmem:[#allocation2 + $0x164] sm:$0xf]
    %v175 = vld [vmem:[#allocation2 + $0x168] sm:$0xff]
    %v176 = vld [vmem:[#allocation2 + $0x170] sm:$0xf]
    %v177 = vld [vmem:[#allocation2 + $0x174] sm:$0xff]
    %v178 = vld [vmem:[#allocation2 + $0x17c] sm:$0xf]
    %v179 = vld [vmem:[#allocation2 + $0x180] sm:$0xff]
    %v180 = vld [vmem:[#allocation2 + $0x188] sm:$0xf]
    %v181 = vld [vmem:[#allocation2 + $0x18c] sm:$0xff]
    %v182 = vld [vmem:[#allocation2 + $0x194] sm:$0xf]
    %v183 = vld [vmem:[#allocation2 + $0x198] sm:$0xff]
    %v184 = vld [vmem:[#allocation2 + $0x1a0] sm:$0xf]
    %v185 = vld [vmem:[#allocation2 + $0x1a4] sm:$0xff]
    %v186 = vld [vmem:[#allocation2 + $0x1ac] sm:$0xf]
    %v187 = vld [vmem:[#allocation2 + $0x1b0] sm:$0xff]
    %v188 = vld [vmem:[#allocation2 + $0x1b8] sm:$0xf]
    %v189 = vld [vmem:[#allocation2 + $0x1bc] sm:$0xff]
    %v190 = vld [vmem:[#allocation2 + $0x1c4] sm:$0xf]
    %v191 = vld [vmem:[#allocation2 + $0x1c8] sm:$0xff]
    %v192 = vld [vmem:[#allocation2 + $0x1d0] sm:$0xf]
    %v193 = vld [vmem:[#allocation2 + $0x1d4] sm:$0xff]
    %v194 = vld [vmem:[#allocation2 + $0x1dc] sm:$0xf]
    %v195 = vld [vmem:[#allocation2 + $0x1e0] sm:$0xff]
    %v196 = vld [vmem:[#allocation2 + $0x1e8] sm:$0xf]
    %v197 = vld [vmem:[#allocation2 + $0x1ec] sm:$0xff]
    %v198 = vld [vmem:[#allocation2 + $0x1f4] sm:$0xf]
    %v199 = vld [vmem:[#allocation2 + $0x1f8] sm:$0xff]
    %v200 = vld [vmem:[#allocation2 + $0x200] sm:$0xf]
    %v201 = vld [vmem:[#allocation2 + $0x204] sm:$0xff]
    %v202 = vld [vmem:[#allocation2 + $0x20c] sm:$0xf]
    %v203 = vld [vmem:[#allocation2 + $0x210] sm:$0xff]
    %v204 = vld [vmem:[#allocation2 + $0x218] sm:$0xf]
    %v205 = vld [vmem:[#allocation2 + $0x21c] sm:$0xff]
    %v206 = vld [vmem:[#allocation2 + $0x224] sm:$0xf]
    %v207 = vld [vmem:[#allocation2 + $0x228] sm:$0xff]
    %v208 = vld [vmem:[#allocation2 + $0x230] sm:$0xf]
    %v209 = vld [vmem:[#allocation2 + $0x234] sm:$0xff]
    %v210 = vld [vmem:[#allocation2 + $0x23c] sm:$0xf]
    %v211 = vld [vmem:[#allocation2 + $0x240] sm:$0xff]
    %v212 = vld [vmem:[#allocation2 + $0x248] sm:$0xf]
    %v213 = vld [vmem:[#allocation2 + $0x24c] sm:$0xff]
    %v214 = vld [vmem:[#allocation2 + $0x254] sm:$0xf]
    %v215 = vld [vmem:[#allocation2 + $0x258] sm:$0xff]
    %v216 = vld [vmem:[#allocation2 + $0x260] sm:$0xf]
    %v217 = vld [vmem:[#allocation2 + $0x264] sm:$0xff]
    %v218 = vld [vmem:[#allocation2 + $0x26c] sm:$0xf]
    %v219 = vld [vmem:[#allocation2 + $0x270] sm:$0xff]
    %v220 = vld [vmem:[#allocation2 + $0x278] sm:$0xf]
    %v221 = vld [vmem:[#allocation2 + $0x27c] sm:$0xff]
    %v222 = vld [vmem:[#allocation2 + $0x284] sm:$0xf]
    %v223 = vld [vmem:[#allocation2 + $0x288] sm:$0xff]
    %v224 = vld [vmem:[#allocation2 + $0x290] sm:$0xf]
    %v225 = vld [vmem:[#allocation2 + $0x294] sm:$0xff]
    %v226 = vld [vmem:[#allocation2 + $0x29c] sm:$0xf]
    %v227 = vld [vmem:[#allocation2 + $0x2a0] sm:$0xff]
    %v228 = vld [vmem:[#allocation2 + $0x2a8] sm:$0xf]
    %v229 = vld [vmem:[#allocation2 + $0x2ac] sm:$0xff]
    %v230 = vld [vmem:[#allocation2 + $0x2b4] sm:$0xf]
    %v231 = vld [vmem:[#allocation2 + $0x2b8] sm:$0xff]
    %v232 = vld [vmem:[#allocation2 + $0x2c0] sm:$0xf]
    %v233 = vld [vmem:[#allocation2 + $0x2c4] sm:$0xff]
    %v234 = vld [vmem:[#allocation2 + $0x2cc] sm:$0xf]
    %v235 = vld [vmem:[#allocation2 + $0x2d0] sm:$0xff]
    %v236 = vld [vmem:[#allocation2 + $0x2d8] sm:$0xf]
    %v237 = vld [vmem:[#allocation2 + $0x2dc] sm:$0xff]
    %v238 = vld [vmem:[#allocation2 + $0x2e4] sm:$0xf]
    %v239 = vld [vmem:[#allocation2 + $0x2e8] sm:$0xff]
    %v240 = vld [vmem:[#allocation2 + $0x2f0] sm:$0xf]
    %v241 = vld [vmem:[#allocation2 + $0x2f4] sm:$0xff]
    %v242 = vld [vmem:[#allocation2 + $0x2fc] sm:$0xf]
    %v243 = vld [vmem:[#allocation2 + $0x300] sm:$0xff]
    %v244 = vld [vmem:[#allocation2 + $0x308] sm:$0xf]
    %v245 = vld [vmem:[#allocation2 + $0x30c] sm:$0xff]
    %v246 = vld [vmem:[#allocation2 + $0x314] sm:$0xf]
    %v247 = vld [vmem:[#allocation2 + $0x318] sm:$0xff]
    %v248 = vld [vmem:[#allocation2 + $0x320] sm:$0xf]
    %v249 = vld [vmem:[#allocation2 + $0x324] sm:$0xff]
    %v250 = vld [vmem:[#allocation2 + $0x32c] sm:$0xf]
    %v251 = vld [vmem:[#allocation2 + $0x330] sm:$0xff]
    %v252 = vld [vmem:[#allocation2 + $0x338] sm:$0xf]
    %v253 = vld [vmem:[#allocation2 + $0x33c] sm:$0xff]
    %v254 = vld [vmem:[#allocation2 + $0x344] sm:$0xf]
    %v255 = vld [vmem:[#allocation2 + $0x348] sm:$0xff]
    %v256 = vld [vmem:[#allocation2 + $0x350] sm:$0xf]
    %v257 = vld [vmem:[#allocation2 + $0x354] sm:$0xff]
    %v258 = vld [vmem:[#allocation2 + $0x35c] sm:$0xf]
    %v259 = vld [vmem:[#allocation2 + $0x360] sm:$0xff]
    %v260 = vld [vmem:[#allocation2 + $0x368] sm:$0xf]
    %v261 = vld [vmem:[#allocation2 + $0x36c] sm:$0xff]
    %v262 = vld [vmem:[#allocation2 + $0x374] sm:$0xf]
    %v263 = vld [vmem:[#allocation2 + $0x378] sm:$0xff]
    %v264 = vld [vmem:[#allocation2 + $0x380] sm:$0xf]
    %v265 = vld [vmem:[#allocation2 + $0x384] sm:$0xff]
    %v266 = vld [vmem:[#allocation2 + $0x38c] sm:$0xf]
    %v267 = vld [vmem:[#allocation2 + $0x390] sm:$0xff]
    %v268 = vld [vmem:[#allocation2 + $0x398] sm:$0xf]
    %v269 = vld [vmem:[#allocation2 + $0x39c] sm:$0xff]
    %v270 = vld [vmem:[#allocation2 + $0x3a4] sm:$0xf]
    %v271 = vld [vmem:[#allocation2 + $0x3a8] sm:$0xff]
    %v272 = vld [vmem:[#allocation2 + $0x3b0] sm:$0xf]
    %v273 = vld [vmem:[#allocation2 + $0x3b4] sm:$0xff]
    %v274 = vld [vmem:[#allocation2 + $0x3bc] sm:$0xf]
    %v275 = vld [vmem:[#allocation2 + $0x3c0] sm:$0xff]
    %v276 = vld [vmem:[#allocation2 + $0x3c8] sm:$0xf]
    %v277 = vld [vmem:[#allocation2 + $0x3cc] sm:$0xff]
    %v278 = vld [vmem:[#allocation2 + $0x3d4] sm:$0xf]
    %v279 = vld [vmem:[#allocation2 + $0x3d8] sm:$0xff]
    %v280 = vld [vmem:[#allocation2 + $0x3e0] sm:$0xf]
    %v281 = vld [vmem:[#allocation2 + $0x3e4] sm:$0xff]
    %v282 = vld [vmem:[#allocation2 + $0x3ec] sm:$0xf]
    %v283 = vld [vmem:[#allocation2 + $0x3f0] sm:$0xff]
    %v284 = vld [vmem:[#allocation2 + $0x3f8] sm:$0xf]
    %v285 = vld [vmem:[#allocation2 + $0x3fc] sm:$0xff]
    %v286 = vld [vmem:[#allocation2 + $0x404] sm:$0xf]
    %v287 = vld [vmem:[#allocation2 + $0x408] sm:$0xff]
    %v288 = vld [vmem:[#allocation2 + $0x410] sm:$0xf]
    %v289 = vld [vmem:[#allocation2 + $0x414] sm:$0xff]
    %v290 = vld [vmem:[#allocation2 + $0x41c] sm:$0xf]
    %v291 = vld [vmem:[#allocation2 + $0x420] sm:$0xff]
    %v292 = vld [vmem:[#allocation2 + $0x428] sm:$0xf]
    %v293 = vld [vmem:[#allocation2 + $0x42c] sm:$0xff]
    %v294 = vld [vmem:[#allocation2 + $0x434] sm:$0xf]
    %v295 = vld [vmem:[#allocation2 + $0x438] sm:$0xff]
    %v296 = vld [vmem:[#allocation2 + $0x440] sm:$0xf]
    %v297 = vld [vmem:[#allocation2 + $0x444] sm:$0xff]
    %v298 = vld [vmem:[#allocation2 + $0x44c] sm:$0xf]
    %v299 = vld [vmem:[#allocation2 + $0x450] sm:$0xff]
    %v300 = vld [vmem:[#allocation2 + $0x458] sm:$0xf]
    %v301 = vld [vmem:[#allocation2 + $0x45c] sm:$0xff]
    %v302 = vld [vmem:[#allocation2 + $0x464] sm:$0xf]
    %v303 = vld [vmem:[#allocation2 + $0x468] sm:$0xff]
    %v304 = vld [vmem:[#allocation2 + $0x470] sm:$0xf]
    %v305 = vld [vmem:[#allocation2 + $0x474] sm:$0xff]
    %v306 = vld [vmem:[#allocation2 + $0x47c] sm:$0xf]
    %v307 = vld [vmem:[#allocation2 + $0x480] sm:$0xff]
    %v308 = vld [vmem:[#allocation2 + $0x488] sm:$0xf]
    %v309 = vld [vmem:[#allocation2 + $0x48c] sm:$0xff]
    %v310 = vld [vmem:[#allocation2 + $0x494] sm:$0xf]
    %v311 = vld [vmem:[#allocation2 + $0x498] sm:$0xff]
    %v312 = vld [vmem:[#allocation2 + $0x4a0] sm:$0xf]
    %v313 = vld [vmem:[#allocation2 + $0x4a4] sm:$0xff]
    %v314 = vld [vmem:[#allocation2 + $0x4ac] sm:$0xf]
    %v315 = vld [vmem:[#allocation2 + $0x4b0] sm:$0xff]
    %v316 = vld [vmem:[#allocation2 + $0x4b8] sm:$0xf]
    %v317 = vld [vmem:[#allocation2 + $0x4bc] sm:$0xff]
    %v318 = vld [vmem:[#allocation2 + $0x4c4] sm:$0xf]
    %v319 = vld [vmem:[#allocation2 + $0x4c8] sm:$0xff]
    %v320 = vld [vmem:[#allocation2 + $0x4d0] sm:$0xf]
    %v321 = vld [vmem:[#allocation2 + $0x4d4] sm:$0xff]
    %v322 = vld [vmem:[#allocation2 + $0x4dc] sm:$0xf]
    %v323 = vld [vmem:[#allocation2 + $0x4e0] sm:$0xff]
    %v324 = vld [vmem:[#allocation2 + $0x4e8] sm:$0xf]
    %v325 = vld [vmem:[#allocation2 + $0x4ec] sm:$0xff]
    %v326 = vld [vmem:[#allocation2 + $0x4f4] sm:$0xf]
    %v327 = vld [vmem:[#allocation2 + $0x4f8] sm:$0xff]
    %v328 = vld [vmem:[#allocation2 + $0x500] sm:$0xf]
    %v329 = vld [vmem:[#allocation2 + $0x504] sm:$0xff]
    %v330 = vld [vmem:[#allocation2 + $0x50c] sm:$0xf]
    %v331 = vld [vmem:[#allocation2 + $0x510] sm:$0xff]
    %v332 = vld [vmem:[#allocation2 + $0x518] sm:$0xf]
    %v333 = vld [vmem:[#allocation2 + $0x51c] sm:$0xff]
    %v334 = vld [vmem:[#allocation2 + $0x524] sm:$0xf]
    %v335 = vld [vmem:[#allocation2 + $0x528] sm:$0xff]
    %v336 = vld [vmem:[#allocation2 + $0x530] sm:$0xf]
    %v337 = vld [vmem:[#allocation2 + $0x534] sm:$0xff]
    %v338 = vld [vmem:[#allocation2 + $0x53c] sm:$0xf]
    %v339 = vld [vmem:[#allocation2 + $0x540] sm:$0xff]
    %v340 = vld [vmem:[#allocation2 + $0x548] sm:$0xf]
    %v341 = vld [vmem:[#allocation2 + $0x54c] sm:$0xff]
    %v342 = vld [vmem:[#allocation2 + $0x554] sm:$0xf]
    %v343 = vld [vmem:[#allocation2 + $0x558] sm:$0xff]
    %v344 = vld [vmem:[#allocation2 + $0x560] sm:$0xf]
    %v345 = vld [vmem:[#allocation2 + $0x564] sm:$0xff]
    %v346 = vld [vmem:[#allocation2 + $0x56c] sm:$0xf]
    %v347 = vld [vmem:[#allocation2 + $0x570] sm:$0xff]
    %v348 = vld [vmem:[#allocation2 + $0x578] sm:$0xf]
    %v349 = vld [vmem:[#allocation2 + $0x57c] sm:$0xff]
    %v350 = vld [vmem:[#allocation2 + $0x584] sm:$0xf]
    %v351 = vld [vmem:[#allocation2 + $0x588] sm:$0xff]
    %v352 = vld [vmem:[#allocation2 + $0x590] sm:$0xf]
    %v353 = vld [vmem:[#allocation2 + $0x594] sm:$0xff]
    %v354 = vld [vmem:[#allocation2 + $0x59c] sm:$0xf]
    %v355 = vld [vmem:[#allocation2 + $0x5a0] sm:$0xff]
    %v356 = vld [vmem:[#allocation2 + $0x5a8] sm:$0xf]
    %v357 = vld [vmem:[#allocation2 + $0x5ac] sm:$0xff]
    %v358 = vld [vmem:[#allocation2 + $0x5b4] sm:$0xf]
    %v359 = vld [vmem:[#allocation2 + $0x5b8] sm:$0xff]
    %v360 = vld [vmem:[#allocation2 + $0x5c0] sm:$0xf]
    %v361 = vld [vmem:[#allocation2 + $0x5c4] sm:$0xff]
    %v362 = vld [vmem:[#allocation2 + $0x5cc] sm:$0xf]
    %v363 = vld [vmem:[#allocation2 + $0x5d0] sm:$0xff]
    %v364 = vld [vmem:[#allocation2 + $0x5d8] sm:$0xf]
    %v365 = vld [vmem:[#allocation2 + $0x5dc] sm:$0xff]
    %v366 = vld [vmem:[#allocation2 + $0x5e4] sm:$0xf]
    %v367 = vld [vmem:[#allocation2 + $0x5e8] sm:$0xff]
    %v368 = vld [vmem:[#allocation2 + $0x5f0] sm:$0xf]
    %v369 = vld [vmem:[#allocation2 + $0x5f4] sm:$0xff]
    %v370 = vld [vmem:[#allocation2 + $0x5fc] sm:$0xf]
    %v371 = vld [vmem:[#allocation2 + $0x600] sm:$0xff]
    %v372 = vld [vmem:[#allocation2 + $0x608] sm:$0xf]
    %v373 = vld [vmem:[#allocation2 + $0x60c] sm:$0xff]
    %v374 = vld [vmem:[#allocation2 + $0x614] sm:$0xf]
    %v375 = vld [vmem:[#allocation2 + $0x618] sm:$0xff]
    %v376 = vld [vmem:[#allocation2 + $0x620] sm:$0xf]
    %v377 = vld [vmem:[#allocation2 + $0x624] sm:$0xff]
    %v378 = vld [vmem:[#allocation2 + $0x62c] sm:$0xf]
    %v379 = vld [vmem:[#allocation2 + $0x630] sm:$0xff]
    %v380 = vld [vmem:[#allocation2 + $0x638] sm:$0xf]
    %v381 = vld [vmem:[#allocation2 + $0x63c] sm:$0xff]
    %v382 = vld [vmem:[#allocation2 + $0x644] sm:$0xf]
    %v383 = vld [vmem:[#allocation2 + $0x648] sm:$0xff]
    %v384 = vld [vmem:[#allocation2 + $0x650] sm:$0xf]
    %v385 = vld [vmem:[#allocation2 + $0x654] sm:$0xff]
    %v386 = vld [vmem:[#allocation2 + $0x65c] sm:$0xf]
    %v387 = vld [vmem:[#allocation2 + $0x660] sm:$0xff]
    %v388 = vld [vmem:[#allocation2 + $0x668] sm:$0xf]
    %v389 = vld [vmem:[#allocation2 + $0x66c] sm:$0xff]
    %v390 = vld [vmem:[#allocation2 + $0x674] sm:$0xf]
    %v391 = vld [vmem:[#allocation2 + $0x678] sm:$0xff]
    %v392 = vld [vmem:[#allocation2 + $0x680] sm:$0xf]
    %v393 = vld [vmem:[#allocation2 + $0x684] sm:$0xff]
    %v394 = vld [vmem:[#allocation2 + $0x68c] sm:$0xf]
    %v395 = vld [vmem:[#allocation2 + $0x690] sm:$0xff]
    %v396 = vld [vmem:[#allocation2 + $0x698] sm:$0xf]
    %v397 = vld [vmem:[#allocation2 + $0x69c] sm:$0xff]
    %v398 = vld [vmem:[#allocation2 + $0x6a4] sm:$0xf]
    %v399 = vld [vmem:[#allocation2 + $0x6a8] sm:$0xff]
    %v400 = vld [vmem:[#allocation2 + $0x6b0] sm:$0xf]
    %v401 = vld [vmem:[#allocation2 + $0x6b4] sm:$0xff]
    %v402 = vld [vmem:[#allocation2 + $0x6bc] sm:$0xf]
    %v403 = vld [vmem:[#allocation2 + $0x6c0] sm:$0xff]
    %v404 = vld [vmem:[#allocation2 + $0x6c8] sm:$0xf]
    %v405 = vld [vmem:[#allocation2 + $0x6cc] sm:$0xff]
    %v406 = vld [vmem:[#allocation2 + $0x6d4] sm:$0xf]
    %v407 = vld [vmem:[#allocation2 + $0x6d8] sm:$0xff]
    %v408 = vld [vmem:[#allocation2 + $0x6e0] sm:$0xf]
    %v409 = vld [vmem:[#allocation2 + $0x6e4] sm:$0xff]
    %v410 = vld [vmem:[#allocation2 + $0x6ec] sm:$0xf]
    %v411 = vld [vmem:[#allocation2 + $0x6f0] sm:$0xff]
    %v412 = vld [vmem:[#allocation2 + $0x6f8] sm:$0xf]
    %v413 = vld [vmem:[#allocation2 + $0x6fc] sm:$0xff]
    %v414 = vld [vmem:[#allocation2 + $0x704] sm:$0xf]
    %v415 = vld [vmem:[#allocation2 + $0x708] sm:$0xff]
    %v416 = vld [vmem:[#allocation2 + $0x710] sm:$0xf]
    %v417 = vld [vmem:[#allocation2 + $0x714] sm:$0xff]
    %v418 = vld [vmem:[#allocation2 + $0x71c] sm:$0xf]
    %v419 = vld [vmem:[#allocation2 + $0x720] sm:$0xff]
    %v420 = vld [vmem:[#allocation2 + $0x728] sm:$0xf]
    %v421 = vld [vmem:[#allocation2 + $0x72c] sm:$0xff]
    %v422 = vld [vmem:[#allocation2 + $0x734] sm:$0xf]
    %v423 = vld [vmem:[#allocation2 + $0x738] sm:$0xff]
    %v424 = vld [vmem:[#allocation2 + $0x740] sm:$0xf]
    %v425 = vld [vmem:[#allocation2 + $0x744] sm:$0xff]
    %v426 = vld [vmem:[#allocation2 + $0x74c] sm:$0xf]
    %v427 = vld [vmem:[#allocation2 + $0x750] sm:$0xff]
    %v428 = vld [vmem:[#allocation2 + $0x758] sm:$0xf]
    %v429 = vld [vmem:[#allocation2 + $0x75c] sm:$0xff]
    %v430 = vld [vmem:[#allocation2 + $0x764] sm:$0xf]
    %v431 = vld [vmem:[#allocation2 + $0x768] sm:$0xff]
    %v432 = vld [vmem:[#allocation2 + $0x770] sm:$0xf]
    %v433 = vld [vmem:[#allocation2 + $0x774] sm:$0xff]
    %v434 = vld [vmem:[#allocation2 + $0x77c] sm:$0xf]
    %v435 = vld [vmem:[#allocation2 + $0x780] sm:$0xff]
    %v436 = vld [vmem:[#allocation2 + $0x788] sm:$0xf]
    %v437 = vld [vmem:[#allocation2 + $0x78c] sm:$0xff]
    %v438 = vld [vmem:[#allocation2 + $0x794] sm:$0xf]
    %v439 = vld [vmem:[#allocation2 + $0x798] sm:$0xff]
    %v440 = vld [vmem:[#allocation2 + $0x7a0] sm:$0xf]
    %v441 = vld [vmem:[#allocation2 + $0x7a4] sm:$0xff]
    %v442 = vld [vmem:[#allocation2 + $0x7ac] sm:$0xf]
    %v443 = vld [vmem:[#allocation2 + $0x7b0] sm:$0xff]
    %v444 = vld [vmem:[#allocation2 + $0x7b8] sm:$0xf]
    %v445 = vld [vmem:[#allocation2 + $0x7bc] sm:$0xff]
    %v446 = vld [vmem:[#allocation2 + $0x7c4] sm:$0xf]
    %v447 = vld [vmem:[#allocation2 + $0x7c8] sm:$0xff]
    %v448 = vld [vmem:[#allocation2 + $0x7d0] sm:$0xf]
    %v449 = vld [vmem:[#allocation2 + $0x7d4] sm:$0xff]
    %v450 = vld [vmem:[#allocation2 + $0x7dc] sm:$0xf]
    %v451 = vld [vmem:[#allocation2 + $0x7e0] sm:$0xff]
    %v452 = vld [vmem:[#allocation2 + $0x7e8] sm:$0xf]
    %v453 = vld [vmem:[#allocation2 + $0x7ec] sm:$0xff]
    %v454 = vld [vmem:[#allocation2 + $0x7f4] sm:$0xf]
    %v455 = vld [vmem:[#allocation2 + $0x7f8] sm:$0xff]
    %v456 = vld [vmem:[#allocation2 + $0x800] sm:$0xf]
    %v457 = vld [vmem:[#allocation2 + $0x804] sm:$0xff]
    %v458 = vld [vmem:[#allocation2 + $0x80c] sm:$0xf]
    %v459 = vld [vmem:[#allocation2 + $0x810] sm:$0xff]
    %v460 = vld [vmem:[#allocation2 + $0x818] sm:$0xf]
    %v461 = vld [vmem:[#allocation2 + $0x81c] sm:$0xff]
    %v462 = vld [vmem:[#allocation2 + $0x824] sm:$0xf]
    %v463 = vld [vmem:[#allocation2 + $0x828] sm:$0xff]
    %v464 = vld [vmem:[#allocation2 + $0x830] sm:$0xf]
    %v465 = vld [vmem:[#allocation2 + $0x834] sm:$0xff]
    %v466 = vld [vmem:[#allocation2 + $0x83c] sm:$0xf]
    %v467 = vld [vmem:[#allocation2 + $0x840] sm:$0xff]
    %v468 = vld [vmem:[#allocation2 + $0x848] sm:$0xf]
    %v469 = vld [vmem:[#allocation2 + $0x84c] sm:$0xff]
    %v470 = vld [vmem:[#allocation2 + $0x854] sm:$0xf]
    %v471 = vld [vmem:[#allocation2 + $0x858] sm:$0xff]
    %v472 = vld [vmem:[#allocation2 + $0x860] sm:$0xf]
    %v473 = vld [vmem:[#allocation2 + $0x864] sm:$0xff]
    %v474 = vld [vmem:[#allocation2 + $0x86c] sm:$0xf]
    %v475 = vld [vmem:[#allocation2 + $0x870] sm:$0xff]
    %v476 = vld [vmem:[#allocation2 + $0x878] sm:$0xf]
    %v477 = vld [vmem:[#allocation2 + $0x87c] sm:$0xff]
    %v478 = vld [vmem:[#allocation2 + $0x884] sm:$0xf]
    %v479 = vld [vmem:[#allocation2 + $0x888] sm:$0xff]
    %v480 = vld [vmem:[#allocation2 + $0x890] sm:$0xf]
    %v481 = vld [vmem:[#allocation2 + $0x894] sm:$0xff]
    %v482 = vld [vmem:[#allocation2 + $0x89c] sm:$0xf]
    %v483 = vld [vmem:[#allocation2 + $0x8a0] sm:$0xff]
    %v484 = vld [vmem:[#allocation2 + $0x8a8] sm:$0xf]
    %v485 = vld [vmem:[#allocation2 + $0x8ac] sm:$0xff]
    %v486 = vld [vmem:[#allocation2 + $0x8b4] sm:$0xf]
    %v487 = vld [vmem:[#allocation2 + $0x8b8] sm:$0xff]
    %v488 = vld [vmem:[#allocation2 + $0x8c0] sm:$0xf]
    %v489 = vld [vmem:[#allocation2 + $0x8c4] sm:$0xff]
    %v490 = vld [vmem:[#allocation2 + $0x8cc] sm:$0xf]
    %v491 = vld [vmem:[#allocation2 + $0x8d0] sm:$0xff]
    %v492 = vld [vmem:[#allocation2 + $0x8d8] sm:$0xf]
    %v493 = vld [vmem:[#allocation2 + $0x8dc] sm:$0xff]
    %v494 = vld [vmem:[#allocation2 + $0x8e4] sm:$0xf]
    %v495 = vld [vmem:[#allocation2 + $0x8e8] sm:$0xff]
    %v496 = vld [vmem:[#allocation2 + $0x8f0] sm:$0xf]
    %v497 = vld [vmem:[#allocation2 + $0x8f4] sm:$0xff]
    %v498 = vld [vmem:[#allocation2 + $0x8fc] sm:$0xf]
    %v499 = vld [vmem:[#allocation2 + $0x900] sm:$0xff]
    %v500 = vld [vmem:[#allocation2 + $0x908] sm:$0xf]
    %v501 = vld [vmem:[#allocation2 + $0x90c] sm:$0xff]
    %v502 = vld [vmem:[#allocation2 + $0x914] sm:$0xf]
    %v503 = vld [vmem:[#allocation2 + $0x918] sm:$0xff]
    %v504 = vld [vmem:[#allocation2 + $0x920] sm:$0xf]
    %v505 = vld [vmem:[#allocation2 + $0x924] sm:$0xff]
    %v506 = vld [vmem:[#allocation2 + $0x92c] sm:$0xf]
    %v507 = vld [vmem:[#allocation2 + $0x930] sm:$0xff]
    %v508 = vld [vmem:[#allocation2 + $0x938] sm:$0xf]
    %v509 = vld [vmem:[#allocation2 + $0x93c] sm:$0xff]
    %v510 = vld [vmem:[#allocation2 + $0x944] sm:$0xf]
    %v511 = vld [vmem:[#allocation2 + $0x948] sm:$0xff]
    %v512 = vld [vmem:[#allocation2 + $0x950] sm:$0xf]
    %v513 = vld [vmem:[#allocation2 + $0x954] sm:$0xff]
    %v514 = vld [vmem:[#allocation2 + $0x95c] sm:$0xf]
    %v515 = vld [vmem:[#allocation2 + $0x960] sm:$0xff]
    %v516 = vld [vmem:[#allocation2 + $0x968] sm:$0xf]
    %v517 = vld [vmem:[#allocation2 + $0x96c] sm:$0xff]
    %v518 = vld [vmem:[#allocation2 + $0x974] sm:$0xf]
    %v519 = vld [vmem:[#allocation2 + $0x978] sm:$0xff]
    %v520 = vld [vmem:[#allocation2 + $0x980] sm:$0xf]
    %v521 = vld [vmem:[#allocation2 + $0x984] sm:$0xff]
    %v522 = vld [vmem:[#allocation2 + $0x98c] sm:$0xf]
    %v523 = vld [vmem:[#allocation2 + $0x990] sm:$0xff]
    %v524 = vld [vmem:[#allocation2 + $0x998] sm:$0xf]
    %v525 = vld [vmem:[#allocation2 + $0x99c] sm:$0xff]
    %v526 = vld [vmem:[#allocation2 + $0x9a4] sm:$0xf]
    %v527 = vld [vmem:[#allocation2 + $0x9a8] sm:$0xff]
    %v528 = vld [vmem:[#allocation2 + $0x9b0] sm:$0xf]
    %v529 = vld [vmem:[#allocation2 + $0x9b4] sm:$0xff]
    %v530 = vld [vmem:[#allocation2 + $0x9bc] sm:$0xf]
    %v531 = vld [vmem:[#allocation2 + $0x9c0] sm:$0xff]
    %v532 = vld [vmem:[#allocation2 + $0x9c8] sm:$0xf]
    %v533 = vld [vmem:[#allocation2 + $0x9cc] sm:$0xff]
    %v534 = vld [vmem:[#allocation2 + $0x9d4] sm:$0xf]
    %v535 = vld [vmem:[#allocation2 + $0x9d8] sm:$0xff]
    %v536 = vld [vmem:[#allocation2 + $0x9e0] sm:$0xf]
    %v537 = vld [vmem:[#allocation2 + $0x9e4] sm:$0xff]
    %v538 = vld [vmem:[#allocation2 + $0x9ec] sm:$0xf]
    %v539 = vld [vmem:[#allocation2 + $0x9f0] sm:$0xff]
    %v540 = vld [vmem:[#allocation2 + $0x9f8] sm:$0xf]
    %v541 = vld [vmem:[#allocation2 + $0x9fc] sm:$0xff]
    %v542 = vld [vmem:[#allocation2 + $0xa04] sm:$0xf]
    %v543 = vld [vmem:[#allocation2 + $0xa08] sm:$0xff]
    %v544 = vld [vmem:[#allocation2 + $0xa10] sm:$0xf]
    %v545 = vld [vmem:[#allocation2 + $0xa14] sm:$0xff]
    %v546 = vld [vmem:[#allocation2 + $0xa1c] sm:$0xf]
    %v547 = vld [vmem:[#allocation2 + $0xa20] sm:$0xff]
    %v548 = vld [vmem:[#allocation2 + $0xa28] sm:$0xf]
    %v549 = vld [vmem:[#allocation2 + $0xa2c] sm:$0xff]
    %v550 = vld [vmem:[#allocation2 + $0xa34] sm:$0xf]
    %v551 = vld [vmem:[#allocation2 + $0xa38] sm:$0xff]
    %v552 = vld [vmem:[#allocation2 + $0xa40] sm:$0xf]
    %v553 = vld [vmem:[#allocation2 + $0xa44] sm:$0xff]
    %v554 = vld [vmem:[#allocation2 + $0xa4c] sm:$0xf]
    %v555 = vld [vmem:[#allocation2 + $0xa50] sm:$0xff]
    %v556 = vld [vmem:[#allocation2 + $0xa58] sm:$0xf]
    %v557 = vld [vmem:[#allocation2 + $0xa5c] sm:$0xff]
    %v558 = vld [vmem:[#allocation2 + $0xa64] sm:$0xf]
    %v559 = vld [vmem:[#allocation2 + $0xa68] sm:$0xff]
    %v560 = vld [vmem:[#allocation2 + $0xa70] sm:$0xf]
    %v561 = vld [vmem:[#allocation2 + $0xa74] sm:$0xff]
    %v562 = vld [vmem:[#allocation2 + $0xa7c] sm:$0xf]
    %v563 = vld [vmem:[#allocation2 + $0xa80] sm:$0xff]
    %v564 = vld [vmem:[#allocation2 + $0xa88] sm:$0xf]
    %v565 = vld [vmem:[#allocation2 + $0xa8c] sm:$0xff]
    %v566 = vld [vmem:[#allocation2 + $0xa94] sm:$0xf]
    %v567 = vld [vmem:[#allocation2 + $0xa98] sm:$0xff]
    %v568 = vld [vmem:[#allocation2 + $0xaa0] sm:$0xf]
    %v569 = vld [vmem:[#allocation2 + $0xaa4] sm:$0xff]
    %v570 = vld [vmem:[#allocation2 + $0xaac] sm:$0xf]
    %v571 = vld [vmem:[#allocation2 + $0xab0] sm:$0xff]
    %v572 = vld [vmem:[#allocation2 + $0xab8] sm:$0xf]
    %v573 = vld [vmem:[#allocation2 + $0xabc] sm:$0xff]
    %v574 = vld [vmem:[#allocation2 + $0xac4] sm:$0xf]
    %v575 = vld [vmem:[#allocation2 + $0xac8] sm:$0xff]
    %v576 = vld [vmem:[#allocation2 + $0xad0] sm:$0xf]
    %v577 = vld [vmem:[#allocation2 + $0xad4] sm:$0xff]
    %v578 = vld [vmem:[#allocation2 + $0xadc] sm:$0xf]
    %v579 = vld [vmem:[#allocation2 + $0xae0] sm:$0xff]
    %v580 = vld [vmem:[#allocation2 + $0xae8] sm:$0xf]
    %v581 = vld [vmem:[#allocation2 + $0xaec] sm:$0xff]
    %v582 = vld [vmem:[#allocation2 + $0xaf4] sm:$0xf]
    %v583 = vld [vmem:[#allocation2 + $0xaf8] sm:$0xff]
    %v584 = vld [vmem:[#allocation2 + $0xb00] sm:$0xf]
    %v585 = vld [vmem:[#allocation2 + $0xb04] sm:$0xff]
    %v586 = vld [vmem:[#allocation2 + $0xb0c] sm:$0xf]
    %v587 = vld [vmem:[#allocation2 + $0xb10] sm:$0xff]
    %v588 = vld [vmem:[#allocation2 + $0xb18] sm:$0xf]
    %v589 = vld [vmem:[#allocation2 + $0xb1c] sm:$0xff]
    %v590 = vld [vmem:[#allocation2 + $0xb24] sm:$0xf]
    %v591 = vld [vmem:[#allocation2 + $0xb28] sm:$0xff]
    %v592 = vld [vmem:[#allocation2 + $0xb30] sm:$0xf]
    %v593 = vld [vmem:[#allocation2 + $0xb34] sm:$0xff]
    %v594 = vld [vmem:[#allocation2 + $0xb3c] sm:$0xf]
    %v595 = vld [vmem:[#allocation2 + $0xb40] sm:$0xff]
    %v596 = vld [vmem:[#allocation2 + $0xb48] sm:$0xf]
    %v597 = vld [vmem:[#allocation2 + $0xb4c] sm:$0xff]
    %v598 = vld [vmem:[#allocation2 + $0xb54] sm:$0xf]
    %v599 = vld [vmem:[#allocation2 + $0xb58] sm:$0xff]
    %v600 = vld [vmem:[#allocation2 + $0xb60] sm:$0xf]
    %v601 = vld [vmem:[#allocation2 + $0xb64] sm:$0xff]
    %v602 = vld [vmem:[#allocation2 + $0xb6c] sm:$0xf]
    %v603 = vld [vmem:[#allocation2 + $0xb70] sm:$0xff]
    %v604 = vld [vmem:[#allocation2 + $0xb78] sm:$0xf]
    %v605 = vld [vmem:[#allocation2 + $0xb7c] sm:$0xff]
    %v606 = vld [vmem:[#allocation2 + $0xb84] sm:$0xf]
    %v607 = vld [vmem:[#allocation2 + $0xb88] sm:$0xff]
    %v608 = vld [vmem:[#allocation2 + $0xb90] sm:$0xf]
    %v609 = vld [vmem:[#allocation2 + $0xb94] sm:$0xff]
    %v610 = vld [vmem:[#allocation2 + $0xb9c] sm:$0xf]
    %v611 = vld [vmem:[#allocation2 + $0xba0] sm:$0xff]
    %v612 = vld [vmem:[#allocation2 + $0xba8] sm:$0xf]
    %v613 = vld [vmem:[#allocation2 + $0xbac] sm:$0xff]
    %v614 = vld [vmem:[#allocation2 + $0xbb4] sm:$0xf]
    %v615 = vld [vmem:[#allocation2 + $0xbb8] sm:$0xff]
    %v616 = vld [vmem:[#allocation2 + $0xbc0] sm:$0xf]
    %v617 = vld [vmem:[#allocation2 + $0xbc4] sm:$0xff]
    %v618 = vld [vmem:[#allocation2 + $0xbcc] sm:$0xf]
    %v619 = vld [vmem:[#allocation2 + $0xbd0] sm:$0xff]
    %v620 = vld [vmem:[#allocation2 + $0xbd8] sm:$0xf]
    %v621 = vld [vmem:[#allocation2 + $0xbdc] sm:$0xff]
    %v622 = vld [vmem:[#allocation2 + $0xbe4] sm:$0xf]
    %v623 = vld [vmem:[#allocation2 + $0xbe8] sm:$0xff]
    %v624 = vld [vmem:[#allocation2 + $0xbf0] sm:$0xf]
    %v625 = vld [vmem:[#allocation2 + $0xbf4] sm:$0xff]
    %v626 = vld [vmem:[#allocation2 + $0xbfc] sm:$0xf]
    %v627 = vld [vmem:[#allocation2 + $0xc00] sm:$0xff]
    %v628 = vld [vmem:[#allocation2 + $0xc08] sm:$0xf]
    %v629 = vld [vmem:[#allocation2 + $0xc0c] sm:$0xff]
    %v630 = vld [vmem:[#allocation2 + $0xc14] sm:$0xf]
    %v631 = vld [vmem:[#allocation2 + $0xc18] sm:$0xff]
    %v632 = vld [vmem:[#allocation2 + $0xc20] sm:$0xf]
    %v633 = vld [vmem:[#allocation2 + $0xc24] sm:$0xff]
    %v634 = vld [vmem:[#allocation2 + $0xc2c] sm:$0xf]
    %v635 = vld [vmem:[#allocation2 + $0xc30] sm:$0xff]
    %v636 = vld [vmem:[#allocation2 + $0xc38] sm:$0xf]
    %v637 = vld [vmem:[#allocation2 + $0xc3c] sm:$0xff]
    %v638 = vld [vmem:[#allocation2 + $0xc44] sm:$0xf]
    %v639 = vld [vmem:[#allocation2 + $0xc48] sm:$0xff]
    %v640 = vld [vmem:[#allocation2 + $0xc50] sm:$0xf]
    %v641 = vld [vmem:[#allocation2 + $0xc54] sm:$0xff]
    %v642 = vld [vmem:[#allocation2 + $0xc5c] sm:$0xf]
    %v643 = vld [vmem:[#allocation2 + $0xc60] sm:$0xff]
    %v644 = vld [vmem:[#allocation2 + $0xc68] sm:$0xf]
    %v645 = vld [vmem:[#allocation2 + $0xc6c] sm:$0xff]
    %v646 = vld [vmem:[#allocation2 + $0xc74] sm:$0xf]
    %v647 = vld [vmem:[#allocation2 + $0xc78] sm:$0xff]
    %v648 = vld [vmem:[#allocation2 + $0xc80] sm:$0xf]
    %v649 = vld [vmem:[#allocation2 + $0xc84] sm:$0xff]
    %v650 = vld [vmem:[#allocation2 + $0xc8c] sm:$0xf]
    %v651 = vld [vmem:[#allocation2 + $0xc90] sm:$0xff]
    %v652 = vld [vmem:[#allocation2 + $0xc98] sm:$0xf]
    %v653 = vld [vmem:[#allocation2 + $0xc9c] sm:$0xff]
    %v654 = vld [vmem:[#allocation2 + $0xca4] sm:$0xf]
    %v655 = vld [vmem:[#allocation2 + $0xca8] sm:$0xff]
    %v656 = vld [vmem:[#allocation2 + $0xcb0] sm:$0xf]
    %v657 = vld [vmem:[#allocation2 + $0xcb4] sm:$0xff]
    %v658 = vld [vmem:[#allocation2 + $0xcbc] sm:$0xf]
    %v659 = vld [vmem:[#allocation2 + $0xcc0] sm:$0xff]
    %v660 = vld [vmem:[#allocation2 + $0xcc8] sm:$0xf]
    %v661 = vld [vmem:[#allocation2 + $0xccc] sm:$0xff]
    %v662 = vld [vmem:[#allocation2 + $0xcd4] sm:$0xf]
    %v663 = vld [vmem:[#allocation2 + $0xcd8] sm:$0xff]
    %v664 = vld [vmem:[#allocation2 + $0xce0] sm:$0xf]
    %v665 = vld [vmem:[#allocation2 + $0xce4] sm:$0xff]
    %v666 = vld [vmem:[#allocation2 + $0xcec] sm:$0xf]
    %v667 = vld [vmem:[#allocation2 + $0xcf0] sm:$0xff]
    %v668 = vld [vmem:[#allocation2 + $0xcf8] sm:$0xf]
    %v669 = vld [vmem:[#allocation2 + $0xcfc] sm:$0xff]
    %v670 = vld [vmem:[#allocation2 + $0xd04] sm:$0xf]
    %v671 = vld [vmem:[#allocation2 + $0xd08] sm:$0xff]
    %v672 = vld [vmem:[#allocation2 + $0xd10] sm:$0xf]
    %v673 = vld [vmem:[#allocation2 + $0xd14] sm:$0xff]
    %v674 = vld [vmem:[#allocation2 + $0xd1c] sm:$0xf]
    %v675 = vld [vmem:[#allocation2 + $0xd20] sm:$0xff]
    %v676 = vld [vmem:[#allocation2 + $0xd28] sm:$0xf]
    %v677 = vld [vmem:[#allocation2 + $0xd2c] sm:$0xff]
    %v678 = vld [vmem:[#allocation2 + $0xd34] sm:$0xf]
    %v679 = vld [vmem:[#allocation2 + $0xd38] sm:$0xff]
    %v680 = vld [vmem:[#allocation2 + $0xd40] sm:$0xf]
    %v681 = vld [vmem:[#allocation2 + $0xd44] sm:$0xff]
    %v682 = vld [vmem:[#allocation2 + $0xd4c] sm:$0xf]
    %v683 = vld [vmem:[#allocation2 + $0xd50] sm:$0xff]
    %v684 = vld [vmem:[#allocation2 + $0xd58] sm:$0xf]
    %v685 = vld [vmem:[#allocation2 + $0xd5c] sm:$0xff]
    %v686 = vld [vmem:[#allocation2 + $0xd64] sm:$0xf]
    %v687 = vld [vmem:[#allocation2 + $0xd68] sm:$0xff]
    %v688 = vld [vmem:[#allocation2 + $0xd70] sm:$0xf]
    %v689 = vld [vmem:[#allocation2 + $0xd74] sm:$0xff]
    %v690 = vld [vmem:[#allocation2 + $0xd7c] sm:$0xf]
    %v691 = vld [vmem:[#allocation2 + $0xd80] sm:$0xff]
    %v692 = vld [vmem:[#allocation2 + $0xd88] sm:$0xf]
    %v693 = vld [vmem:[#allocation2 + $0xd8c] sm:$0xff]
    %v694 = vld [vmem:[#allocation2 + $0xd94] sm:$0xf]
    %v695 = vld [vmem:[#allocation2 + $0xd98] sm:$0xff]
    %v696 = vld [vmem:[#allocation2 + $0xda0] sm:$0xf]
    %v697 = vld [vmem:[#allocation2 + $0xda4] sm:$0xff]
    %v698 = vld [vmem:[#allocation2 + $0xdac] sm:$0xf]
    %v699 = vld [vmem:[#allocation2 + $0xdb0] sm:$0xff]
    %v700 = vld [vmem:[#allocation2 + $0xdb8] sm:$0xf]
    %v701 = vld [vmem:[#allocation2 + $0xdbc] sm:$0xff]
    %v702 = vld [vmem:[#allocation2 + $0xdc4] sm:$0xf]
    %v703 = vld [vmem:[#allocation2 + $0xdc8] sm:$0xff]
    %v704 = vld [vmem:[#allocation2 + $0xdd0] sm:$0xf]
    %v705 = vld [vmem:[#allocation2 + $0xdd4] sm:$0xff]
    %v706 = vld [vmem:[#allocation2 + $0xddc] sm:$0xf]
    %v707 = vld [vmem:[#allocation2 + $0xde0] sm:$0xff]
    %v708 = vld [vmem:[#allocation2 + $0xde8] sm:$0xf]
    %v709 = vld [vmem:[#allocation2 + $0xdec] sm:$0xff]
    %v710 = vld [vmem:[#allocation2 + $0xdf4] sm:$0xf]
    %v711 = vld [vmem:[#allocation2 + $0xdf8] sm:$0xff]
    %v712 = vld [vmem:[#allocation2 + $0xe00] sm:$0xf]
    %v713 = vld [vmem:[#allocation2 + $0xe04] sm:$0xff]
    %v714 = vld [vmem:[#allocation2 + $0xe0c] sm:$0xf]
    %v715 = vld [vmem:[#allocation2 + $0xe10] sm:$0xff]
    %v716 = vld [vmem:[#allocation2 + $0xe18] sm:$0xf]
    %v717 = vld [vmem:[#allocation2 + $0xe1c] sm:$0xff]
    %v718 = vld [vmem:[#allocation2 + $0xe24] sm:$0xf]
    %v719 = vld [vmem:[#allocation2 + $0xe28] sm:$0xff]
    %v720 = vld [vmem:[#allocation2 + $0xe30] sm:$0xf]
    %v721 = vld [vmem:[#allocation2 + $0xe34] sm:$0xff]
    %v722 = vld [vmem:[#allocation2 + $0xe3c] sm:$0xf]
    %v723 = vld [vmem:[#allocation2 + $0xe40] sm:$0xff]
    %v724 = vld [vmem:[#allocation2 + $0xe48] sm:$0xf]
    %v725 = vld [vmem:[#allocation2 + $0xe4c] sm:$0xff]
    %v726 = vld [vmem:[#allocation2 + $0xe54] sm:$0xf]
    %v727 = vld [vmem:[#allocation2 + $0xe58] sm:$0xff]
    %v728 = vld [vmem:[#allocation2 + $0xe60] sm:$0xf]
    %v729 = vld [vmem:[#allocation2 + $0xe64] sm:$0xff]
    %v730 = vld [vmem:[#allocation2 + $0xe6c] sm:$0xf]
    %v731 = vld [vmem:[#allocation2 + $0xe70] sm:$0xff]
    %v732 = vld [vmem:[#allocation2 + $0xe78] sm:$0xf]
    %v733 = vld [vmem:[#allocation2 + $0xe7c] sm:$0xff]
    %v734 = vld [vmem:[#allocation2 + $0xe84] sm:$0xf]
    %v735 = vld [vmem:[#allocation2 + $0xe88] sm:$0xff]
    %v736 = vld [vmem:[#allocation2 + $0xe90] sm:$0xf]
    %v737 = vld [vmem:[#allocation2 + $0xe94] sm:$0xff]
    %v738 = vld [vmem:[#allocation2 + $0xe9c] sm:$0xf]
    %v739 = vld [vmem:[#allocation2 + $0xea0] sm:$0xff]
    %v740 = vld [vmem:[#allocation2 + $0xea8] sm:$0xf]
    %v741 = vld [vmem:[#allocation2 + $0xeac] sm:$0xff]
    %v742 = vld [vmem:[#allocation2 + $0xeb4] sm:$0xf]
    %v743 = vld [vmem:[#allocation2 + $0xeb8] sm:$0xff]
    %v744 = vld [vmem:[#allocation2 + $0xec0] sm:$0xf]
    %v745 = vld [vmem:[#allocation2 + $0xec4] sm:$0xff]
    %v746 = vld [vmem:[#allocation2 + $0xecc] sm:$0xf]
    %v747 = vld [vmem:[#allocation2 + $0xed0] sm:$0xff]
    %v748 = vld [vmem:[#allocation2 + $0xed8] sm:$0xf]
    %v749 = vld [vmem:[#allocation2 + $0xedc] sm:$0xff]
    %v750 = vld [vmem:[#allocation2 + $0xee4] sm:$0xf]
    %v751 = vld [vmem:[#allocation2 + $0xee8] sm:$0xff]
    %v752 = vld [vmem:[#allocation2 + $0xef0] sm:$0xf]
    %v753 = vld [vmem:[#allocation2 + $0xef4] sm:$0xff]
    %v754 = vld [vmem:[#allocation2 + $0xefc] sm:$0xf]
    %v755 = vld [vmem:[#allocation2 + $0xf00] sm:$0xff]
    %v756 = vld [vmem:[#allocation2 + $0xf08] sm:$0xf]
    %v757 = vld [vmem:[#allocation2 + $0xf0c] sm:$0xff]
    %v758 = vld [vmem:[#allocation2 + $0xf14] sm:$0xf]
    %v759 = vld [vmem:[#allocation2 + $0xf18] sm:$0xff]
    %v760 = vld [vmem:[#allocation2 + $0xf20] sm:$0xf]
    %v761 = vld [vmem:[#allocation2 + $0xf24] sm:$0xff]
    %v762 = vld [vmem:[#allocation2 + $0xf2c] sm:$0xf]
    %v763 = vld [vmem:[#allocation2 + $0xf30] sm:$0xff]
    %v764 = vld [vmem:[#allocation2 + $0xf38] sm:$0xf]
    %v765 = vld [vmem:[#allocation2 + $0xf3c] sm:$0xff]
    %v766 = vld [vmem:[#allocation2 + $0xf44] sm:$0xf]
    %v767 = vld [vmem:[#allocation2 + $0xf48] sm:$0xff]
    %v768 = vld [vmem:[#allocation2 + $0xf50] sm:$0xf]
    %v769 = vld [vmem:[#allocation2 + $0xf54] sm:$0xff]
    %v770 = vld [vmem:[#allocation2 + $0xf5c] sm:$0xf]
    %v771 = vld [vmem:[#allocation2 + $0xf60] sm:$0xff]
    %v772 = vld [vmem:[#allocation2 + $0xf68] sm:$0xf]
    %v773 = vld [vmem:[#allocation2 + $0xf6c] sm:$0xff]
    %v774 = vld [vmem:[#allocation2 + $0xf74] sm:$0xf]
    %v775 = vld [vmem:[#allocation2 + $0xf78] sm:$0xff]
    %v776 = vld [vmem:[#allocation2 + $0xf80] sm:$0xf]
    %v777 = vld [vmem:[#allocation2 + $0xf84] sm:$0xff]
    %v778 = vld [vmem:[#allocation2 + $0xf8c] sm:$0xf]
    %v779 = vld [vmem:[#allocation2 + $0xf90] sm:$0xff]
    %v780 = vld [vmem:[#allocation2 + $0xf98] sm:$0xf]
    %v781 = vld [vmem:[#allocation2 + $0xf9c] sm:$0xff]
    %v782 = vld [vmem:[#allocation2 + $0xfa4] sm:$0xf]
    %v783 = vld [vmem:[#allocation2 + $0xfa8] sm:$0xff]
    %v784 = vld [vmem:[#allocation2 + $0xfb0] sm:$0xf]
    %v785 = vld [vmem:[#allocation2 + $0xfb4] sm:$0xff]
    %v786 = vld [vmem:[#allocation2 + $0xfbc] sm:$0xf]
    %v787 = vld [vmem:[#allocation2 + $0xfc0] sm:$0xff]
    %v788 = vld [vmem:[#allocation2 + $0xfc8] sm:$0xf]
    %v789 = vld [vmem:[#allocation2 + $0xfcc] sm:$0xff]
    %v790 = vld [vmem:[#allocation2 + $0xfd4] sm:$0xf]
    %v791 = vld [vmem:[#allocation2 + $0xfd8] sm:$0xff]
    %v792 = vld [vmem:[#allocation2 + $0xfe0] sm:$0xf]
    %v793 = vld [vmem:[#allocation2 + $0xfe4] sm:$0xff]
    %v794 = vld [vmem:[#allocation2 + $0xfec] sm:$0xf]
    %v795 = vld [vmem:[#allocation2 + $0xff0] sm:$0xff]
    %v796 = vld [vmem:[#allocation2 + $0xff8] sm:$0xf]
    %v797 = vld [vmem:[#allocation2 + $0xffc] sm:$0xff]
    %v798 = vld [vmem:[#allocation2 + $0x1004] sm:$0xf]
    %v799 = vld [vmem:[#allocation2 + $0x1008] sm:$0xff]
    %v800 = vld [vmem:[#allocation2 + $0x1010] sm:$0xf]
    %v801 = vld [vmem:[#allocation2 + $0x1014] sm:$0xff]
    %v802 = vld [vmem:[#allocation2 + $0x101c] sm:$0xf]
    %v803 = vld [vmem:[#allocation2 + $0x1020] sm:$0xff]
    %v804 = vld [vmem:[#allocation2 + $0x1028] sm:$0xf]
    %v805 = vld [vmem:[#allocation2 + $0x102c] sm:$0xff]
    %v806 = vld [vmem:[#allocation2 + $0x1034] sm:$0xf]
    %v807 = vld [vmem:[#allocation2 + $0x1038] sm:$0xff]
    %v808 = vld [vmem:[#allocation2 + $0x1040] sm:$0xf]
    %v809 = vld [vmem:[#allocation2 + $0x1044] sm:$0xff]
    %v810 = vld [vmem:[#allocation2 + $0x104c] sm:$0xf]
    %v811 = vld [vmem:[#allocation2 + $0x1050] sm:$0xff]
    %v812 = vld [vmem:[#allocation2 + $0x1058] sm:$0xf]
    %v813 = vld [vmem:[#allocation2 + $0x105c] sm:$0xff]
    %v814 = vld [vmem:[#allocation2 + $0x1064] sm:$0xf]
    %v815 = vld [vmem:[#allocation2 + $0x1068] sm:$0xff]
    %v816 = vld [vmem:[#allocation2 + $0x1070] sm:$0xf]
    %v817 = vld [vmem:[#allocation2 + $0x1074] sm:$0xff]
    %v818 = vld [vmem:[#allocation2 + $0x107c] sm:$0xf]
    %v819 = vld [vmem:[#allocation2 + $0x1080] sm:$0xff]
    %v820 = vld [vmem:[#allocation2 + $0x1088] sm:$0xf]
    %v821 = vld [vmem:[#allocation2 + $0x108c] sm:$0xff]
    %v822 = vld [vmem:[#allocation2 + $0x1094] sm:$0xf]
    %v823 = vld [vmem:[#allocation2 + $0x1098] sm:$0xff]
    %v824 = vld [vmem:[#allocation2 + $0x10a0] sm:$0xf]
    %v825 = vld [vmem:[#allocation2 + $0x10a4] sm:$0xff]
    %v826 = vld [vmem:[#allocation2 + $0x10ac] sm:$0xf]
    %v827 = vld [vmem:[#allocation2 + $0x10b0] sm:$0xff]
    %v828 = vld [vmem:[#allocation2 + $0x10b8] sm:$0xf]
    %v829 = vld [vmem:[#allocation2 + $0x10bc] sm:$0xff]
    %v830 = vld [vmem:[#allocation2 + $0x10c4] sm:$0xf]
    %v831 = vld [vmem:[#allocation2 + $0x10c8] sm:$0xff]
    %v832 = vld [vmem:[#allocation2 + $0x10d0] sm:$0xf]
    %v833 = vld [vmem:[#allocation2 + $0x10d4] sm:$0xff]
    %v834 = vld [vmem:[#allocation2 + $0x10dc] sm:$0xf]
    %v835 = vld [vmem:[#allocation2 + $0x10e0] sm:$0xff]
    %v836 = vld [vmem:[#allocation2 + $0x10e8] sm:$0xf]
    %v837 = vld [vmem:[#allocation2 + $0x10ec] sm:$0xff]
    %v838 = vld [vmem:[#allocation2 + $0x10f4] sm:$0xf]
    %v839 = vld [vmem:[#allocation2 + $0x10f8] sm:$0xff]
    %v840 = vld [vmem:[#allocation2 + $0x1100] sm:$0xf]
    %v841 = vld [vmem:[#allocation2 + $0x1104] sm:$0xff]
    %v842 = vld [vmem:[#allocation2 + $0x110c] sm:$0xf]
    %v843 = vld [vmem:[#allocation2 + $0x1110] sm:$0xff]
    %v844 = vld [vmem:[#allocation2 + $0x1118] sm:$0xf]
    %v845 = vld [vmem:[#allocation2 + $0x111c] sm:$0xff]
    %v846 = vld [vmem:[#allocation2 + $0x1124] sm:$0xf]
    %v847 = vld [vmem:[#allocation2 + $0x1128] sm:$0xff]
    %v848 = vld [vmem:[#allocation2 + $0x1130] sm:$0xf]
    %v849 = vld [vmem:[#allocation2 + $0x1134] sm:$0xff]
    %v850 = vld [vmem:[#allocation2 + $0x113c] sm:$0xf]
    %v851 = vld [vmem:[#allocation2 + $0x1140] sm:$0xff]
    %v852 = vld [vmem:[#allocation2 + $0x1148] sm:$0xf]
    %v853 = vld [vmem:[#allocation2 + $0x114c] sm:$0xff]
    %v854 = vld [vmem:[#allocation2 + $0x1154] sm:$0xf]
    %v855 = vld [vmem:[#allocation2 + $0x1158] sm:$0xff]
    %v856 = vld [vmem:[#allocation2 + $0x1160] sm:$0xf]
    %v857 = vld [vmem:[#allocation2 + $0x1164] sm:$0xff]
    %v858 = vld [vmem:[#allocation2 + $0x116c] sm:$0xf]
    %v859 = vld [vmem:[#allocation2 + $0x1170] sm:$0xff]
    %v860 = vld [vmem:[#allocation2 + $0x1178] sm:$0xf]
    %v861 = vld [vmem:[#allocation2 + $0x117c] sm:$0xff]
    %v862 = vld [vmem:[#allocation2 + $0x1184] sm:$0xf]
    %v863 = vld [vmem:[#allocation2 + $0x1188] sm:$0xff]
    %v864 = vld [vmem:[#allocation2 + $0x1190] sm:$0xf]
    %v865 = vld [vmem:[#allocation2 + $0x1194] sm:$0xff]
    %v866 = vld [vmem:[#allocation2 + $0x119c] sm:$0xf]
    %v867 = vld [vmem:[#allocation2 + $0x11a0] sm:$0xff]
    %v868 = vld [vmem:[#allocation2 + $0x11a8] sm:$0xf]
    %v869 = vld [vmem:[#allocation2 + $0x11ac] sm:$0xff]
    %v870 = vld [vmem:[#allocation2 + $0x11b4] sm:$0xf]
    %v871 = vld [vmem:[#allocation2 + $0x11b8] sm:$0xff]
    %v872 = vld [vmem:[#allocation2 + $0x11c0] sm:$0xf]
    %v873 = vld [vmem:[#allocation2 + $0x11c4] sm:$0xff]
    %v874 = vld [vmem:[#allocation2 + $0x11cc] sm:$0xf]
    %v875 = vld [vmem:[#allocation2 + $0x11d0] sm:$0xff]
    %v876 = vld [vmem:[#allocation2 + $0x11d8] sm:$0xf]
    %v877 = vld [vmem:[#allocation2 + $0x11dc] sm:$0xff]
    %v878 = vld [vmem:[#allocation2 + $0x11e4] sm:$0xf]
    %v879 = vld [vmem:[#allocation2 + $0x11e8] sm:$0xff]
    %v880 = vld [vmem:[#allocation2 + $0x11f0] sm:$0xf]
    %v881 = vld [vmem:[#allocation2 + $0x11f4] sm:$0xff]
    %v882 = vld [vmem:[#allocation2 + $0x11fc] sm:$0xf]
    %v883 = vld [vmem:[#allocation4] sm:$0x7]
    %v885 = vlaneseq
    %v886 = vshrl.u32 %v885, 7
    %v887 = vsub.s32 0, %v886
    %v888 = vrot.slane %v883, %v887
    %v889 = vlaneseq
    %v890 = vshrl.u32 %v889, 7
    %v891 = vsub.s32 1, %v890
    %v892 = vrot.slane %v883, %v891
    %v893 = vlaneseq
    %v894 = vshrl.u32 %v893, 7
    %v895 = vsub.s32 2, %v894
    %v896 = vrot.slane %v883, %v895
    %v912 = vunpack.c.l.b16 %v103
    %v913 = vunpack.c.h.b16 %v103
    %v914 = vunpack.c.l.b16 %v104
    %v915 = vunpack.c.h.b16 %v104
    %v916 = vunpack.c.l.b16 %v105
    %v917 = vunpack.c.h.b16 %v105
    %v918 = vunpack.c.l.b16 %v106
    %v919 = vunpack.c.h.b16 %v106
    %v920 = vunpack.c.l.b16 %v107
    %v921 = vunpack.c.h.b16 %v107
    %v922 = vunpack.c.l.b16 %v108
    %v923 = vunpack.c.h.b16 %v108
    %v924 = vunpack.c.l.b16 %v109
    %v925 = vunpack.c.h.b16 %v109
    %v926 = vunpack.c.l.b16 %v110
    %v927 = vunpack.c.h.b16 %v110
    %v928 = vunpack.c.l.b16 %v111
    %v929 = vunpack.c.h.b16 %v111
    %v930 = vunpack.c.l.b16 %v112
    %v931 = vunpack.c.h.b16 %v112
    %v932 = vunpack.c.l.b16 %v113
    %v933 = vunpack.c.h.b16 %v113
    %v934 = vunpack.c.l.b16 %v114
    %v935 = vunpack.c.h.b16 %v114
    %v936 = vpack.c.b16 %v912, %v912
    %v937 = vpack.c.b16 %v913, %v913
    %v938 = vpack.c.b16 %v914, %v914
    %v939 = vpack.c.b16 %v915, %v915
    %v940 = vpack.c.b16 %v916, %v916
    %v941 = vpack.c.b16 %v917, %v917
    %v942 = vpack.c.b16 %v918, %v918
    %v943 = vpack.c.b16 %v919, %v919
    %v944 = vpack.c.b16 %v920, %v920
    %v945 = vpack.c.b16 %v921, %v921
    %v946 = vpack.c.b16 %v922, %v922
    %v947 = vpack.c.b16 %v923, %v923
    %v948 = vpack.c.b16 %v924, %v924
    %v949 = vpack.c.b16 %v925, %v925
    %v950 = vpack.c.b16 %v926, %v926
    %v951 = vpack.c.b16 %v927, %v927
    %v952 = vpack.c.b16 %v928, %v928
    %v953 = vpack.c.b16 %v929, %v929
    %v954 = vpack.c.b16 %v930, %v930
    %v955 = vpack.c.b16 %v931, %v931
    %v956 = vpack.c.b16 %v932, %v932
    %v957 = vpack.c.b16 %v933, %v933
    %v958 = vpack.c.b16 %v934, %v934
    %v959 = vpack.c.b16 %v935, %v935
    %v1752 = vunpack.c.l.b16 %v115
    %v1753 = vunpack.c.h.b16 %v115
    %v1754 = vunpack.c.l.b16 %v116
    %v1755 = vunpack.c.l.b16 %v117
    %v1756 = vunpack.c.h.b16 %v117
    %v1757 = vunpack.c.l.b16 %v118
    %v1758 = vunpack.c.l.b16 %v119
    %v1759 = vunpack.c.h.b16 %v119
    %v1760 = vunpack.c.l.b16 %v120
    %v1761 = vunpack.c.l.b16 %v121
    %v1762 = vunpack.c.h.b16 %v121
    %v1763 = vunpack.c.l.b16 %v122
    %v1764 = vunpack.c.l.b16 %v123
    %v1765 = vunpack.c.h.b16 %v123
    %v1766 = vunpack.c.l.b16 %v124
    %v1767 = vunpack.c.l.b16 %v125
    %v1768 = vunpack.c.h.b16 %v125
    %v1769 = vunpack.c.l.b16 %v126
    %v1770 = vunpack.c.l.b16 %v127
    %v1771 = vunpack.c.h.b16 %v127
    %v1772 = vunpack.c.l.b16 %v128
    %v1773 = vunpack.c.l.b16 %v129
    %v1774 = vunpack.c.h.b16 %v129
    %v1775 = vunpack.c.l.b16 %v130
    %v1776 = vunpack.c.l.b16 %v131
    %v1777 = vunpack.c.h.b16 %v131
    %v1778 = vunpack.c.l.b16 %v132
    %v1779 = vunpack.c.l.b16 %v133
    %v1780 = vunpack.c.h.b16 %v133
    %v1781 = vunpack.c.l.b16 %v134
    %v1782 = vunpack.c.l.b16 %v135
    %v1783 = vunpack.c.h.b16 %v135
    %v1784 = vunpack.c.l.b16 %v136
    %v1785 = vunpack.c.l.b16 %v137
    %v1786 = vunpack.c.h.b16 %v137
    %v1787 = vunpack.c.l.b16 %v138
    %v1788 = vunpack.c.l.b16 %v139
    %v1789 = vunpack.c.h.b16 %v139
    %v1790 = vunpack.c.l.b16 %v140
    %v1791 = vunpack.c.l.b16 %v141
    %v1792 = vunpack.c.h.b16 %v141
    %v1793 = vunpack.c.l.b16 %v142
    %v1794 = vunpack.c.l.b16 %v143
    %v1795 = vunpack.c.h.b16 %v143
    %v1796 = vunpack.c.l.b16 %v144
    %v1797 = vunpack.c.l.b16 %v145
    %v1798 = vunpack.c.h.b16 %v145
    %v1799 = vunpack.c.l.b16 %v146
    %v1800 = vunpack.c.l.b16 %v147
    %v1801 = vunpack.c.h.b16 %v147
    %v1802 = vunpack.c.l.b16 %v148
    %v1803 = vunpack.c.l.b16 %v149
    %v1804 = vunpack.c.h.b16 %v149
    %v1805 = vunpack.c.l.b16 %v150
    %v1806 = vunpack.c.l.b16 %v151
    %v1807 = vunpack.c.h.b16 %v151
    %v1808 = vunpack.c.l.b16 %v152
    %v1809 = vunpack.c.l.b16 %v153
    %v1810 = vunpack.c.h.b16 %v153
    %v1811 = vunpack.c.l.b16 %v154
    %v1812 = vunpack.c.l.b16 %v155
    %v1813 = vunpack.c.h.b16 %v155
    %v1814 = vunpack.c.l.b16 %v156
    %v1815 = vunpack.c.l.b16 %v157
    %v1816 = vunpack.c.h.b16 %v157
    %v1817 = vunpack.c.l.b16 %v158
    %v1818 = vunpack.c.l.b16 %v159
    %v1819 = vunpack.c.h.b16 %v159
    %v1820 = vunpack.c.l.b16 %v160
    %v1821 = vunpack.c.l.b16 %v161
    %v1822 = vunpack.c.h.b16 %v161
    %v1823 = vunpack.c.l.b16 %v162
    %v1824 = vunpack.c.l.b16 %v163
    %v1825 = vunpack.c.h.b16 %v163
    %v1826 = vunpack.c.l.b16 %v164
    %v1827 = vunpack.c.l.b16 %v165
    %v1828 = vunpack.c.h.b16 %v165
    %v1829 = vunpack.c.l.b16 %v166
    %v1830 = vunpack.c.l.b16 %v167
    %v1831 = vunpack.c.h.b16 %v167
    %v1832 = vunpack.c.l.b16 %v168
    %v1833 = vunpack.c.l.b16 %v169
    %v1834 = vunpack.c.h.b16 %v169
    %v1835 = vunpack.c.l.b16 %v170
    %v1836 = vunpack.c.l.b16 %v171
    %v1837 = vunpack.c.h.b16 %v171
    %v1838 = vunpack.c.l.b16 %v172
    %v1839 = vunpack.c.l.b16 %v173
    %v1840 = vunpack.c.h.b16 %v173
    %v1841 = vunpack.c.l.b16 %v174
    %v1842 = vunpack.c.l.b16 %v175
    %v1843 = vunpack.c.h.b16 %v175
    %v1844 = vunpack.c.l.b16 %v176
    %v1845 = vunpack.c.l.b16 %v177
    %v1846 = vunpack.c.h.b16 %v177
    %v1847 = vunpack.c.l.b16 %v178
    %v1848 = vunpack.c.l.b16 %v179
    %v1849 = vunpack.c.h.b16 %v179
    %v1850 = vunpack.c.l.b16 %v180
    %v1851 = vunpack.c.l.b16 %v181
    %v1852 = vunpack.c.h.b16 %v181
    %v1853 = vunpack.c.l.b16 %v182
    %v1854 = vunpack.c.l.b16 %v183
    %v1855 = vunpack.c.h.b16 %v183
    %v1856 = vunpack.c.l.b16 %v184
    %v1857 = vunpack.c.l.b16 %v185
    %v1858 = vunpack.c.h.b16 %v185
    %v1859 = vunpack.c.l.b16 %v186
    %v1860 = vunpack.c.l.b16 %v187
    %v1861 = vunpack.c.h.b16 %v187
    %v1862 = vunpack.c.l.b16 %v188
    %v1863 = vunpack.c.l.b16 %v189
    %v1864 = vunpack.c.h.b16 %v189
    %v1865 = vunpack.c.l.b16 %v190
    %v1866 = vunpack.c.l.b16 %v191
    %v1867 = vunpack.c.h.b16 %v191
    %v1868 = vunpack.c.l.b16 %v192
    %v1869 = vunpack.c.l.b16 %v193
    %v1870 = vunpack.c.h.b16 %v193
    %v1871 = vunpack.c.l.b16 %v194
    %v1872 = vunpack.c.l.b16 %v195
    %v1873 = vunpack.c.h.b16 %v195
    %v1874 = vunpack.c.l.b16 %v196
    %v1875 = vunpack.c.l.b16 %v197
    %v1876 = vunpack.c.h.b16 %v197
    %v1877 = vunpack.c.l.b16 %v198
    %v1878 = vunpack.c.l.b16 %v199
    %v1879 = vunpack.c.h.b16 %v199
    %v1880 = vunpack.c.l.b16 %v200
    %v1881 = vunpack.c.l.b16 %v201
    %v1882 = vunpack.c.h.b16 %v201
    %v1883 = vunpack.c.l.b16 %v202
    %v1884 = vunpack.c.l.b16 %v203
    %v1885 = vunpack.c.h.b16 %v203
    %v1886 = vunpack.c.l.b16 %v204
    %v1887 = vunpack.c.l.b16 %v205
    %v1888 = vunpack.c.h.b16 %v205
    %v1889 = vunpack.c.l.b16 %v206
    %v1890 = vunpack.c.l.b16 %v207
    %v1891 = vunpack.c.h.b16 %v207
    %v1892 = vunpack.c.l.b16 %v208
    %v1893 = vunpack.c.l.b16 %v209
    %v1894 = vunpack.c.h.b16 %v209
    %v1895 = vunpack.c.l.b16 %v210
    %v1896 = vunpack.c.l.b16 %v211
    %v1897 = vunpack.c.h.b16 %v211
    %v1898 = vunpack.c.l.b16 %v212
    %v1899 = vunpack.c.l.b16 %v213
    %v1900 = vunpack.c.h.b16 %v213
    %v1901 = vunpack.c.l.b16 %v214
    %v1902 = vunpack.c.l.b16 %v215
    %v1903 = vunpack.c.h.b16 %v215
    %v1904 = vunpack.c.l.b16 %v216
    %v1905 = vunpack.c.l.b16 %v217
    %v1906 = vunpack.c.h.b16 %v217
    %v1907 = vunpack.c.l.b16 %v218
    %v1908 = vunpack.c.l.b16 %v219
    %v1909 = vunpack.c.h.b16 %v219
    %v1910 = vunpack.c.l.b16 %v220
    %v1911 = vunpack.c.l.b16 %v221
    %v1912 = vunpack.c.h.b16 %v221
    %v1913 = vunpack.c.l.b16 %v222
    %v1914 = vunpack.c.l.b16 %v223
    %v1915 = vunpack.c.h.b16 %v223
    %v1916 = vunpack.c.l.b16 %v224
    %v1917 = vunpack.c.l.b16 %v225
    %v1918 = vunpack.c.h.b16 %v225
    %v1919 = vunpack.c.l.b16 %v226
    %v1920 = vunpack.c.l.b16 %v227
    %v1921 = vunpack.c.h.b16 %v227
    %v1922 = vunpack.c.l.b16 %v228
    %v1923 = vunpack.c.l.b16 %v229
    %v1924 = vunpack.c.h.b16 %v229
    %v1925 = vunpack.c.l.b16 %v230
    %v1926 = vunpack.c.l.b16 %v231
    %v1927 = vunpack.c.h.b16 %v231
    %v1928 = vunpack.c.l.b16 %v232
    %v1929 = vunpack.c.l.b16 %v233
    %v1930 = vunpack.c.h.b16 %v233
    %v1931 = vunpack.c.l.b16 %v234
    %v1932 = vunpack.c.l.b16 %v235
    %v1933 = vunpack.c.h.b16 %v235
    %v1934 = vunpack.c.l.b16 %v236
    %v1935 = vunpack.c.l.b16 %v237
    %v1936 = vunpack.c.h.b16 %v237
    %v1937 = vunpack.c.l.b16 %v238
    %v1938 = vunpack.c.l.b16 %v239
    %v1939 = vunpack.c.h.b16 %v239
    %v1940 = vunpack.c.l.b16 %v240
    %v1941 = vunpack.c.l.b16 %v241
    %v1942 = vunpack.c.h.b16 %v241
    %v1943 = vunpack.c.l.b16 %v242
    %v1944 = vunpack.c.l.b16 %v243
    %v1945 = vunpack.c.h.b16 %v243
    %v1946 = vunpack.c.l.b16 %v244
    %v1947 = vunpack.c.l.b16 %v245
    %v1948 = vunpack.c.h.b16 %v245
    %v1949 = vunpack.c.l.b16 %v246
    %v1950 = vunpack.c.l.b16 %v247
    %v1951 = vunpack.c.h.b16 %v247
    %v1952 = vunpack.c.l.b16 %v248
    %v1953 = vunpack.c.l.b16 %v249
    %v1954 = vunpack.c.h.b16 %v249
    %v1955 = vunpack.c.l.b16 %v250
    %v1956 = vunpack.c.l.b16 %v251
    %v1957 = vunpack.c.h.b16 %v251
    %v1958 = vunpack.c.l.b16 %v252
    %v1959 = vunpack.c.l.b16 %v253
    %v1960 = vunpack.c.h.b16 %v253
    %v1961 = vunpack.c.l.b16 %v254
    %v1962 = vunpack.c.l.b16 %v255
    %v1963 = vunpack.c.h.b16 %v255
    %v1964 = vunpack.c.l.b16 %v256
    %v1965 = vunpack.c.l.b16 %v257
    %v1966 = vunpack.c.h.b16 %v257
    %v1967 = vunpack.c.l.b16 %v258
    %v1968 = vunpack.c.l.b16 %v259
    %v1969 = vunpack.c.h.b16 %v259
    %v1970 = vunpack.c.l.b16 %v260
    %v1971 = vunpack.c.l.b16 %v261
    %v1972 = vunpack.c.h.b16 %v261
    %v1973 = vunpack.c.l.b16 %v262
    %v1974 = vunpack.c.l.b16 %v263
    %v1975 = vunpack.c.h.b16 %v263
    %v1976 = vunpack.c.l.b16 %v264
    %v1977 = vunpack.c.l.b16 %v265
    %v1978 = vunpack.c.h.b16 %v265
    %v1979 = vunpack.c.l.b16 %v266
    %v1980 = vunpack.c.l.b16 %v267
    %v1981 = vunpack.c.h.b16 %v267
    %v1982 = vunpack.c.l.b16 %v268
    %v1983 = vunpack.c.l.b16 %v269
    %v1984 = vunpack.c.h.b16 %v269
    %v1985 = vunpack.c.l.b16 %v270
    %v1986 = vunpack.c.l.b16 %v271
    %v1987 = vunpack.c.h.b16 %v271
    %v1988 = vunpack.c.l.b16 %v272
    %v1989 = vunpack.c.l.b16 %v273
    %v1990 = vunpack.c.h.b16 %v273
    %v1991 = vunpack.c.l.b16 %v274
    %v1992 = vunpack.c.l.b16 %v275
    %v1993 = vunpack.c.h.b16 %v275
    %v1994 = vunpack.c.l.b16 %v276
    %v1995 = vunpack.c.l.b16 %v277
    %v1996 = vunpack.c.h.b16 %v277
    %v1997 = vunpack.c.l.b16 %v278
    %v1998 = vunpack.c.l.b16 %v279
    %v1999 = vunpack.c.h.b16 %v279
    %v2000 = vunpack.c.l.b16 %v280
    %v2001 = vunpack.c.l.b16 %v281
    %v2002 = vunpack.c.h.b16 %v281
    %v2003 = vunpack.c.l.b16 %v282
    %v2004 = vunpack.c.l.b16 %v283
    %v2005 = vunpack.c.h.b16 %v283
    %v2006 = vunpack.c.l.b16 %v284
    %v2007 = vunpack.c.l.b16 %v285
    %v2008 = vunpack.c.h.b16 %v285
    %v2009 = vunpack.c.l.b16 %v286
    %v2010 = vunpack.c.l.b16 %v287
    %v2011 = vunpack.c.h.b16 %v287
    %v2012 = vunpack.c.l.b16 %v288
    %v2013 = vunpack.c.l.b16 %v289
    %v2014 = vunpack.c.h.b16 %v289
    %v2015 = vunpack.c.l.b16 %v290
    %v2016 = vunpack.c.l.b16 %v291
    %v2017 = vunpack.c.h.b16 %v291
    %v2018 = vunpack.c.l.b16 %v292
    %v2019 = vunpack.c.l.b16 %v293
    %v2020 = vunpack.c.h.b16 %v293
    %v2021 = vunpack.c.l.b16 %v294
    %v2022 = vunpack.c.l.b16 %v295
    %v2023 = vunpack.c.h.b16 %v295
    %v2024 = vunpack.c.l.b16 %v296
    %v2025 = vunpack.c.l.b16 %v297
    %v2026 = vunpack.c.h.b16 %v297
    %v2027 = vunpack.c.l.b16 %v298
    %v2028 = vunpack.c.l.b16 %v299
    %v2029 = vunpack.c.h.b16 %v299
    %v2030 = vunpack.c.l.b16 %v300
    %v2031 = vunpack.c.l.b16 %v301
    %v2032 = vunpack.c.h.b16 %v301
    %v2033 = vunpack.c.l.b16 %v302
    %v2034 = vunpack.c.l.b16 %v303
    %v2035 = vunpack.c.h.b16 %v303
    %v2036 = vunpack.c.l.b16 %v304
    %v2037 = vunpack.c.l.b16 %v305
    %v2038 = vunpack.c.h.b16 %v305
    %v2039 = vunpack.c.l.b16 %v306
    %v2040 = vunpack.c.l.b16 %v307
    %v2041 = vunpack.c.h.b16 %v307
    %v2042 = vunpack.c.l.b16 %v308
    %v2043 = vunpack.c.l.b16 %v309
    %v2044 = vunpack.c.h.b16 %v309
    %v2045 = vunpack.c.l.b16 %v310
    %v2046 = vunpack.c.l.b16 %v311
    %v2047 = vunpack.c.h.b16 %v311
    %v2048 = vunpack.c.l.b16 %v312
    %v2049 = vunpack.c.l.b16 %v313
    %v2050 = vunpack.c.h.b16 %v313
    %v2051 = vunpack.c.l.b16 %v314
    %v2052 = vunpack.c.l.b16 %v315
    %v2053 = vunpack.c.h.b16 %v315
    %v2054 = vunpack.c.l.b16 %v316
    %v2055 = vunpack.c.l.b16 %v317
    %v2056 = vunpack.c.h.b16 %v317
    %v2057 = vunpack.c.l.b16 %v318
    %v2058 = vunpack.c.l.b16 %v319
    %v2059 = vunpack.c.h.b16 %v319
    %v2060 = vunpack.c.l.b16 %v320
    %v2061 = vunpack.c.l.b16 %v321
    %v2062 = vunpack.c.h.b16 %v321
    %v2063 = vunpack.c.l.b16 %v322
    %v2064 = vunpack.c.l.b16 %v323
    %v2065 = vunpack.c.h.b16 %v323
    %v2066 = vunpack.c.l.b16 %v324
    %v2067 = vunpack.c.l.b16 %v325
    %v2068 = vunpack.c.h.b16 %v325
    %v2069 = vunpack.c.l.b16 %v326
    %v2070 = vunpack.c.l.b16 %v327
    %v2071 = vunpack.c.h.b16 %v327
    %v2072 = vunpack.c.l.b16 %v328
    %v2073 = vunpack.c.l.b16 %v329
    %v2074 = vunpack.c.h.b16 %v329
    %v2075 = vunpack.c.l.b16 %v330
    %v2076 = vunpack.c.l.b16 %v331
    %v2077 = vunpack.c.h.b16 %v331
    %v2078 = vunpack.c.l.b16 %v332
    %v2079 = vunpack.c.l.b16 %v333
    %v2080 = vunpack.c.h.b16 %v333
    %v2081 = vunpack.c.l.b16 %v334
    %v2082 = vunpack.c.l.b16 %v335
    %v2083 = vunpack.c.h.b16 %v335
    %v2084 = vunpack.c.l.b16 %v336
    %v2085 = vunpack.c.l.b16 %v337
    %v2086 = vunpack.c.h.b16 %v337
    %v2087 = vunpack.c.l.b16 %v338
    %v2088 = vunpack.c.l.b16 %v339
    %v2089 = vunpack.c.h.b16 %v339
    %v2090 = vunpack.c.l.b16 %v340
    %v2091 = vunpack.c.l.b16 %v341
    %v2092 = vunpack.c.h.b16 %v341
    %v2093 = vunpack.c.l.b16 %v342
    %v2094 = vunpack.c.l.b16 %v343
    %v2095 = vunpack.c.h.b16 %v343
    %v2096 = vunpack.c.l.b16 %v344
    %v2097 = vunpack.c.l.b16 %v345
    %v2098 = vunpack.c.h.b16 %v345
    %v2099 = vunpack.c.l.b16 %v346
    %v2100 = vunpack.c.l.b16 %v347
    %v2101 = vunpack.c.h.b16 %v347
    %v2102 = vunpack.c.l.b16 %v348
    %v2103 = vunpack.c.l.b16 %v349
    %v2104 = vunpack.c.h.b16 %v349
    %v2105 = vunpack.c.l.b16 %v350
    %v2106 = vunpack.c.l.b16 %v351
    %v2107 = vunpack.c.h.b16 %v351
    %v2108 = vunpack.c.l.b16 %v352
    %v2109 = vunpack.c.l.b16 %v353
    %v2110 = vunpack.c.h.b16 %v353
    %v2111 = vunpack.c.l.b16 %v354
    %v2112 = vunpack.c.l.b16 %v355
    %v2113 = vunpack.c.h.b16 %v355
    %v2114 = vunpack.c.l.b16 %v356
    %v2115 = vunpack.c.l.b16 %v357
    %v2116 = vunpack.c.h.b16 %v357
    %v2117 = vunpack.c.l.b16 %v358
    %v2118 = vunpack.c.l.b16 %v359
    %v2119 = vunpack.c.h.b16 %v359
    %v2120 = vunpack.c.l.b16 %v360
    %v2121 = vunpack.c.l.b16 %v361
    %v2122 = vunpack.c.h.b16 %v361
    %v2123 = vunpack.c.l.b16 %v362
    %v2124 = vunpack.c.l.b16 %v363
    %v2125 = vunpack.c.h.b16 %v363
    %v2126 = vunpack.c.l.b16 %v364
    %v2127 = vunpack.c.l.b16 %v365
    %v2128 = vunpack.c.h.b16 %v365
    %v2129 = vunpack.c.l.b16 %v366
    %v2130 = vunpack.c.l.b16 %v367
    %v2131 = vunpack.c.h.b16 %v367
    %v2132 = vunpack.c.l.b16 %v368
    %v2133 = vunpack.c.l.b16 %v369
    %v2134 = vunpack.c.h.b16 %v369
    %v2135 = vunpack.c.l.b16 %v370
    %v2136 = vunpack.c.l.b16 %v371
    %v2137 = vunpack.c.h.b16 %v371
    %v2138 = vunpack.c.l.b16 %v372
    %v2139 = vunpack.c.l.b16 %v373
    %v2140 = vunpack.c.h.b16 %v373
    %v2141 = vunpack.c.l.b16 %v374
    %v2142 = vunpack.c.l.b16 %v375
    %v2143 = vunpack.c.h.b16 %v375
    %v2144 = vunpack.c.l.b16 %v376
    %v2145 = vunpack.c.l.b16 %v377
    %v2146 = vunpack.c.h.b16 %v377
    %v2147 = vunpack.c.l.b16 %v378
    %v2148 = vunpack.c.l.b16 %v379
    %v2149 = vunpack.c.h.b16 %v379
    %v2150 = vunpack.c.l.b16 %v380
    %v2151 = vunpack.c.l.b16 %v381
    %v2152 = vunpack.c.h.b16 %v381
    %v2153 = vunpack.c.l.b16 %v382
    %v2154 = vunpack.c.l.b16 %v383
    %v2155 = vunpack.c.h.b16 %v383
    %v2156 = vunpack.c.l.b16 %v384
    %v2157 = vunpack.c.l.b16 %v385
    %v2158 = vunpack.c.h.b16 %v385
    %v2159 = vunpack.c.l.b16 %v386
    %v2160 = vunpack.c.l.b16 %v387
    %v2161 = vunpack.c.h.b16 %v387
    %v2162 = vunpack.c.l.b16 %v388
    %v2163 = vunpack.c.l.b16 %v389
    %v2164 = vunpack.c.h.b16 %v389
    %v2165 = vunpack.c.l.b16 %v390
    %v2166 = vunpack.c.l.b16 %v391
    %v2167 = vunpack.c.h.b16 %v391
    %v2168 = vunpack.c.l.b16 %v392
    %v2169 = vunpack.c.l.b16 %v393
    %v2170 = vunpack.c.h.b16 %v393
    %v2171 = vunpack.c.l.b16 %v394
    %v2172 = vunpack.c.l.b16 %v395
    %v2173 = vunpack.c.h.b16 %v395
    %v2174 = vunpack.c.l.b16 %v396
    %v2175 = vunpack.c.l.b16 %v397
    %v2176 = vunpack.c.h.b16 %v397
    %v2177 = vunpack.c.l.b16 %v398
    %v2178 = vunpack.c.l.b16 %v399
    %v2179 = vunpack.c.h.b16 %v399
    %v2180 = vunpack.c.l.b16 %v400
    %v2181 = vunpack.c.l.b16 %v401
    %v2182 = vunpack.c.h.b16 %v401
    %v2183 = vunpack.c.l.b16 %v402
    %v2184 = vunpack.c.l.b16 %v403
    %v2185 = vunpack.c.h.b16 %v403
    %v2186 = vunpack.c.l.b16 %v404
    %v2187 = vunpack.c.l.b16 %v405
    %v2188 = vunpack.c.h.b16 %v405
    %v2189 = vunpack.c.l.b16 %v406
    %v2190 = vunpack.c.l.b16 %v407
    %v2191 = vunpack.c.h.b16 %v407
    %v2192 = vunpack.c.l.b16 %v408
    %v2193 = vunpack.c.l.b16 %v409
    %v2194 = vunpack.c.h.b16 %v409
    %v2195 = vunpack.c.l.b16 %v410
    %v2196 = vunpack.c.l.b16 %v411
    %v2197 = vunpack.c.h.b16 %v411
    %v2198 = vunpack.c.l.b16 %v412
    %v2199 = vunpack.c.l.b16 %v413
    %v2200 = vunpack.c.h.b16 %v413
    %v2201 = vunpack.c.l.b16 %v414
    %v2202 = vunpack.c.l.b16 %v415
    %v2203 = vunpack.c.h.b16 %v415
    %v2204 = vunpack.c.l.b16 %v416
    %v2205 = vunpack.c.l.b16 %v417
    %v2206 = vunpack.c.h.b16 %v417
    %v2207 = vunpack.c.l.b16 %v418
    %v2208 = vunpack.c.l.b16 %v419
    %v2209 = vunpack.c.h.b16 %v419
    %v2210 = vunpack.c.l.b16 %v420
    %v2211 = vunpack.c.l.b16 %v421
    %v2212 = vunpack.c.h.b16 %v421
    %v2213 = vunpack.c.l.b16 %v422
    %v2214 = vunpack.c.l.b16 %v423
    %v2215 = vunpack.c.h.b16 %v423
    %v2216 = vunpack.c.l.b16 %v424
    %v2217 = vunpack.c.l.b16 %v425
    %v2218 = vunpack.c.h.b16 %v425
    %v2219 = vunpack.c.l.b16 %v426
    %v2220 = vunpack.c.l.b16 %v427
    %v2221 = vunpack.c.h.b16 %v427
    %v2222 = vunpack.c.l.b16 %v428
    %v2223 = vunpack.c.l.b16 %v429
    %v2224 = vunpack.c.h.b16 %v429
    %v2225 = vunpack.c.l.b16 %v430
    %v2226 = vunpack.c.l.b16 %v431
    %v2227 = vunpack.c.h.b16 %v431
    %v2228 = vunpack.c.l.b16 %v432
    %v2229 = vunpack.c.l.b16 %v433
    %v2230 = vunpack.c.h.b16 %v433
    %v2231 = vunpack.c.l.b16 %v434
    %v2232 = vunpack.c.l.b16 %v435
    %v2233 = vunpack.c.h.b16 %v435
    %v2234 = vunpack.c.l.b16 %v436
    %v2235 = vunpack.c.l.b16 %v437
    %v2236 = vunpack.c.h.b16 %v437
    %v2237 = vunpack.c.l.b16 %v438
    %v2238 = vunpack.c.l.b16 %v439
    %v2239 = vunpack.c.h.b16 %v439
    %v2240 = vunpack.c.l.b16 %v440
    %v2241 = vunpack.c.l.b16 %v441
    %v2242 = vunpack.c.h.b16 %v441
    %v2243 = vunpack.c.l.b16 %v442
    %v2244 = vunpack.c.l.b16 %v443
    %v2245 = vunpack.c.h.b16 %v443
    %v2246 = vunpack.c.l.b16 %v444
    %v2247 = vunpack.c.l.b16 %v445
    %v2248 = vunpack.c.h.b16 %v445
    %v2249 = vunpack.c.l.b16 %v446
    %v2250 = vunpack.c.l.b16 %v447
    %v2251 = vunpack.c.h.b16 %v447
    %v2252 = vunpack.c.l.b16 %v448
    %v2253 = vunpack.c.l.b16 %v449
    %v2254 = vunpack.c.h.b16 %v449
    %v2255 = vunpack.c.l.b16 %v450
    %v2256 = vunpack.c.l.b16 %v451
    %v2257 = vunpack.c.h.b16 %v451
    %v2258 = vunpack.c.l.b16 %v452
    %v2259 = vunpack.c.l.b16 %v453
    %v2260 = vunpack.c.h.b16 %v453
    %v2261 = vunpack.c.l.b16 %v454
    %v2262 = vunpack.c.l.b16 %v455
    %v2263 = vunpack.c.h.b16 %v455
    %v2264 = vunpack.c.l.b16 %v456
    %v2265 = vunpack.c.l.b16 %v457
    %v2266 = vunpack.c.h.b16 %v457
    %v2267 = vunpack.c.l.b16 %v458
    %v2268 = vunpack.c.l.b16 %v459
    %v2269 = vunpack.c.h.b16 %v459
    %v2270 = vunpack.c.l.b16 %v460
    %v2271 = vunpack.c.l.b16 %v461
    %v2272 = vunpack.c.h.b16 %v461
    %v2273 = vunpack.c.l.b16 %v462
    %v2274 = vunpack.c.l.b16 %v463
    %v2275 = vunpack.c.h.b16 %v463
    %v2276 = vunpack.c.l.b16 %v464
    %v2277 = vunpack.c.l.b16 %v465
    %v2278 = vunpack.c.h.b16 %v465
    %v2279 = vunpack.c.l.b16 %v466
    %v2280 = vunpack.c.l.b16 %v467
    %v2281 = vunpack.c.h.b16 %v467
    %v2282 = vunpack.c.l.b16 %v468
    %v2283 = vunpack.c.l.b16 %v469
    %v2284 = vunpack.c.h.b16 %v469
    %v2285 = vunpack.c.l.b16 %v470
    %v2286 = vunpack.c.l.b16 %v471
    %v2287 = vunpack.c.h.b16 %v471
    %v2288 = vunpack.c.l.b16 %v472
    %v2289 = vunpack.c.l.b16 %v473
    %v2290 = vunpack.c.h.b16 %v473
    %v2291 = vunpack.c.l.b16 %v474
    %v2292 = vunpack.c.l.b16 %v475
    %v2293 = vunpack.c.h.b16 %v475
    %v2294 = vunpack.c.l.b16 %v476
    %v2295 = vunpack.c.l.b16 %v477
    %v2296 = vunpack.c.h.b16 %v477
    %v2297 = vunpack.c.l.b16 %v478
    %v2298 = vunpack.c.l.b16 %v479
    %v2299 = vunpack.c.h.b16 %v479
    %v2300 = vunpack.c.l.b16 %v480
    %v2301 = vunpack.c.l.b16 %v481
    %v2302 = vunpack.c.h.b16 %v481
    %v2303 = vunpack.c.l.b16 %v482
    %v2304 = vunpack.c.l.b16 %v483
    %v2305 = vunpack.c.h.b16 %v483
    %v2306 = vunpack.c.l.b16 %v484
    %v2307 = vunpack.c.l.b16 %v485
    %v2308 = vunpack.c.h.b16 %v485
    %v2309 = vunpack.c.l.b16 %v486
    %v2310 = vunpack.c.l.b16 %v487
    %v2311 = vunpack.c.h.b16 %v487
    %v2312 = vunpack.c.l.b16 %v488
    %v2313 = vunpack.c.l.b16 %v489
    %v2314 = vunpack.c.h.b16 %v489
    %v2315 = vunpack.c.l.b16 %v490
    %v2316 = vunpack.c.l.b16 %v491
    %v2317 = vunpack.c.h.b16 %v491
    %v2318 = vunpack.c.l.b16 %v492
    %v2319 = vunpack.c.l.b16 %v493
    %v2320 = vunpack.c.h.b16 %v493
    %v2321 = vunpack.c.l.b16 %v494
    %v2322 = vunpack.c.l.b16 %v495
    %v2323 = vunpack.c.h.b16 %v495
    %v2324 = vunpack.c.l.b16 %v496
    %v2325 = vunpack.c.l.b16 %v497
    %v2326 = vunpack.c.h.b16 %v497
    %v2327 = vunpack.c.l.b16 %v498
    %v2328 = vunpack.c.l.b16 %v499
    %v2329 = vunpack.c.h.b16 %v499
    %v2330 = vunpack.c.l.b16 %v500
    %v2331 = vunpack.c.l.b16 %v501
    %v2332 = vunpack.c.h.b16 %v501
    %v2333 = vunpack.c.l.b16 %v502
    %v2334 = vunpack.c.l.b16 %v503
    %v2335 = vunpack.c.h.b16 %v503
    %v2336 = vunpack.c.l.b16 %v504
    %v2337 = vunpack.c.l.b16 %v505
    %v2338 = vunpack.c.h.b16 %v505
    %v2339 = vunpack.c.l.b16 %v506
    %v2340 = vunpack.c.l.b16 %v507
    %v2341 = vunpack.c.h.b16 %v507
    %v2342 = vunpack.c.l.b16 %v508
    %v2343 = vunpack.c.l.b16 %v509
    %v2344 = vunpack.c.h.b16 %v509
    %v2345 = vunpack.c.l.b16 %v510
    %v2346 = vunpack.c.l.b16 %v511
    %v2347 = vunpack.c.h.b16 %v511
    %v2348 = vunpack.c.l.b16 %v512
    %v2349 = vunpack.c.l.b16 %v513
    %v2350 = vunpack.c.h.b16 %v513
    %v2351 = vunpack.c.l.b16 %v514
    %v2352 = vunpack.c.l.b16 %v515
    %v2353 = vunpack.c.h.b16 %v515
    %v2354 = vunpack.c.l.b16 %v516
    %v2355 = vunpack.c.l.b16 %v517
    %v2356 = vunpack.c.h.b16 %v517
    %v2357 = vunpack.c.l.b16 %v518
    %v2358 = vunpack.c.l.b16 %v519
    %v2359 = vunpack.c.h.b16 %v519
    %v2360 = vunpack.c.l.b16 %v520
    %v2361 = vunpack.c.l.b16 %v521
    %v2362 = vunpack.c.h.b16 %v521
    %v2363 = vunpack.c.l.b16 %v522
    %v2364 = vunpack.c.l.b16 %v523
    %v2365 = vunpack.c.h.b16 %v523
    %v2366 = vunpack.c.l.b16 %v524
    %v2367 = vunpack.c.l.b16 %v525
    %v2368 = vunpack.c.h.b16 %v525
    %v2369 = vunpack.c.l.b16 %v526
    %v2370 = vunpack.c.l.b16 %v527
    %v2371 = vunpack.c.h.b16 %v527
    %v2372 = vunpack.c.l.b16 %v528
    %v2373 = vunpack.c.l.b16 %v529
    %v2374 = vunpack.c.h.b16 %v529
    %v2375 = vunpack.c.l.b16 %v530
    %v2376 = vunpack.c.l.b16 %v531
    %v2377 = vunpack.c.h.b16 %v531
    %v2378 = vunpack.c.l.b16 %v532
    %v2379 = vunpack.c.l.b16 %v533
    %v2380 = vunpack.c.h.b16 %v533
    %v2381 = vunpack.c.l.b16 %v534
    %v2382 = vunpack.c.l.b16 %v535
    %v2383 = vunpack.c.h.b16 %v535
    %v2384 = vunpack.c.l.b16 %v536
    %v2385 = vunpack.c.l.b16 %v537
    %v2386 = vunpack.c.h.b16 %v537
    %v2387 = vunpack.c.l.b16 %v538
    %v2388 = vunpack.c.l.b16 %v539
    %v2389 = vunpack.c.h.b16 %v539
    %v2390 = vunpack.c.l.b16 %v540
    %v2391 = vunpack.c.l.b16 %v541
    %v2392 = vunpack.c.h.b16 %v541
    %v2393 = vunpack.c.l.b16 %v542
    %v2394 = vunpack.c.l.b16 %v543
    %v2395 = vunpack.c.h.b16 %v543
    %v2396 = vunpack.c.l.b16 %v544
    %v2397 = vunpack.c.l.b16 %v545
    %v2398 = vunpack.c.h.b16 %v545
    %v2399 = vunpack.c.l.b16 %v546
    %v2400 = vunpack.c.l.b16 %v547
    %v2401 = vunpack.c.h.b16 %v547
    %v2402 = vunpack.c.l.b16 %v548
    %v2403 = vunpack.c.l.b16 %v549
    %v2404 = vunpack.c.h.b16 %v549
    %v2405 = vunpack.c.l.b16 %v550
    %v2406 = vunpack.c.l.b16 %v551
    %v2407 = vunpack.c.h.b16 %v551
    %v2408 = vunpack.c.l.b16 %v552
    %v2409 = vunpack.c.l.b16 %v553
    %v2410 = vunpack.c.h.b16 %v553
    %v2411 = vunpack.c.l.b16 %v554
    %v2412 = vunpack.c.l.b16 %v555
    %v2413 = vunpack.c.h.b16 %v555
    %v2414 = vunpack.c.l.b16 %v556
    %v2415 = vunpack.c.l.b16 %v557
    %v2416 = vunpack.c.h.b16 %v557
    %v2417 = vunpack.c.l.b16 %v558
    %v2418 = vunpack.c.l.b16 %v559
    %v2419 = vunpack.c.h.b16 %v559
    %v2420 = vunpack.c.l.b16 %v560
    %v2421 = vunpack.c.l.b16 %v561
    %v2422 = vunpack.c.h.b16 %v561
    %v2423 = vunpack.c.l.b16 %v562
    %v2424 = vunpack.c.l.b16 %v563
    %v2425 = vunpack.c.h.b16 %v563
    %v2426 = vunpack.c.l.b16 %v564
    %v2427 = vunpack.c.l.b16 %v565
    %v2428 = vunpack.c.h.b16 %v565
    %v2429 = vunpack.c.l.b16 %v566
    %v2430 = vunpack.c.l.b16 %v567
    %v2431 = vunpack.c.h.b16 %v567
    %v2432 = vunpack.c.l.b16 %v568
    %v2433 = vunpack.c.l.b16 %v569
    %v2434 = vunpack.c.h.b16 %v569
    %v2435 = vunpack.c.l.b16 %v570
    %v2436 = vunpack.c.l.b16 %v571
    %v2437 = vunpack.c.h.b16 %v571
    %v2438 = vunpack.c.l.b16 %v572
    %v2439 = vunpack.c.l.b16 %v573
    %v2440 = vunpack.c.h.b16 %v573
    %v2441 = vunpack.c.l.b16 %v574
    %v2442 = vunpack.c.l.b16 %v575
    %v2443 = vunpack.c.h.b16 %v575
    %v2444 = vunpack.c.l.b16 %v576
    %v2445 = vunpack.c.l.b16 %v577
    %v2446 = vunpack.c.h.b16 %v577
    %v2447 = vunpack.c.l.b16 %v578
    %v2448 = vunpack.c.l.b16 %v579
    %v2449 = vunpack.c.h.b16 %v579
    %v2450 = vunpack.c.l.b16 %v580
    %v2451 = vunpack.c.l.b16 %v581
    %v2452 = vunpack.c.h.b16 %v581
    %v2453 = vunpack.c.l.b16 %v582
    %v2454 = vunpack.c.l.b16 %v583
    %v2455 = vunpack.c.h.b16 %v583
    %v2456 = vunpack.c.l.b16 %v584
    %v2457 = vunpack.c.l.b16 %v585
    %v2458 = vunpack.c.h.b16 %v585
    %v2459 = vunpack.c.l.b16 %v586
    %v2460 = vunpack.c.l.b16 %v587
    %v2461 = vunpack.c.h.b16 %v587
    %v2462 = vunpack.c.l.b16 %v588
    %v2463 = vunpack.c.l.b16 %v589
    %v2464 = vunpack.c.h.b16 %v589
    %v2465 = vunpack.c.l.b16 %v590
    %v2466 = vunpack.c.l.b16 %v591
    %v2467 = vunpack.c.h.b16 %v591
    %v2468 = vunpack.c.l.b16 %v592
    %v2469 = vunpack.c.l.b16 %v593
    %v2470 = vunpack.c.h.b16 %v593
    %v2471 = vunpack.c.l.b16 %v594
    %v2472 = vunpack.c.l.b16 %v595
    %v2473 = vunpack.c.h.b16 %v595
    %v2474 = vunpack.c.l.b16 %v596
    %v2475 = vunpack.c.l.b16 %v597
    %v2476 = vunpack.c.h.b16 %v597
    %v2477 = vunpack.c.l.b16 %v598
    %v2478 = vunpack.c.l.b16 %v599
    %v2479 = vunpack.c.h.b16 %v599
    %v2480 = vunpack.c.l.b16 %v600
    %v2481 = vunpack.c.l.b16 %v601
    %v2482 = vunpack.c.h.b16 %v601
    %v2483 = vunpack.c.l.b16 %v602
    %v2484 = vunpack.c.l.b16 %v603
    %v2485 = vunpack.c.h.b16 %v603
    %v2486 = vunpack.c.l.b16 %v604
    %v2487 = vunpack.c.l.b16 %v605
    %v2488 = vunpack.c.h.b16 %v605
    %v2489 = vunpack.c.l.b16 %v606
    %v2490 = vunpack.c.l.b16 %v607
    %v2491 = vunpack.c.h.b16 %v607
    %v2492 = vunpack.c.l.b16 %v608
    %v2493 = vunpack.c.l.b16 %v609
    %v2494 = vunpack.c.h.b16 %v609
    %v2495 = vunpack.c.l.b16 %v610
    %v2496 = vunpack.c.l.b16 %v611
    %v2497 = vunpack.c.h.b16 %v611
    %v2498 = vunpack.c.l.b16 %v612
    %v2499 = vunpack.c.l.b16 %v613
    %v2500 = vunpack.c.h.b16 %v613
    %v2501 = vunpack.c.l.b16 %v614
    %v2502 = vunpack.c.l.b16 %v615
    %v2503 = vunpack.c.h.b16 %v615
    %v2504 = vunpack.c.l.b16 %v616
    %v2505 = vunpack.c.l.b16 %v617
    %v2506 = vunpack.c.h.b16 %v617
    %v2507 = vunpack.c.l.b16 %v618
    %v2508 = vunpack.c.l.b16 %v619
    %v2509 = vunpack.c.h.b16 %v619
    %v2510 = vunpack.c.l.b16 %v620
    %v2511 = vunpack.c.l.b16 %v621
    %v2512 = vunpack.c.h.b16 %v621
    %v2513 = vunpack.c.l.b16 %v622
    %v2514 = vunpack.c.l.b16 %v623
    %v2515 = vunpack.c.h.b16 %v623
    %v2516 = vunpack.c.l.b16 %v624
    %v2517 = vunpack.c.l.b16 %v625
    %v2518 = vunpack.c.h.b16 %v625
    %v2519 = vunpack.c.l.b16 %v626
    %v2520 = vunpack.c.l.b16 %v627
    %v2521 = vunpack.c.h.b16 %v627
    %v2522 = vunpack.c.l.b16 %v628
    %v2523 = vunpack.c.l.b16 %v629
    %v2524 = vunpack.c.h.b16 %v629
    %v2525 = vunpack.c.l.b16 %v630
    %v2526 = vunpack.c.l.b16 %v631
    %v2527 = vunpack.c.h.b16 %v631
    %v2528 = vunpack.c.l.b16 %v632
    %v2529 = vunpack.c.l.b16 %v633
    %v2530 = vunpack.c.h.b16 %v633
    %v2531 = vunpack.c.l.b16 %v634
    %v2532 = vunpack.c.l.b16 %v635
    %v2533 = vunpack.c.h.b16 %v635
    %v2534 = vunpack.c.l.b16 %v636
    %v2535 = vunpack.c.l.b16 %v637
    %v2536 = vunpack.c.h.b16 %v637
    %v2537 = vunpack.c.l.b16 %v638
    %v2538 = vunpack.c.l.b16 %v639
    %v2539 = vunpack.c.h.b16 %v639
    %v2540 = vunpack.c.l.b16 %v640
    %v2541 = vunpack.c.l.b16 %v641
    %v2542 = vunpack.c.h.b16 %v641
    %v2543 = vunpack.c.l.b16 %v642
    %v2544 = vunpack.c.l.b16 %v643
    %v2545 = vunpack.c.h.b16 %v643
    %v2546 = vunpack.c.l.b16 %v644
    %v2547 = vunpack.c.l.b16 %v645
    %v2548 = vunpack.c.h.b16 %v645
    %v2549 = vunpack.c.l.b16 %v646
    %v2550 = vunpack.c.l.b16 %v647
    %v2551 = vunpack.c.h.b16 %v647
    %v2552 = vunpack.c.l.b16 %v648
    %v2553 = vunpack.c.l.b16 %v649
    %v2554 = vunpack.c.h.b16 %v649
    %v2555 = vunpack.c.l.b16 %v650
    %v2556 = vunpack.c.l.b16 %v651
    %v2557 = vunpack.c.h.b16 %v651
    %v2558 = vunpack.c.l.b16 %v652
    %v2559 = vunpack.c.l.b16 %v653
    %v2560 = vunpack.c.h.b16 %v653
    %v2561 = vunpack.c.l.b16 %v654
    %v2562 = vunpack.c.l.b16 %v655
    %v2563 = vunpack.c.h.b16 %v655
    %v2564 = vunpack.c.l.b16 %v656
    %v2565 = vunpack.c.l.b16 %v657
    %v2566 = vunpack.c.h.b16 %v657
    %v2567 = vunpack.c.l.b16 %v658
    %v2568 = vunpack.c.l.b16 %v659
    %v2569 = vunpack.c.h.b16 %v659
    %v2570 = vunpack.c.l.b16 %v660
    %v2571 = vunpack.c.l.b16 %v661
    %v2572 = vunpack.c.h.b16 %v661
    %v2573 = vunpack.c.l.b16 %v662
    %v2574 = vunpack.c.l.b16 %v663
    %v2575 = vunpack.c.h.b16 %v663
    %v2576 = vunpack.c.l.b16 %v664
    %v2577 = vunpack.c.l.b16 %v665
    %v2578 = vunpack.c.h.b16 %v665
    %v2579 = vunpack.c.l.b16 %v666
    %v2580 = vunpack.c.l.b16 %v667
    %v2581 = vunpack.c.h.b16 %v667
    %v2582 = vunpack.c.l.b16 %v668
    %v2583 = vunpack.c.l.b16 %v669
    %v2584 = vunpack.c.h.b16 %v669
    %v2585 = vunpack.c.l.b16 %v670
    %v2586 = vunpack.c.l.b16 %v671
    %v2587 = vunpack.c.h.b16 %v671
    %v2588 = vunpack.c.l.b16 %v672
    %v2589 = vunpack.c.l.b16 %v673
    %v2590 = vunpack.c.h.b16 %v673
    %v2591 = vunpack.c.l.b16 %v674
    %v2592 = vunpack.c.l.b16 %v675
    %v2593 = vunpack.c.h.b16 %v675
    %v2594 = vunpack.c.l.b16 %v676
    %v2595 = vunpack.c.l.b16 %v677
    %v2596 = vunpack.c.h.b16 %v677
    %v2597 = vunpack.c.l.b16 %v678
    %v2598 = vunpack.c.l.b16 %v679
    %v2599 = vunpack.c.h.b16 %v679
    %v2600 = vunpack.c.l.b16 %v680
    %v2601 = vunpack.c.l.b16 %v681
    %v2602 = vunpack.c.h.b16 %v681
    %v2603 = vunpack.c.l.b16 %v682
    %v2604 = vunpack.c.l.b16 %v683
    %v2605 = vunpack.c.h.b16 %v683
    %v2606 = vunpack.c.l.b16 %v684
    %v2607 = vunpack.c.l.b16 %v685
    %v2608 = vunpack.c.h.b16 %v685
    %v2609 = vunpack.c.l.b16 %v686
    %v2610 = vunpack.c.l.b16 %v687
    %v2611 = vunpack.c.h.b16 %v687
    %v2612 = vunpack.c.l.b16 %v688
    %v2613 = vunpack.c.l.b16 %v689
    %v2614 = vunpack.c.h.b16 %v689
    %v2615 = vunpack.c.l.b16 %v690
    %v2616 = vunpack.c.l.b16 %v691
    %v2617 = vunpack.c.h.b16 %v691
    %v2618 = vunpack.c.l.b16 %v692
    %v2619 = vunpack.c.l.b16 %v693
    %v2620 = vunpack.c.h.b16 %v693
    %v2621 = vunpack.c.l.b16 %v694
    %v2622 = vunpack.c.l.b16 %v695
    %v2623 = vunpack.c.h.b16 %v695
    %v2624 = vunpack.c.l.b16 %v696
    %v2625 = vunpack.c.l.b16 %v697
    %v2626 = vunpack.c.h.b16 %v697
    %v2627 = vunpack.c.l.b16 %v698
    %v2628 = vunpack.c.l.b16 %v699
    %v2629 = vunpack.c.h.b16 %v699
    %v2630 = vunpack.c.l.b16 %v700
    %v2631 = vunpack.c.l.b16 %v701
    %v2632 = vunpack.c.h.b16 %v701
    %v2633 = vunpack.c.l.b16 %v702
    %v2634 = vunpack.c.l.b16 %v703
    %v2635 = vunpack.c.h.b16 %v703
    %v2636 = vunpack.c.l.b16 %v704
    %v2637 = vunpack.c.l.b16 %v705
    %v2638 = vunpack.c.h.b16 %v705
    %v2639 = vunpack.c.l.b16 %v706
    %v2640 = vunpack.c.l.b16 %v707
    %v2641 = vunpack.c.h.b16 %v707
    %v2642 = vunpack.c.l.b16 %v708
    %v2643 = vunpack.c.l.b16 %v709
    %v2644 = vunpack.c.h.b16 %v709
    %v2645 = vunpack.c.l.b16 %v710
    %v2646 = vunpack.c.l.b16 %v711
    %v2647 = vunpack.c.h.b16 %v711
    %v2648 = vunpack.c.l.b16 %v712
    %v2649 = vunpack.c.l.b16 %v713
    %v2650 = vunpack.c.h.b16 %v713
    %v2651 = vunpack.c.l.b16 %v714
    %v2652 = vunpack.c.l.b16 %v715
    %v2653 = vunpack.c.h.b16 %v715
    %v2654 = vunpack.c.l.b16 %v716
    %v2655 = vunpack.c.l.b16 %v717
    %v2656 = vunpack.c.h.b16 %v717
    %v2657 = vunpack.c.l.b16 %v718
    %v2658 = vunpack.c.l.b16 %v719
    %v2659 = vunpack.c.h.b16 %v719
    %v2660 = vunpack.c.l.b16 %v720
    %v2661 = vunpack.c.l.b16 %v721
    %v2662 = vunpack.c.h.b16 %v721
    %v2663 = vunpack.c.l.b16 %v722
    %v2664 = vunpack.c.l.b16 %v723
    %v2665 = vunpack.c.h.b16 %v723
    %v2666 = vunpack.c.l.b16 %v724
    %v2667 = vunpack.c.l.b16 %v725
    %v2668 = vunpack.c.h.b16 %v725
    %v2669 = vunpack.c.l.b16 %v726
    %v2670 = vunpack.c.l.b16 %v727
    %v2671 = vunpack.c.h.b16 %v727
    %v2672 = vunpack.c.l.b16 %v728
    %v2673 = vunpack.c.l.b16 %v729
    %v2674 = vunpack.c.h.b16 %v729
    %v2675 = vunpack.c.l.b16 %v730
    %v2676 = vunpack.c.l.b16 %v731
    %v2677 = vunpack.c.h.b16 %v731
    %v2678 = vunpack.c.l.b16 %v732
    %v2679 = vunpack.c.l.b16 %v733
    %v2680 = vunpack.c.h.b16 %v733
    %v2681 = vunpack.c.l.b16 %v734
    %v2682 = vunpack.c.l.b16 %v735
    %v2683 = vunpack.c.h.b16 %v735
    %v2684 = vunpack.c.l.b16 %v736
    %v2685 = vunpack.c.l.b16 %v737
    %v2686 = vunpack.c.h.b16 %v737
    %v2687 = vunpack.c.l.b16 %v738
    %v2688 = vunpack.c.l.b16 %v739
    %v2689 = vunpack.c.h.b16 %v739
    %v2690 = vunpack.c.l.b16 %v740
    %v2691 = vunpack.c.l.b16 %v741
    %v2692 = vunpack.c.h.b16 %v741
    %v2693 = vunpack.c.l.b16 %v742
    %v2694 = vunpack.c.l.b16 %v743
    %v2695 = vunpack.c.h.b16 %v743
    %v2696 = vunpack.c.l.b16 %v744
    %v2697 = vunpack.c.l.b16 %v745
    %v2698 = vunpack.c.h.b16 %v745
    %v2699 = vunpack.c.l.b16 %v746
    %v2700 = vunpack.c.l.b16 %v747
    %v2701 = vunpack.c.h.b16 %v747
    %v2702 = vunpack.c.l.b16 %v748
    %v2703 = vunpack.c.l.b16 %v749
    %v2704 = vunpack.c.h.b16 %v749
    %v2705 = vunpack.c.l.b16 %v750
    %v2706 = vunpack.c.l.b16 %v751
    %v2707 = vunpack.c.h.b16 %v751
    %v2708 = vunpack.c.l.b16 %v752
    %v2709 = vunpack.c.l.b16 %v753
    %v2710 = vunpack.c.h.b16 %v753
    %v2711 = vunpack.c.l.b16 %v754
    %v2712 = vunpack.c.l.b16 %v755
    %v2713 = vunpack.c.h.b16 %v755
    %v2714 = vunpack.c.l.b16 %v756
    %v2715 = vunpack.c.l.b16 %v757
    %v2716 = vunpack.c.h.b16 %v757
    %v2717 = vunpack.c.l.b16 %v758
    %v2718 = vunpack.c.l.b16 %v759
    %v2719 = vunpack.c.h.b16 %v759
    %v2720 = vunpack.c.l.b16 %v760
    %v2721 = vunpack.c.l.b16 %v761
    %v2722 = vunpack.c.h.b16 %v761
    %v2723 = vunpack.c.l.b16 %v762
    %v2724 = vunpack.c.l.b16 %v763
    %v2725 = vunpack.c.h.b16 %v763
    %v2726 = vunpack.c.l.b16 %v764
    %v2727 = vunpack.c.l.b16 %v765
    %v2728 = vunpack.c.h.b16 %v765
    %v2729 = vunpack.c.l.b16 %v766
    %v2730 = vunpack.c.l.b16 %v767
    %v2731 = vunpack.c.h.b16 %v767
    %v2732 = vunpack.c.l.b16 %v768
    %v2733 = vunpack.c.l.b16 %v769
    %v2734 = vunpack.c.h.b16 %v769
    %v2735 = vunpack.c.l.b16 %v770
    %v2736 = vunpack.c.l.b16 %v771
    %v2737 = vunpack.c.h.b16 %v771
    %v2738 = vunpack.c.l.b16 %v772
    %v2739 = vunpack.c.l.b16 %v773
    %v2740 = vunpack.c.h.b16 %v773
    %v2741 = vunpack.c.l.b16 %v774
    %v2742 = vunpack.c.l.b16 %v775
    %v2743 = vunpack.c.h.b16 %v775
    %v2744 = vunpack.c.l.b16 %v776
    %v2745 = vunpack.c.l.b16 %v777
    %v2746 = vunpack.c.h.b16 %v777
    %v2747 = vunpack.c.l.b16 %v778
    %v2748 = vunpack.c.l.b16 %v779
    %v2749 = vunpack.c.h.b16 %v779
    %v2750 = vunpack.c.l.b16 %v780
    %v2751 = vunpack.c.l.b16 %v781
    %v2752 = vunpack.c.h.b16 %v781
    %v2753 = vunpack.c.l.b16 %v782
    %v2754 = vunpack.c.l.b16 %v783
    %v2755 = vunpack.c.h.b16 %v783
    %v2756 = vunpack.c.l.b16 %v784
    %v2757 = vunpack.c.l.b16 %v785
    %v2758 = vunpack.c.h.b16 %v785
    %v2759 = vunpack.c.l.b16 %v786
    %v2760 = vunpack.c.l.b16 %v787
    %v2761 = vunpack.c.h.b16 %v787
    %v2762 = vunpack.c.l.b16 %v788
    %v2763 = vunpack.c.l.b16 %v789
    %v2764 = vunpack.c.h.b16 %v789
    %v2765 = vunpack.c.l.b16 %v790
    %v2766 = vunpack.c.l.b16 %v791
    %v2767 = vunpack.c.h.b16 %v791
    %v2768 = vunpack.c.l.b16 %v792
    %v2769 = vunpack.c.l.b16 %v793
    %v2770 = vunpack.c.h.b16 %v793
    %v2771 = vunpack.c.l.b16 %v794
    %v2772 = vunpack.c.l.b16 %v795
    %v2773 = vunpack.c.h.b16 %v795
    %v2774 = vunpack.c.l.b16 %v796
    %v2775 = vunpack.c.l.b16 %v797
    %v2776 = vunpack.c.h.b16 %v797
    %v2777 = vunpack.c.l.b16 %v798
    %v2778 = vunpack.c.l.b16 %v799
    %v2779 = vunpack.c.h.b16 %v799
    %v2780 = vunpack.c.l.b16 %v800
    %v2781 = vunpack.c.l.b16 %v801
    %v2782 = vunpack.c.h.b16 %v801
    %v2783 = vunpack.c.l.b16 %v802
    %v2784 = vunpack.c.l.b16 %v803
    %v2785 = vunpack.c.h.b16 %v803
    %v2786 = vunpack.c.l.b16 %v804
    %v2787 = vunpack.c.l.b16 %v805
    %v2788 = vunpack.c.h.b16 %v805
    %v2789 = vunpack.c.l.b16 %v806
    %v2790 = vunpack.c.l.b16 %v807
    %v2791 = vunpack.c.h.b16 %v807
    %v2792 = vunpack.c.l.b16 %v808
    %v2793 = vunpack.c.l.b16 %v809
    %v2794 = vunpack.c.h.b16 %v809
    %v2795 = vunpack.c.l.b16 %v810
    %v2796 = vunpack.c.l.b16 %v811
    %v2797 = vunpack.c.h.b16 %v811
    %v2798 = vunpack.c.l.b16 %v812
    %v2799 = vunpack.c.l.b16 %v813
    %v2800 = vunpack.c.h.b16 %v813
    %v2801 = vunpack.c.l.b16 %v814
    %v2802 = vunpack.c.l.b16 %v815
    %v2803 = vunpack.c.h.b16 %v815
    %v2804 = vunpack.c.l.b16 %v816
    %v2805 = vunpack.c.l.b16 %v817
    %v2806 = vunpack.c.h.b16 %v817
    %v2807 = vunpack.c.l.b16 %v818
    %v2808 = vunpack.c.l.b16 %v819
    %v2809 = vunpack.c.h.b16 %v819
    %v2810 = vunpack.c.l.b16 %v820
    %v2811 = vunpack.c.l.b16 %v821
    %v2812 = vunpack.c.h.b16 %v821
    %v2813 = vunpack.c.l.b16 %v822
    %v2814 = vunpack.c.l.b16 %v823
    %v2815 = vunpack.c.h.b16 %v823
    %v2816 = vunpack.c.l.b16 %v824
    %v2817 = vunpack.c.l.b16 %v825
    %v2818 = vunpack.c.h.b16 %v825
    %v2819 = vunpack.c.l.b16 %v826
    %v2820 = vunpack.c.l.b16 %v827
    %v2821 = vunpack.c.h.b16 %v827
    %v2822 = vunpack.c.l.b16 %v828
    %v2823 = vunpack.c.l.b16 %v829
    %v2824 = vunpack.c.h.b16 %v829
    %v2825 = vunpack.c.l.b16 %v830
    %v2826 = vunpack.c.l.b16 %v831
    %v2827 = vunpack.c.h.b16 %v831
    %v2828 = vunpack.c.l.b16 %v832
    %v2829 = vunpack.c.l.b16 %v833
    %v2830 = vunpack.c.h.b16 %v833
    %v2831 = vunpack.c.l.b16 %v834
    %v2832 = vunpack.c.l.b16 %v835
    %v2833 = vunpack.c.h.b16 %v835
    %v2834 = vunpack.c.l.b16 %v836
    %v2835 = vunpack.c.l.b16 %v837
    %v2836 = vunpack.c.h.b16 %v837
    %v2837 = vunpack.c.l.b16 %v838
    %v2838 = vunpack.c.l.b16 %v839
    %v2839 = vunpack.c.h.b16 %v839
    %v2840 = vunpack.c.l.b16 %v840
    %v2841 = vunpack.c.l.b16 %v841
    %v2842 = vunpack.c.h.b16 %v841
    %v2843 = vunpack.c.l.b16 %v842
    %v2844 = vunpack.c.l.b16 %v843
    %v2845 = vunpack.c.h.b16 %v843
    %v2846 = vunpack.c.l.b16 %v844
    %v2847 = vunpack.c.l.b16 %v845
    %v2848 = vunpack.c.h.b16 %v845
    %v2849 = vunpack.c.l.b16 %v846
    %v2850 = vunpack.c.l.b16 %v847
    %v2851 = vunpack.c.h.b16 %v847
    %v2852 = vunpack.c.l.b16 %v848
    %v2853 = vunpack.c.l.b16 %v849
    %v2854 = vunpack.c.h.b16 %v849
    %v2855 = vunpack.c.l.b16 %v850
    %v2856 = vunpack.c.l.b16 %v851
    %v2857 = vunpack.c.h.b16 %v851
    %v2858 = vunpack.c.l.b16 %v852
    %v2859 = vunpack.c.l.b16 %v853
    %v2860 = vunpack.c.h.b16 %v853
    %v2861 = vunpack.c.l.b16 %v854
    %v2862 = vunpack.c.l.b16 %v855
    %v2863 = vunpack.c.h.b16 %v855
    %v2864 = vunpack.c.l.b16 %v856
    %v2865 = vunpack.c.l.b16 %v857
    %v2866 = vunpack.c.h.b16 %v857
    %v2867 = vunpack.c.l.b16 %v858
    %v2868 = vunpack.c.l.b16 %v859
    %v2869 = vunpack.c.h.b16 %v859
    %v2870 = vunpack.c.l.b16 %v860
    %v2871 = vunpack.c.l.b16 %v861
    %v2872 = vunpack.c.h.b16 %v861
    %v2873 = vunpack.c.l.b16 %v862
    %v2874 = vunpack.c.l.b16 %v863
    %v2875 = vunpack.c.h.b16 %v863
    %v2876 = vunpack.c.l.b16 %v864
    %v2877 = vunpack.c.l.b16 %v865
    %v2878 = vunpack.c.h.b16 %v865
    %v2879 = vunpack.c.l.b16 %v866
    %v2880 = vunpack.c.l.b16 %v867
    %v2881 = vunpack.c.h.b16 %v867
    %v2882 = vunpack.c.l.b16 %v868
    %v2883 = vunpack.c.l.b16 %v869
    %v2884 = vunpack.c.h.b16 %v869
    %v2885 = vunpack.c.l.b16 %v870
    %v2886 = vunpack.c.l.b16 %v871
    %v2887 = vunpack.c.h.b16 %v871
    %v2888 = vunpack.c.l.b16 %v872
    %v2889 = vunpack.c.l.b16 %v873
    %v2890 = vunpack.c.h.b16 %v873
    %v2891 = vunpack.c.l.b16 %v874
    %v2892 = vunpack.c.l.b16 %v875
    %v2893 = vunpack.c.h.b16 %v875
    %v2894 = vunpack.c.l.b16 %v876
    %v2895 = vunpack.c.l.b16 %v877
    %v2896 = vunpack.c.h.b16 %v877
    %v2897 = vunpack.c.l.b16 %v878
    %v2898 = vunpack.c.l.b16 %v879
    %v2899 = vunpack.c.h.b16 %v879
    %v2900 = vunpack.c.l.b16 %v880
    %v2901 = vunpack.c.l.b16 %v881
    %v2902 = vunpack.c.h.b16 %v881
    %v2903 = vunpack.c.l.b16 %v882
    %v2904 = vpack.c.b16 %v1755, %v1752
    %v2905 = vpack.c.b16 %v1756, %v1753
    %v2906 = vpack.c.b16 %v1757, %v1754
    %v2907 = vpack.c.b16 %v1761, %v1758
    %v2908 = vpack.c.b16 %v1762, %v1759
    %v2909 = vpack.c.b16 %v1763, %v1760
    %v2910 = vpack.c.b16 %v1767, %v1764
    %v2911 = vpack.c.b16 %v1768, %v1765
    %v2912 = vpack.c.b16 %v1769, %v1766
    %v2913 = vpack.c.b16 %v1773, %v1770
    %v2914 = vpack.c.b16 %v1774, %v1771
    %v2915 = vpack.c.b16 %v1775, %v1772
    %v2916 = vpack.c.b16 %v1779, %v1776
    %v2917 = vpack.c.b16 %v1780, %v1777
    %v2918 = vpack.c.b16 %v1781, %v1778
    %v2919 = vpack.c.b16 %v1785, %v1782
    %v2920 = vpack.c.b16 %v1786, %v1783
    %v2921 = vpack.c.b16 %v1787, %v1784
    %v2922 = vpack.c.b16 %v1791, %v1788
    %v2923 = vpack.c.b16 %v1792, %v1789
    %v2924 = vpack.c.b16 %v1793, %v1790
    %v2925 = vpack.c.b16 %v1797, %v1794
    %v2926 = vpack.c.b16 %v1798, %v1795
    %v2927 = vpack.c.b16 %v1799, %v1796
    %v2928 = vpack.c.b16 %v1803, %v1800
    %v2929 = vpack.c.b16 %v1804, %v1801
    %v2930 = vpack.c.b16 %v1805, %v1802
    %v2931 = vpack.c.b16 %v1809, %v1806
    %v2932 = vpack.c.b16 %v1810, %v1807
    %v2933 = vpack.c.b16 %v1811, %v1808
    %v2934 = vpack.c.b16 %v1815, %v1812
    %v2935 = vpack.c.b16 %v1816, %v1813
    %v2936 = vpack.c.b16 %v1817, %v1814
    %v2937 = vpack.c.b16 %v1821, %v1818
    %v2938 = vpack.c.b16 %v1822, %v1819
    %v2939 = vpack.c.b16 %v1823, %v1820
    %v2940 = vpack.c.b16 %v1827, %v1824
    %v2941 = vpack.c.b16 %v1828, %v1825
    %v2942 = vpack.c.b16 %v1829, %v1826
    %v2943 = vpack.c.b16 %v1833, %v1830
    %v2944 = vpack.c.b16 %v1834, %v1831
    %v2945 = vpack.c.b16 %v1835, %v1832
    %v2946 = vpack.c.b16 %v1839, %v1836
    %v2947 = vpack.c.b16 %v1840, %v1837
    %v2948 = vpack.c.b16 %v1841, %v1838
    %v2949 = vpack.c.b16 %v1845, %v1842
    %v2950 = vpack.c.b16 %v1846, %v1843
    %v2951 = vpack.c.b16 %v1847, %v1844
    %v2952 = vpack.c.b16 %v1851, %v1848
    %v2953 = vpack.c.b16 %v1852, %v1849
    %v2954 = vpack.c.b16 %v1853, %v1850
    %v2955 = vpack.c.b16 %v1857, %v1854
    %v2956 = vpack.c.b16 %v1858, %v1855
    %v2957 = vpack.c.b16 %v1859, %v1856
    %v2958 = vpack.c.b16 %v1863, %v1860
    %v2959 = vpack.c.b16 %v1864, %v1861
    %v2960 = vpack.c.b16 %v1865, %v1862
    %v2961 = vpack.c.b16 %v1869, %v1866
    %v2962 = vpack.c.b16 %v1870, %v1867
    %v2963 = vpack.c.b16 %v1871, %v1868
    %v2964 = vpack.c.b16 %v1875, %v1872
    %v2965 = vpack.c.b16 %v1876, %v1873
    %v2966 = vpack.c.b16 %v1877, %v1874
    %v2967 = vpack.c.b16 %v1881, %v1878
    %v2968 = vpack.c.b16 %v1882, %v1879
    %v2969 = vpack.c.b16 %v1883, %v1880
    %v2970 = vpack.c.b16 %v1887, %v1884
    %v2971 = vpack.c.b16 %v1888, %v1885
    %v2972 = vpack.c.b16 %v1889, %v1886
    %v2973 = vpack.c.b16 %v1893, %v1890
    %v2974 = vpack.c.b16 %v1894, %v1891
    %v2975 = vpack.c.b16 %v1895, %v1892
    %v2976 = vpack.c.b16 %v1899, %v1896
    %v2977 = vpack.c.b16 %v1900, %v1897
    %v2978 = vpack.c.b16 %v1901, %v1898
    %v2979 = vpack.c.b16 %v1905, %v1902
    %v2980 = vpack.c.b16 %v1906, %v1903
    %v2981 = vpack.c.b16 %v1907, %v1904
    %v2982 = vpack.c.b16 %v1911, %v1908
    %v2983 = vpack.c.b16 %v1912, %v1909
    %v2984 = vpack.c.b16 %v1913, %v1910
    %v2985 = vpack.c.b16 %v1917, %v1914
    %v2986 = vpack.c.b16 %v1918, %v1915
    %v2987 = vpack.c.b16 %v1919, %v1916
    %v2988 = vpack.c.b16 %v1923, %v1920
    %v2989 = vpack.c.b16 %v1924, %v1921
    %v2990 = vpack.c.b16 %v1925, %v1922
    %v2991 = vpack.c.b16 %v1929, %v1926
    %v2992 = vpack.c.b16 %v1930, %v1927
    %v2993 = vpack.c.b16 %v1931, %v1928
    %v2994 = vpack.c.b16 %v1935, %v1932
    %v2995 = vpack.c.b16 %v1936, %v1933
    %v2996 = vpack.c.b16 %v1937, %v1934
    %v2997 = vpack.c.b16 %v1941, %v1938
    %v2998 = vpack.c.b16 %v1942, %v1939
    %v2999 = vpack.c.b16 %v1943, %v1940
    %v3000 = vpack.c.b16 %v1947, %v1944
    %v3001 = vpack.c.b16 %v1948, %v1945
    %v3002 = vpack.c.b16 %v1949, %v1946
    %v3003 = vpack.c.b16 %v1953, %v1950
    %v3004 = vpack.c.b16 %v1954, %v1951
    %v3005 = vpack.c.b16 %v1955, %v1952
    %v3006 = vpack.c.b16 %v1959, %v1956
    %v3007 = vpack.c.b16 %v1960, %v1957
    %v3008 = vpack.c.b16 %v1961, %v1958
    %v3009 = vpack.c.b16 %v1965, %v1962
    %v3010 = vpack.c.b16 %v1966, %v1963
    %v3011 = vpack.c.b16 %v1967, %v1964
    %v3012 = vpack.c.b16 %v1971, %v1968
    %v3013 = vpack.c.b16 %v1972, %v1969
    %v3014 = vpack.c.b16 %v1973, %v1970
    %v3015 = vpack.c.b16 %v1977, %v1974
    %v3016 = vpack.c.b16 %v1978, %v1975
    %v3017 = vpack.c.b16 %v1979, %v1976
    %v3018 = vpack.c.b16 %v1983, %v1980
    %v3019 = vpack.c.b16 %v1984, %v1981
    %v3020 = vpack.c.b16 %v1985, %v1982
    %v3021 = vpack.c.b16 %v1989, %v1986
    %v3022 = vpack.c.b16 %v1990, %v1987
    %v3023 = vpack.c.b16 %v1991, %v1988
    %v3024 = vpack.c.b16 %v1995, %v1992
    %v3025 = vpack.c.b16 %v1996, %v1993
    %v3026 = vpack.c.b16 %v1997, %v1994
    %v3027 = vpack.c.b16 %v2001, %v1998
    %v3028 = vpack.c.b16 %v2002, %v1999
    %v3029 = vpack.c.b16 %v2003, %v2000
    %v3030 = vpack.c.b16 %v2007, %v2004
    %v3031 = vpack.c.b16 %v2008, %v2005
    %v3032 = vpack.c.b16 %v2009, %v2006
    %v3033 = vpack.c.b16 %v2013, %v2010
    %v3034 = vpack.c.b16 %v2014, %v2011
    %v3035 = vpack.c.b16 %v2015, %v2012
    %v3036 = vpack.c.b16 %v2019, %v2016
    %v3037 = vpack.c.b16 %v2020, %v2017
    %v3038 = vpack.c.b16 %v2021, %v2018
    %v3039 = vpack.c.b16 %v2025, %v2022
    %v3040 = vpack.c.b16 %v2026, %v2023
    %v3041 = vpack.c.b16 %v2027, %v2024
    %v3042 = vpack.c.b16 %v2031, %v2028
    %v3043 = vpack.c.b16 %v2032, %v2029
    %v3044 = vpack.c.b16 %v2033, %v2030
    %v3045 = vpack.c.b16 %v2037, %v2034
    %v3046 = vpack.c.b16 %v2038, %v2035
    %v3047 = vpack.c.b16 %v2039, %v2036
    %v3048 = vpack.c.b16 %v2043, %v2040
    %v3049 = vpack.c.b16 %v2044, %v2041
    %v3050 = vpack.c.b16 %v2045, %v2042
    %v3051 = vpack.c.b16 %v2049, %v2046
    %v3052 = vpack.c.b16 %v2050, %v2047
    %v3053 = vpack.c.b16 %v2051, %v2048
    %v3054 = vpack.c.b16 %v2055, %v2052
    %v3055 = vpack.c.b16 %v2056, %v2053
    %v3056 = vpack.c.b16 %v2057, %v2054
    %v3057 = vpack.c.b16 %v2061, %v2058
    %v3058 = vpack.c.b16 %v2062, %v2059
    %v3059 = vpack.c.b16 %v2063, %v2060
    %v3060 = vpack.c.b16 %v2067, %v2064
    %v3061 = vpack.c.b16 %v2068, %v2065
    %v3062 = vpack.c.b16 %v2069, %v2066
    %v3063 = vpack.c.b16 %v2073, %v2070
    %v3064 = vpack.c.b16 %v2074, %v2071
    %v3065 = vpack.c.b16 %v2075, %v2072
    %v3066 = vpack.c.b16 %v2079, %v2076
    %v3067 = vpack.c.b16 %v2080, %v2077
    %v3068 = vpack.c.b16 %v2081, %v2078
    %v3069 = vpack.c.b16 %v2085, %v2082
    %v3070 = vpack.c.b16 %v2086, %v2083
    %v3071 = vpack.c.b16 %v2087, %v2084
    %v3072 = vpack.c.b16 %v2091, %v2088
    %v3073 = vpack.c.b16 %v2092, %v2089
    %v3074 = vpack.c.b16 %v2093, %v2090
    %v3075 = vpack.c.b16 %v2097, %v2094
    %v3076 = vpack.c.b16 %v2098, %v2095
    %v3077 = vpack.c.b16 %v2099, %v2096
    %v3078 = vpack.c.b16 %v2103, %v2100
    %v3079 = vpack.c.b16 %v2104, %v2101
    %v3080 = vpack.c.b16 %v2105, %v2102
    %v3081 = vpack.c.b16 %v2109, %v2106
    %v3082 = vpack.c.b16 %v2110, %v2107
    %v3083 = vpack.c.b16 %v2111, %v2108
    %v3084 = vpack.c.b16 %v2115, %v2112
    %v3085 = vpack.c.b16 %v2116, %v2113
    %v3086 = vpack.c.b16 %v2117, %v2114
    %v3087 = vpack.c.b16 %v2121, %v2118
    %v3088 = vpack.c.b16 %v2122, %v2119
    %v3089 = vpack.c.b16 %v2123, %v2120
    %v3090 = vpack.c.b16 %v2127, %v2124
    %v3091 = vpack.c.b16 %v2128, %v2125
    %v3092 = vpack.c.b16 %v2129, %v2126
    %v3093 = vpack.c.b16 %v2133, %v2130
    %v3094 = vpack.c.b16 %v2134, %v2131
    %v3095 = vpack.c.b16 %v2135, %v2132
    %v3096 = vpack.c.b16 %v2139, %v2136
    %v3097 = vpack.c.b16 %v2140, %v2137
    %v3098 = vpack.c.b16 %v2141, %v2138
    %v3099 = vpack.c.b16 %v2145, %v2142
    %v3100 = vpack.c.b16 %v2146, %v2143
    %v3101 = vpack.c.b16 %v2147, %v2144
    %v3102 = vpack.c.b16 %v2151, %v2148
    %v3103 = vpack.c.b16 %v2152, %v2149
    %v3104 = vpack.c.b16 %v2153, %v2150
    %v3105 = vpack.c.b16 %v2157, %v2154
    %v3106 = vpack.c.b16 %v2158, %v2155
    %v3107 = vpack.c.b16 %v2159, %v2156
    %v3108 = vpack.c.b16 %v2163, %v2160
    %v3109 = vpack.c.b16 %v2164, %v2161
    %v3110 = vpack.c.b16 %v2165, %v2162
    %v3111 = vpack.c.b16 %v2169, %v2166
    %v3112 = vpack.c.b16 %v2170, %v2167
    %v3113 = vpack.c.b16 %v2171, %v2168
    %v3114 = vpack.c.b16 %v2175, %v2172
    %v3115 = vpack.c.b16 %v2176, %v2173
    %v3116 = vpack.c.b16 %v2177, %v2174
    %v3117 = vpack.c.b16 %v2181, %v2178
    %v3118 = vpack.c.b16 %v2182, %v2179
    %v3119 = vpack.c.b16 %v2183, %v2180
    %v3120 = vpack.c.b16 %v2187, %v2184
    %v3121 = vpack.c.b16 %v2188, %v2185
    %v3122 = vpack.c.b16 %v2189, %v2186
    %v3123 = vpack.c.b16 %v2193, %v2190
    %v3124 = vpack.c.b16 %v2194, %v2191
    %v3125 = vpack.c.b16 %v2195, %v2192
    %v3126 = vpack.c.b16 %v2199, %v2196
    %v3127 = vpack.c.b16 %v2200, %v2197
    %v3128 = vpack.c.b16 %v2201, %v2198
    %v3129 = vpack.c.b16 %v2205, %v2202
    %v3130 = vpack.c.b16 %v2206, %v2203
    %v3131 = vpack.c.b16 %v2207, %v2204
    %v3132 = vpack.c.b16 %v2211, %v2208
    %v3133 = vpack.c.b16 %v2212, %v2209
    %v3134 = vpack.c.b16 %v2213, %v2210
    %v3135 = vpack.c.b16 %v2217, %v2214
    %v3136 = vpack.c.b16 %v2218, %v2215
    %v3137 = vpack.c.b16 %v2219, %v2216
    %v3138 = vpack.c.b16 %v2223, %v2220
    %v3139 = vpack.c.b16 %v2224, %v2221
    %v3140 = vpack.c.b16 %v2225, %v2222
    %v3141 = vpack.c.b16 %v2229, %v2226
    %v3142 = vpack.c.b16 %v2230, %v2227
    %v3143 = vpack.c.b16 %v2231, %v2228
    %v3144 = vpack.c.b16 %v2235, %v2232
    %v3145 = vpack.c.b16 %v2236, %v2233
    %v3146 = vpack.c.b16 %v2237, %v2234
    %v3147 = vpack.c.b16 %v2241, %v2238
    %v3148 = vpack.c.b16 %v2242, %v2239
    %v3149 = vpack.c.b16 %v2243, %v2240
    %v3150 = vpack.c.b16 %v2247, %v2244
    %v3151 = vpack.c.b16 %v2248, %v2245
    %v3152 = vpack.c.b16 %v2249, %v2246
    %v3153 = vpack.c.b16 %v2253, %v2250
    %v3154 = vpack.c.b16 %v2254, %v2251
    %v3155 = vpack.c.b16 %v2255, %v2252
    %v3156 = vpack.c.b16 %v2259, %v2256
    %v3157 = vpack.c.b16 %v2260, %v2257
    %v3158 = vpack.c.b16 %v2261, %v2258
    %v3159 = vpack.c.b16 %v2265, %v2262
    %v3160 = vpack.c.b16 %v2266, %v2263
    %v3161 = vpack.c.b16 %v2267, %v2264
    %v3162 = vpack.c.b16 %v2271, %v2268
    %v3163 = vpack.c.b16 %v2272, %v2269
    %v3164 = vpack.c.b16 %v2273, %v2270
    %v3165 = vpack.c.b16 %v2277, %v2274
    %v3166 = vpack.c.b16 %v2278, %v2275
    %v3167 = vpack.c.b16 %v2279, %v2276
    %v3168 = vpack.c.b16 %v2283, %v2280
    %v3169 = vpack.c.b16 %v2284, %v2281
    %v3170 = vpack.c.b16 %v2285, %v2282
    %v3171 = vpack.c.b16 %v2289, %v2286
    %v3172 = vpack.c.b16 %v2290, %v2287
    %v3173 = vpack.c.b16 %v2291, %v2288
    %v3174 = vpack.c.b16 %v2295, %v2292
    %v3175 = vpack.c.b16 %v2296, %v2293
    %v3176 = vpack.c.b16 %v2297, %v2294
    %v3177 = vpack.c.b16 %v2301, %v2298
    %v3178 = vpack.c.b16 %v2302, %v2299
    %v3179 = vpack.c.b16 %v2303, %v2300
    %v3180 = vpack.c.b16 %v2307, %v2304
    %v3181 = vpack.c.b16 %v2308, %v2305
    %v3182 = vpack.c.b16 %v2309, %v2306
    %v3183 = vpack.c.b16 %v2313, %v2310
    %v3184 = vpack.c.b16 %v2314, %v2311
    %v3185 = vpack.c.b16 %v2315, %v2312
    %v3186 = vpack.c.b16 %v2319, %v2316
    %v3187 = vpack.c.b16 %v2320, %v2317
    %v3188 = vpack.c.b16 %v2321, %v2318
    %v3189 = vpack.c.b16 %v2325, %v2322
    %v3190 = vpack.c.b16 %v2326, %v2323
    %v3191 = vpack.c.b16 %v2327, %v2324
    %v3192 = vpack.c.b16 %v2331, %v2328
    %v3193 = vpack.c.b16 %v2332, %v2329
    %v3194 = vpack.c.b16 %v2333, %v2330
    %v3195 = vpack.c.b16 %v2337, %v2334
    %v3196 = vpack.c.b16 %v2338, %v2335
    %v3197 = vpack.c.b16 %v2339, %v2336
    %v3198 = vpack.c.b16 %v2343, %v2340
    %v3199 = vpack.c.b16 %v2344, %v2341
    %v3200 = vpack.c.b16 %v2345, %v2342
    %v3201 = vpack.c.b16 %v2349, %v2346
    %v3202 = vpack.c.b16 %v2350, %v2347
    %v3203 = vpack.c.b16 %v2351, %v2348
    %v3204 = vpack.c.b16 %v2355, %v2352
    %v3205 = vpack.c.b16 %v2356, %v2353
    %v3206 = vpack.c.b16 %v2357, %v2354
    %v3207 = vpack.c.b16 %v2361, %v2358
    %v3208 = vpack.c.b16 %v2362, %v2359
    %v3209 = vpack.c.b16 %v2363, %v2360
    %v3210 = vpack.c.b16 %v2367, %v2364
    %v3211 = vpack.c.b16 %v2368, %v2365
    %v3212 = vpack.c.b16 %v2369, %v2366
    %v3213 = vpack.c.b16 %v2373, %v2370
    %v3214 = vpack.c.b16 %v2374, %v2371
    %v3215 = vpack.c.b16 %v2375, %v2372
    %v3216 = vpack.c.b16 %v2379, %v2376
    %v3217 = vpack.c.b16 %v2380, %v2377
    %v3218 = vpack.c.b16 %v2381, %v2378
    %v3219 = vpack.c.b16 %v2385, %v2382
    %v3220 = vpack.c.b16 %v2386, %v2383
    %v3221 = vpack.c.b16 %v2387, %v2384
    %v3222 = vpack.c.b16 %v2391, %v2388
    %v3223 = vpack.c.b16 %v2392, %v2389
    %v3224 = vpack.c.b16 %v2393, %v2390
    %v3225 = vpack.c.b16 %v2397, %v2394
    %v3226 = vpack.c.b16 %v2398, %v2395
    %v3227 = vpack.c.b16 %v2399, %v2396
    %v3228 = vpack.c.b16 %v2403, %v2400
    %v3229 = vpack.c.b16 %v2404, %v2401
    %v3230 = vpack.c.b16 %v2405, %v2402
    %v3231 = vpack.c.b16 %v2409, %v2406
    %v3232 = vpack.c.b16 %v2410, %v2407
    %v3233 = vpack.c.b16 %v2411, %v2408
    %v3234 = vpack.c.b16 %v2415, %v2412
    %v3235 = vpack.c.b16 %v2416, %v2413
    %v3236 = vpack.c.b16 %v2417, %v2414
    %v3237 = vpack.c.b16 %v2421, %v2418
    %v3238 = vpack.c.b16 %v2422, %v2419
    %v3239 = vpack.c.b16 %v2423, %v2420
    %v3240 = vpack.c.b16 %v2427, %v2424
    %v3241 = vpack.c.b16 %v2428, %v2425
    %v3242 = vpack.c.b16 %v2429, %v2426
    %v3243 = vpack.c.b16 %v2433, %v2430
    %v3244 = vpack.c.b16 %v2434, %v2431
    %v3245 = vpack.c.b16 %v2435, %v2432
    %v3246 = vpack.c.b16 %v2439, %v2436
    %v3247 = vpack.c.b16 %v2440, %v2437
    %v3248 = vpack.c.b16 %v2441, %v2438
    %v3249 = vpack.c.b16 %v2445, %v2442
    %v3250 = vpack.c.b16 %v2446, %v2443
    %v3251 = vpack.c.b16 %v2447, %v2444
    %v3252 = vpack.c.b16 %v2451, %v2448
    %v3253 = vpack.c.b16 %v2452, %v2449
    %v3254 = vpack.c.b16 %v2453, %v2450
    %v3255 = vpack.c.b16 %v2457, %v2454
    %v3256 = vpack.c.b16 %v2458, %v2455
    %v3257 = vpack.c.b16 %v2459, %v2456
    %v3258 = vpack.c.b16 %v2463, %v2460
    %v3259 = vpack.c.b16 %v2464, %v2461
    %v3260 = vpack.c.b16 %v2465, %v2462
    %v3261 = vpack.c.b16 %v2469, %v2466
    %v3262 = vpack.c.b16 %v2470, %v2467
    %v3263 = vpack.c.b16 %v2471, %v2468
    %v3264 = vpack.c.b16 %v2475, %v2472
    %v3265 = vpack.c.b16 %v2476, %v2473
    %v3266 = vpack.c.b16 %v2477, %v2474
    %v3267 = vpack.c.b16 %v2481, %v2478
    %v3268 = vpack.c.b16 %v2482, %v2479
    %v3269 = vpack.c.b16 %v2483, %v2480
    %v3270 = vpack.c.b16 %v2487, %v2484
    %v3271 = vpack.c.b16 %v2488, %v2485
    %v3272 = vpack.c.b16 %v2489, %v2486
    %v3273 = vpack.c.b16 %v2493, %v2490
    %v3274 = vpack.c.b16 %v2494, %v2491
    %v3275 = vpack.c.b16 %v2495, %v2492
    %v3276 = vpack.c.b16 %v2499, %v2496
    %v3277 = vpack.c.b16 %v2500, %v2497
    %v3278 = vpack.c.b16 %v2501, %v2498
    %v3279 = vpack.c.b16 %v2505, %v2502
    %v3280 = vpack.c.b16 %v2506, %v2503
    %v3281 = vpack.c.b16 %v2507, %v2504
    %v3282 = vpack.c.b16 %v2511, %v2508
    %v3283 = vpack.c.b16 %v2512, %v2509
    %v3284 = vpack.c.b16 %v2513, %v2510
    %v3285 = vpack.c.b16 %v2517, %v2514
    %v3286 = vpack.c.b16 %v2518, %v2515
    %v3287 = vpack.c.b16 %v2519, %v2516
    %v3288 = vpack.c.b16 %v2523, %v2520
    %v3289 = vpack.c.b16 %v2524, %v2521
    %v3290 = vpack.c.b16 %v2525, %v2522
    %v3291 = vpack.c.b16 %v2529, %v2526
    %v3292 = vpack.c.b16 %v2530, %v2527
    %v3293 = vpack.c.b16 %v2531, %v2528
    %v3294 = vpack.c.b16 %v2535, %v2532
    %v3295 = vpack.c.b16 %v2536, %v2533
    %v3296 = vpack.c.b16 %v2537, %v2534
    %v3297 = vpack.c.b16 %v2541, %v2538
    %v3298 = vpack.c.b16 %v2542, %v2539
    %v3299 = vpack.c.b16 %v2543, %v2540
    %v3300 = vpack.c.b16 %v2547, %v2544
    %v3301 = vpack.c.b16 %v2548, %v2545
    %v3302 = vpack.c.b16 %v2549, %v2546
    %v3303 = vpack.c.b16 %v2553, %v2550
    %v3304 = vpack.c.b16 %v2554, %v2551
    %v3305 = vpack.c.b16 %v2555, %v2552
    %v3306 = vpack.c.b16 %v2559, %v2556
    %v3307 = vpack.c.b16 %v2560, %v2557
    %v3308 = vpack.c.b16 %v2561, %v2558
    %v3309 = vpack.c.b16 %v2565, %v2562
    %v3310 = vpack.c.b16 %v2566, %v2563
    %v3311 = vpack.c.b16 %v2567, %v2564
    %v3312 = vpack.c.b16 %v2571, %v2568
    %v3313 = vpack.c.b16 %v2572, %v2569
    %v3314 = vpack.c.b16 %v2573, %v2570
    %v3315 = vpack.c.b16 %v2577, %v2574
    %v3316 = vpack.c.b16 %v2578, %v2575
    %v3317 = vpack.c.b16 %v2579, %v2576
    %v3318 = vpack.c.b16 %v2583, %v2580
    %v3319 = vpack.c.b16 %v2584, %v2581
    %v3320 = vpack.c.b16 %v2585, %v2582
    %v3321 = vpack.c.b16 %v2589, %v2586
    %v3322 = vpack.c.b16 %v2590, %v2587
    %v3323 = vpack.c.b16 %v2591, %v2588
    %v3324 = vpack.c.b16 %v2595, %v2592
    %v3325 = vpack.c.b16 %v2596, %v2593
    %v3326 = vpack.c.b16 %v2597, %v2594
    %v3327 = vpack.c.b16 %v2601, %v2598
    %v3328 = vpack.c.b16 %v2602, %v2599
    %v3329 = vpack.c.b16 %v2603, %v2600
    %v3330 = vpack.c.b16 %v2607, %v2604
    %v3331 = vpack.c.b16 %v2608, %v2605
    %v3332 = vpack.c.b16 %v2609, %v2606
    %v3333 = vpack.c.b16 %v2613, %v2610
    %v3334 = vpack.c.b16 %v2614, %v2611
    %v3335 = vpack.c.b16 %v2615, %v2612
    %v3336 = vpack.c.b16 %v2619, %v2616
    %v3337 = vpack.c.b16 %v2620, %v2617
    %v3338 = vpack.c.b16 %v2621, %v2618
    %v3339 = vpack.c.b16 %v2625, %v2622
    %v3340 = vpack.c.b16 %v2626, %v2623
    %v3341 = vpack.c.b16 %v2627, %v2624
    %v3342 = vpack.c.b16 %v2631, %v2628
    %v3343 = vpack.c.b16 %v2632, %v2629
    %v3344 = vpack.c.b16 %v2633, %v2630
    %v3345 = vpack.c.b16 %v2637, %v2634
    %v3346 = vpack.c.b16 %v2638, %v2635
    %v3347 = vpack.c.b16 %v2639, %v2636
    %v3348 = vpack.c.b16 %v2643, %v2640
    %v3349 = vpack.c.b16 %v2644, %v2641
    %v3350 = vpack.c.b16 %v2645, %v2642
    %v3351 = vpack.c.b16 %v2649, %v2646
    %v3352 = vpack.c.b16 %v2650, %v2647
    %v3353 = vpack.c.b16 %v2651, %v2648
    %v3354 = vpack.c.b16 %v2655, %v2652
    %v3355 = vpack.c.b16 %v2656, %v2653
    %v3356 = vpack.c.b16 %v2657, %v2654
    %v3357 = vpack.c.b16 %v2661, %v2658
    %v3358 = vpack.c.b16 %v2662, %v2659
    %v3359 = vpack.c.b16 %v2663, %v2660
    %v3360 = vpack.c.b16 %v2667, %v2664
    %v3361 = vpack.c.b16 %v2668, %v2665
    %v3362 = vpack.c.b16 %v2669, %v2666
    %v3363 = vpack.c.b16 %v2673, %v2670
    %v3364 = vpack.c.b16 %v2674, %v2671
    %v3365 = vpack.c.b16 %v2675, %v2672
    %v3366 = vpack.c.b16 %v2679, %v2676
    %v3367 = vpack.c.b16 %v2680, %v2677
    %v3368 = vpack.c.b16 %v2681, %v2678
    %v3369 = vpack.c.b16 %v2685, %v2682
    %v3370 = vpack.c.b16 %v2686, %v2683
    %v3371 = vpack.c.b16 %v2687, %v2684
    %v3372 = vpack.c.b16 %v2691, %v2688
    %v3373 = vpack.c.b16 %v2692, %v2689
    %v3374 = vpack.c.b16 %v2693, %v2690
    %v3375 = vpack.c.b16 %v2697, %v2694
    %v3376 = vpack.c.b16 %v2698, %v2695
    %v3377 = vpack.c.b16 %v2699, %v2696
    %v3378 = vpack.c.b16 %v2703, %v2700
    %v3379 = vpack.c.b16 %v2704, %v2701
    %v3380 = vpack.c.b16 %v2705, %v2702
    %v3381 = vpack.c.b16 %v2709, %v2706
    %v3382 = vpack.c.b16 %v2710, %v2707
    %v3383 = vpack.c.b16 %v2711, %v2708
    %v3384 = vpack.c.b16 %v2715, %v2712
    %v3385 = vpack.c.b16 %v2716, %v2713
    %v3386 = vpack.c.b16 %v2717, %v2714
    %v3387 = vpack.c.b16 %v2721, %v2718
    %v3388 = vpack.c.b16 %v2722, %v2719
    %v3389 = vpack.c.b16 %v2723, %v2720
    %v3390 = vpack.c.b16 %v2727, %v2724
    %v3391 = vpack.c.b16 %v2728, %v2725
    %v3392 = vpack.c.b16 %v2729, %v2726
    %v3393 = vpack.c.b16 %v2733, %v2730
    %v3394 = vpack.c.b16 %v2734, %v2731
    %v3395 = vpack.c.b16 %v2735, %v2732
    %v3396 = vpack.c.b16 %v2739, %v2736
    %v3397 = vpack.c.b16 %v2740, %v2737
    %v3398 = vpack.c.b16 %v2741, %v2738
    %v3399 = vpack.c.b16 %v2745, %v2742
    %v3400 = vpack.c.b16 %v2746, %v2743
    %v3401 = vpack.c.b16 %v2747, %v2744
    %v3402 = vpack.c.b16 %v2751, %v2748
    %v3403 = vpack.c.b16 %v2752, %v2749
    %v3404 = vpack.c.b16 %v2753, %v2750
    %v3405 = vpack.c.b16 %v2757, %v2754
    %v3406 = vpack.c.b16 %v2758, %v2755
    %v3407 = vpack.c.b16 %v2759, %v2756
    %v3408 = vpack.c.b16 %v2763, %v2760
    %v3409 = vpack.c.b16 %v2764, %v2761
    %v3410 = vpack.c.b16 %v2765, %v2762
    %v3411 = vpack.c.b16 %v2769, %v2766
    %v3412 = vpack.c.b16 %v2770, %v2767
    %v3413 = vpack.c.b16 %v2771, %v2768
    %v3414 = vpack.c.b16 %v2775, %v2772
    %v3415 = vpack.c.b16 %v2776, %v2773
    %v3416 = vpack.c.b16 %v2777, %v2774
    %v3417 = vpack.c.b16 %v2781, %v2778
    %v3418 = vpack.c.b16 %v2782, %v2779
    %v3419 = vpack.c.b16 %v2783, %v2780
    %v3420 = vpack.c.b16 %v2787, %v2784
    %v3421 = vpack.c.b16 %v2788, %v2785
    %v3422 = vpack.c.b16 %v2789, %v2786
    %v3423 = vpack.c.b16 %v2793, %v2790
    %v3424 = vpack.c.b16 %v2794, %v2791
    %v3425 = vpack.c.b16 %v2795, %v2792
    %v3426 = vpack.c.b16 %v2799, %v2796
    %v3427 = vpack.c.b16 %v2800, %v2797
    %v3428 = vpack.c.b16 %v2801, %v2798
    %v3429 = vpack.c.b16 %v2805, %v2802
    %v3430 = vpack.c.b16 %v2806, %v2803
    %v3431 = vpack.c.b16 %v2807, %v2804
    %v3432 = vpack.c.b16 %v2811, %v2808
    %v3433 = vpack.c.b16 %v2812, %v2809
    %v3434 = vpack.c.b16 %v2813, %v2810
    %v3435 = vpack.c.b16 %v2817, %v2814
    %v3436 = vpack.c.b16 %v2818, %v2815
    %v3437 = vpack.c.b16 %v2819, %v2816
    %v3438 = vpack.c.b16 %v2823, %v2820
    %v3439 = vpack.c.b16 %v2824, %v2821
    %v3440 = vpack.c.b16 %v2825, %v2822
    %v3441 = vpack.c.b16 %v2829, %v2826
    %v3442 = vpack.c.b16 %v2830, %v2827
    %v3443 = vpack.c.b16 %v2831, %v2828
    %v3444 = vpack.c.b16 %v2835, %v2832
    %v3445 = vpack.c.b16 %v2836, %v2833
    %v3446 = vpack.c.b16 %v2837, %v2834
    %v3447 = vpack.c.b16 %v2841, %v2838
    %v3448 = vpack.c.b16 %v2842, %v2839
    %v3449 = vpack.c.b16 %v2843, %v2840
    %v3450 = vpack.c.b16 %v2847, %v2844
    %v3451 = vpack.c.b16 %v2848, %v2845
    %v3452 = vpack.c.b16 %v2849, %v2846
    %v3453 = vpack.c.b16 %v2853, %v2850
    %v3454 = vpack.c.b16 %v2854, %v2851
    %v3455 = vpack.c.b16 %v2855, %v2852
    %v3456 = vpack.c.b16 %v2859, %v2856
    %v3457 = vpack.c.b16 %v2860, %v2857
    %v3458 = vpack.c.b16 %v2861, %v2858
    %v3459 = vpack.c.b16 %v2865, %v2862
    %v3460 = vpack.c.b16 %v2866, %v2863
    %v3461 = vpack.c.b16 %v2867, %v2864
    %v3462 = vpack.c.b16 %v2871, %v2868
    %v3463 = vpack.c.b16 %v2872, %v2869
    %v3464 = vpack.c.b16 %v2873, %v2870
    %v3465 = vpack.c.b16 %v2877, %v2874
    %v3466 = vpack.c.b16 %v2878, %v2875
    %v3467 = vpack.c.b16 %v2879, %v2876
    %v3468 = vpack.c.b16 %v2883, %v2880
    %v3469 = vpack.c.b16 %v2884, %v2881
    %v3470 = vpack.c.b16 %v2885, %v2882
    %v3471 = vpack.c.b16 %v2889, %v2886
    %v3472 = vpack.c.b16 %v2890, %v2887
    %v3473 = vpack.c.b16 %v2891, %v2888
    %v3474 = vpack.c.b16 %v2895, %v2892
    %v3475 = vpack.c.b16 %v2896, %v2893
    %v3476 = vpack.c.b16 %v2897, %v2894
    %v3477 = vpack.c.b16 %v2901, %v2898
    %v3478 = vpack.c.b16 %v2902, %v2899
    %v3479 = vpack.c.b16 %v2903, %v2900
    %4056 = vmatprep.subr.bf16.mxu0 %v2905
    %4057 = vmatpush1.bf16.msra.mxu0 %v2904
    %4058 = vmatprep.subr.bf16.mxu0 %v2908
    %4059 = vmatpush1.bf16.msra.mxu0 %v2907
    %4060 = vmatprep.subr.bf16.mxu0 %v2911
    %4061 = vmatpush1.bf16.msra.mxu0 %v2910
    %4062 = vmatprep.subr.bf16.mxu0 %v2914
    %4063 = vmatpush1.bf16.msra.mxu0 %v2913
    %4064 = vmatprep.subr.bf16.mxu0 %v2917
    %4065 = vmatpush1.bf16.msra.mxu0 %v2916
    %4066 = vmatprep.subr.bf16.mxu0 %v2920
    %4067 = vmatpush1.bf16.msra.mxu0 %v2919
    %4068 = vmatprep.subr.bf16.mxu0 %v2923
    %4069 = vmatpush1.bf16.msra.mxu0 %v2922
    %4070 = vmatprep.subr.bf16.mxu0 %v2926
    %4071 = vmatpush1.bf16.msra.mxu0 %v2925
    %4072 = vmatprep.subr.bf16.mxu0 %v2929
    %4073 = vmatpush1.bf16.msra.mxu0 %v2928
    %4074 = vmatprep.subr.bf16.mxu0 %v2932
    %4075 = vmatpush1.bf16.msra.mxu0 %v2931
    %4076 = vmatprep.subr.bf16.mxu0 %v2935
    %4077 = vmatpush1.bf16.msra.mxu0 %v2934
    %4078 = vmatprep.subr.bf16.mxu0 %v2938
    %4079 = vmatpush1.bf16.msra.mxu0 %v2937
    %4080 = vmatprep.subr.bf16.mxu0 %v2941
    %4081 = vmatpush1.bf16.msra.mxu0 %v2940
    %4082 = vmatprep.subr.bf16.mxu0 %v2944
    %4083 = vmatpush1.bf16.msra.mxu0 %v2943
    %4084 = vmatprep.subr.bf16.mxu0 %v2947
    %4085 = vmatpush1.bf16.msra.mxu0 %v2946
    %4086 = vmatprep.subr.bf16.mxu0 %v2950
    %4087 = vmatpush1.bf16.msra.mxu0 %v2949
    %4088 = vmatprep.mubr.bf16.mxu0 %v937
    %4089 = vmatmul.mubr.bf16.gmra.mrb[0].mxu0 %v936
    %v4090 = vpop.f32.mrb[0].mxu0
    %v4091 = vadd.f32 %v888, %v4090
    %v4092 = vpop.f32.mrb[0].mxu0
    %v4093 = vadd.f32 %v892, %v4092
    %v4094 = vpop.f32.mrb[0].mxu0
    %v4095 = vpop.f32.mrb[0].mxu0
    %4096 = vdwg.mxu0
    %4097 = vmatprep.subr.bf16.mxu0 %v2953
    %4098 = vmatpush1.bf16.msra.mxu0 %v2952
    %4099 = vmatprep.subr.bf16.mxu0 %v2956
    %4100 = vmatpush1.bf16.msra.mxu0 %v2955
    %4101 = vmatprep.subr.bf16.mxu0 %v2959
    %4102 = vmatpush1.bf16.msra.mxu0 %v2958
    %4103 = vmatprep.subr.bf16.mxu0 %v2962
    %4104 = vmatpush1.bf16.msra.mxu0 %v2961
    %4105 = vmatprep.subr.bf16.mxu0 %v2965
    %4106 = vmatpush1.bf16.msra.mxu0 %v2964
    %4107 = vmatprep.subr.bf16.mxu0 %v2968
    %4108 = vmatpush1.bf16.msra.mxu0 %v2967
    %4109 = vmatprep.subr.bf16.mxu0 %v2971
    %4110 = vmatpush1.bf16.msra.mxu0 %v2970
    %4111 = vmatprep.subr.bf16.mxu0 %v2974
    %4112 = vmatpush1.bf16.msra.mxu0 %v2973
    %4113 = vmatprep.subr.bf16.mxu0 %v2977
    %4114 = vmatpush1.bf16.msra.mxu0 %v2976
    %4115 = vmatprep.subr.bf16.mxu0 %v2980
    %4116 = vmatpush1.bf16.msra.mxu0 %v2979
    %4117 = vmatprep.subr.bf16.mxu0 %v2983
    %4118 = vmatpush1.bf16.msra.mxu0 %v2982
    %4119 = vmatprep.subr.bf16.mxu0 %v2986
    %4120 = vmatpush1.bf16.msra.mxu0 %v2985
    %4121 = vmatprep.subr.bf16.mxu0 %v2989
    %4122 = vmatpush1.bf16.msra.mxu0 %v2988
    %4123 = vmatprep.subr.bf16.mxu0 %v2992
    %4124 = vmatpush1.bf16.msra.mxu0 %v2991
    %4125 = vmatprep.subr.bf16.mxu0 %v2995
    %4126 = vmatpush1.bf16.msra.mxu0 %v2994
    %4127 = vmatprep.subr.bf16.mxu0 %v2998
    %4128 = vmatpush1.bf16.msra.mxu0 %v2997
    %4129 = vmatprep.mubr.bf16.mxu0 %v939
    %4130 = vmatmul.mubr.bf16.gmra.mrb[0].mxu0 %v938
    %v4131 = vpop.f32.mrb[0].mxu0
    %v4132 = vadd.f32 %v4091, %v4131
    %v4133 = vpop.f32.mrb[0].mxu0
    %v4134 = vadd.f32 %v4093, %v4133
    %v4135 = vpop.f32.mrb[0].mxu0
    %v4136 = vpop.f32.mrb[0].mxu0
    %4137 = vdwg.mxu0
    %4138 = vmatprep.subr.bf16.mxu0 %v3001
    %4139 = vmatpush1.bf16.msra.mxu0 %v3000
    %4140 = vmatprep.subr.bf16.mxu0 %v3004
    %4141 = vmatpush1.bf16.msra.mxu0 %v3003
    %4142 = vmatprep.subr.bf16.mxu0 %v3007
    %4143 = vmatpush1.bf16.msra.mxu0 %v3006
    %4144 = vmatprep.subr.bf16.mxu0 %v3010
    %4145 = vmatpush1.bf16.msra.mxu0 %v3009
    %4146 = vmatprep.subr.bf16.mxu0 %v3013
    %4147 = vmatpush1.bf16.msra.mxu0 %v3012
    %4148 = vmatprep.subr.bf16.mxu0 %v3016
    %4149 = vmatpush1.bf16.msra.mxu0 %v3015
    %4150 = vmatprep.subr.bf16.mxu0 %v3019
    %4151 = vmatpush1.bf16.msra.mxu0 %v3018
    %4152 = vmatprep.subr.bf16.mxu0 %v3022
    %4153 = vmatpush1.bf16.msra.mxu0 %v3021
    %4154 = vmatprep.subr.bf16.mxu0 %v3025
    %4155 = vmatpush1.bf16.msra.mxu0 %v3024
    %4156 = vmatprep.subr.bf16.mxu0 %v3028
    %4157 = vmatpush1.bf16.msra.mxu0 %v3027
    %4158 = vmatprep.subr.bf16.mxu0 %v3031
    %4159 = vmatpush1.bf16.msra.mxu0 %v3030
    %4160 = vmatprep.subr.bf16.mxu0 %v3034
    %4161 = vmatpush1.bf16.msra.mxu0 %v3033
    %4162 = vmatprep.subr.bf16.mxu0 %v3037
    %4163 = vmatpush1.bf16.msra.mxu0 %v3036
    %4164 = vmatprep.subr.bf16.mxu0 %v3040
    %4165 = vmatpush1.bf16.msra.mxu0 %v3039
    %4166 = vmatprep.subr.bf16.mxu0 %v3043
    %4167 = vmatpush1.bf16.msra.mxu0 %v3042
    %4168 = vmatprep.subr.bf16.mxu0 %v3046
    %4169 = vmatpush1.bf16.msra.mxu0 %v3045
    %4170 = vmatprep.mubr.bf16.mxu0 %v941
    %4171 = vmatmul.mubr.bf16.gmra.mrb[0].mxu0 %v940
    %v4172 = vpop.f32.mrb[0].mxu0
    %v4173 = vadd.f32 %v4132, %v4172
    %v4174 = vpop.f32.mrb[0].mxu0
    %v4175 = vadd.f32 %v4134, %v4174
    %v4176 = vpop.f32.mrb[0].mxu0
    %v4177 = vpop.f32.mrb[0].mxu0
    %4178 = vdwg.mxu0
    %4179 = vmatprep.subr.bf16.mxu0 %v3049
    %4180 = vmatpush1.bf16.msra.mxu0 %v3048
    %4181 = vmatprep.subr.bf16.mxu0 %v3052
    %4182 = vmatpush1.bf16.msra.mxu0 %v3051
    %4183 = vmatprep.subr.bf16.mxu0 %v3055
    %4184 = vmatpush1.bf16.msra.mxu0 %v3054
    %4185 = vmatprep.subr.bf16.mxu0 %v3058
    %4186 = vmatpush1.bf16.msra.mxu0 %v3057
    %4187 = vmatprep.subr.bf16.mxu0 %v3061
    %4188 = vmatpush1.bf16.msra.mxu0 %v3060
    %4189 = vmatprep.subr.bf16.mxu0 %v3064
    %4190 = vmatpush1.bf16.msra.mxu0 %v3063
    %4191 = vmatprep.subr.bf16.mxu0 %v3067
    %4192 = vmatpush1.bf16.msra.mxu0 %v3066
    %4193 = vmatprep.subr.bf16.mxu0 %v3070
    %4194 = vmatpush1.bf16.msra.mxu0 %v3069
    %4195 = vmatprep.subr.bf16.mxu0 %v3073
    %4196 = vmatpush1.bf16.msra.mxu0 %v3072
    %4197 = vmatprep.subr.bf16.mxu0 %v3076
    %4198 = vmatpush1.bf16.msra.mxu0 %v3075
    %4199 = vmatprep.subr.bf16.mxu0 %v3079
    %4200 = vmatpush1.bf16.msra.mxu0 %v3078
    %4201 = vmatprep.subr.bf16.mxu0 %v3082
    %4202 = vmatpush1.bf16.msra.mxu0 %v3081
    %4203 = vmatprep.subr.bf16.mxu0 %v3085
    %4204 = vmatpush1.bf16.msra.mxu0 %v3084
    %4205 = vmatprep.subr.bf16.mxu0 %v3088
    %4206 = vmatpush1.bf16.msra.mxu0 %v3087
    %4207 = vmatprep.subr.bf16.mxu0 %v3091
    %4208 = vmatpush1.bf16.msra.mxu0 %v3090
    %4209 = vmatprep.subr.bf16.mxu0 %v3094
    %4210 = vmatpush1.bf16.msra.mxu0 %v3093
    %4211 = vmatprep.mubr.bf16.mxu0 %v943
    %4212 = vmatmul.mubr.bf16.gmra.mrb[0].mxu0 %v942
    %v4213 = vpop.f32.mrb[0].mxu0
    %v4214 = vadd.f32 %v4173, %v4213
    %v4215 = vpop.f32.mrb[0].mxu0
    %v4216 = vadd.f32 %v4175, %v4215
    %v4217 = vpop.f32.mrb[0].mxu0
    %v4218 = vpop.f32.mrb[0].mxu0
    %4219 = vdwg.mxu0
    %4220 = vmatprep.subr.bf16.mxu0 %v3097
    %4221 = vmatpush1.bf16.msra.mxu0 %v3096
    %4222 = vmatprep.subr.bf16.mxu0 %v3100
    %4223 = vmatpush1.bf16.msra.mxu0 %v3099
    %4224 = vmatprep.subr.bf16.mxu0 %v3103
    %4225 = vmatpush1.bf16.msra.mxu0 %v3102
    %4226 = vmatprep.subr.bf16.mxu0 %v3106
    %4227 = vmatpush1.bf16.msra.mxu0 %v3105
    %4228 = vmatprep.subr.bf16.mxu0 %v3109
    %4229 = vmatpush1.bf16.msra.mxu0 %v3108
    %4230 = vmatprep.subr.bf16.mxu0 %v3112
    %4231 = vmatpush1.bf16.msra.mxu0 %v3111
    %4232 = vmatprep.subr.bf16.mxu0 %v3115
    %4233 = vmatpush1.bf16.msra.mxu0 %v3114
    %4234 = vmatprep.subr.bf16.mxu0 %v3118
    %4235 = vmatpush1.bf16.msra.mxu0 %v3117
    %4236 = vmatprep.subr.bf16.mxu0 %v3121
    %4237 = vmatpush1.bf16.msra.mxu0 %v3120
    %4238 = vmatprep.subr.bf16.mxu0 %v3124
    %4239 = vmatpush1.bf16.msra.mxu0 %v3123
    %4240 = vmatprep.subr.bf16.mxu0 %v3127
    %4241 = vmatpush1.bf16.msra.mxu0 %v3126
    %4242 = vmatprep.subr.bf16.mxu0 %v3130
    %4243 = vmatpush1.bf16.msra.mxu0 %v3129
    %4244 = vmatprep.subr.bf16.mxu0 %v3133
    %4245 = vmatpush1.bf16.msra.mxu0 %v3132
    %4246 = vmatprep.subr.bf16.mxu0 %v3136
    %4247 = vmatpush1.bf16.msra.mxu0 %v3135
    %4248 = vmatprep.subr.bf16.mxu0 %v3139
    %4249 = vmatpush1.bf16.msra.mxu0 %v3138
    %4250 = vmatprep.subr.bf16.mxu0 %v3142
    %4251 = vmatpush1.bf16.msra.mxu0 %v3141
    %4252 = vmatprep.mubr.bf16.mxu0 %v945
    %4253 = vmatmul.mubr.bf16.gmra.mrb[0].mxu0 %v944
    %v4254 = vpop.f32.mrb[0].mxu0
    %v4255 = vadd.f32 %v4214, %v4254
    %v4256 = vpop.f32.mrb[0].mxu0
    %v4257 = vadd.f32 %v4216, %v4256
    %v4258 = vpop.f32.mrb[0].mxu0
    %v4259 = vpop.f32.mrb[0].mxu0
    %4260 = vdwg.mxu0
    %4261 = vmatprep.subr.bf16.mxu0 %v3145
    %4262 = vmatpush1.bf16.msra.mxu0 %v3144
    %4263 = vmatprep.subr.bf16.mxu0 %v3148
    %4264 = vmatpush1.bf16.msra.mxu0 %v3147
    %4265 = vmatprep.subr.bf16.mxu0 %v3151
    %4266 = vmatpush1.bf16.msra.mxu0 %v3150
    %4267 = vmatprep.subr.bf16.mxu0 %v3154
    %4268 = vmatpush1.bf16.msra.mxu0 %v3153
    %4269 = vmatprep.subr.bf16.mxu0 %v3157
    %4270 = vmatpush1.bf16.msra.mxu0 %v3156
    %4271 = vmatprep.subr.bf16.mxu0 %v3160
    %4272 = vmatpush1.bf16.msra.mxu0 %v3159
    %4273 = vmatprep.subr.bf16.mxu0 %v3163
    %4274 = vmatpush1.bf16.msra.mxu0 %v3162
    %4275 = vmatprep.subr.bf16.mxu0 %v3166
    %4276 = vmatpush1.bf16.msra.mxu0 %v3165
    %4277 = vmatprep.subr.bf16.mxu0 %v3169
    %4278 = vmatpush1.bf16.msra.mxu0 %v3168
    %4279 = vmatprep.subr.bf16.mxu0 %v3172
    %4280 = vmatpush1.bf16.msra.mxu0 %v3171
    %4281 = vmatprep.subr.bf16.mxu0 %v3175
    %4282 = vmatpush1.bf16.msra.mxu0 %v3174
    %4283 = vmatprep.subr.bf16.mxu0 %v3178
    %4284 = vmatpush1.bf16.msra.mxu0 %v3177
    %4285 = vmatprep.subr.bf16.mxu0 %v3181
    %4286 = vmatpush1.bf16.msra.mxu0 %v3180
    %4287 = vmatprep.subr.bf16.mxu0 %v3184
    %4288 = vmatpush1.bf16.msra.mxu0 %v3183
    %4289 = vmatprep.subr.bf16.mxu0 %v3187
    %4290 = vmatpush1.bf16.msra.mxu0 %v3186
    %4291 = vmatprep.subr.bf16.mxu0 %v3190
    %4292 = vmatpush1.bf16.msra.mxu0 %v3189
    %4293 = vmatprep.mubr.bf16.mxu0 %v947
    %4294 = vmatmul.mubr.bf16.gmra.mrb[0].mxu0 %v946
    %v4295 = vpop.f32.mrb[0].mxu0
    %v4296 = vadd.f32 %v4255, %v4295
    %v4297 = vpop.f32.mrb[0].mxu0
    %v4298 = vadd.f32 %v4257, %v4297
    %v4299 = vpop.f32.mrb[0].mxu0
    %v4300 = vpop.f32.mrb[0].mxu0
    %4301 = vdwg.mxu0
    %4302 = vmatprep.subr.bf16.mxu0 %v3193
    %4303 = vmatpush1.bf16.msra.mxu0 %v3192
    %4304 = vmatprep.subr.bf16.mxu0 %v3196
    %4305 = vmatpush1.bf16.msra.mxu0 %v3195
    %4306 = vmatprep.subr.bf16.mxu0 %v3199
    %4307 = vmatpush1.bf16.msra.mxu0 %v3198
    %4308 = vmatprep.subr.bf16.mxu0 %v3202
    %4309 = vmatpush1.bf16.msra.mxu0 %v3201
    %4310 = vmatprep.subr.bf16.mxu0 %v3205
    %4311 = vmatpush1.bf16.msra.mxu0 %v3204
    %4312 = vmatprep.subr.bf16.mxu0 %v3208
    %4313 = vmatpush1.bf16.msra.mxu0 %v3207
    %4314 = vmatprep.subr.bf16.mxu0 %v3211
    %4315 = vmatpush1.bf16.msra.mxu0 %v3210
    %4316 = vmatprep.subr.bf16.mxu0 %v3214
    %4317 = vmatpush1.bf16.msra.mxu0 %v3213
    %4318 = vmatprep.subr.bf16.mxu0 %v3217
    %4319 = vmatpush1.bf16.msra.mxu0 %v3216
    %4320 = vmatprep.subr.bf16.mxu0 %v3220
    %4321 = vmatpush1.bf16.msra.mxu0 %v3219
    %4322 = vmatprep.subr.bf16.mxu0 %v3223
    %4323 = vmatpush1.bf16.msra.mxu0 %v3222
    %4324 = vmatprep.subr.bf16.mxu0 %v3226
    %4325 = vmatpush1.bf16.msra.mxu0 %v3225
    %4326 = vmatprep.subr.bf16.mxu0 %v3229
    %4327 = vmatpush1.bf16.msra.mxu0 %v3228
    %4328 = vmatprep.subr.bf16.mxu0 %v3232
    %4329 = vmatpush1.bf16.msra.mxu0 %v3231
    %4330 = vmatprep.subr.bf16.mxu0 %v3235
    %4331 = vmatpush1.bf16.msra.mxu0 %v3234
    %4332 = vmatprep.subr.bf16.mxu0 %v3238
    %4333 = vmatpush1.bf16.msra.mxu0 %v3237
    %4334 = vmatprep.mubr.bf16.mxu0 %v949
    %4335 = vmatmul.mubr.bf16.gmra.mrb[0].mxu0 %v948
    %v4336 = vpop.f32.mrb[0].mxu0
    %v4337 = vadd.f32 %v4296, %v4336
    %v4338 = vpop.f32.mrb[0].mxu0
    %v4339 = vadd.f32 %v4298, %v4338
    %v4340 = vpop.f32.mrb[0].mxu0
    %v4341 = vpop.f32.mrb[0].mxu0
    %4342 = vdwg.mxu0
    %4343 = vmatprep.subr.bf16.mxu0 %v3241
    %4344 = vmatpush1.bf16.msra.mxu0 %v3240
    %4345 = vmatprep.subr.bf16.mxu0 %v3244
    %4346 = vmatpush1.bf16.msra.mxu0 %v3243
    %4347 = vmatprep.subr.bf16.mxu0 %v3247
    %4348 = vmatpush1.bf16.msra.mxu0 %v3246
    %4349 = vmatprep.subr.bf16.mxu0 %v3250
    %4350 = vmatpush1.bf16.msra.mxu0 %v3249
    %4351 = vmatprep.subr.bf16.mxu0 %v3253
    %4352 = vmatpush1.bf16.msra.mxu0 %v3252
    %4353 = vmatprep.subr.bf16.mxu0 %v3256
    %4354 = vmatpush1.bf16.msra.mxu0 %v3255
    %4355 = vmatprep.subr.bf16.mxu0 %v3259
    %4356 = vmatpush1.bf16.msra.mxu0 %v3258
    %4357 = vmatprep.subr.bf16.mxu0 %v3262
    %4358 = vmatpush1.bf16.msra.mxu0 %v3261
    %4359 = vmatprep.subr.bf16.mxu0 %v3265
    %4360 = vmatpush1.bf16.msra.mxu0 %v3264
    %4361 = vmatprep.subr.bf16.mxu0 %v3268
    %4362 = vmatpush1.bf16.msra.mxu0 %v3267
    %4363 = vmatprep.subr.bf16.mxu0 %v3271
    %4364 = vmatpush1.bf16.msra.mxu0 %v3270
    %4365 = vmatprep.subr.bf16.mxu0 %v3274
    %4366 = vmatpush1.bf16.msra.mxu0 %v3273
    %4367 = vmatprep.subr.bf16.mxu0 %v3277
    %4368 = vmatpush1.bf16.msra.mxu0 %v3276
    %4369 = vmatprep.subr.bf16.mxu0 %v3280
    %4370 = vmatpush1.bf16.msra.mxu0 %v3279
    %4371 = vmatprep.subr.bf16.mxu0 %v3283
    %4372 = vmatpush1.bf16.msra.mxu0 %v3282
    %4373 = vmatprep.subr.bf16.mxu0 %v3286
    %4374 = vmatpush1.bf16.msra.mxu0 %v3285
    %4375 = vmatprep.mubr.bf16.mxu0 %v951
    %4376 = vmatmul.mubr.bf16.gmra.mrb[0].mxu0 %v950
    %v4377 = vpop.f32.mrb[0].mxu0
    %v4378 = vadd.f32 %v4337, %v4377
    %v4379 = vpop.f32.mrb[0].mxu0
    %v4380 = vadd.f32 %v4339, %v4379
    %v4381 = vpop.f32.mrb[0].mxu0
    %v4382 = vpop.f32.mrb[0].mxu0
    %4383 = vdwg.mxu0
    %4384 = vmatprep.subr.bf16.mxu0 %v3289
    %4385 = vmatpush1.bf16.msra.mxu0 %v3288
    %4386 = vmatprep.subr.bf16.mxu0 %v3292
    %4387 = vmatpush1.bf16.msra.mxu0 %v3291
    %4388 = vmatprep.subr.bf16.mxu0 %v3295
    %4389 = vmatpush1.bf16.msra.mxu0 %v3294
    %4390 = vmatprep.subr.bf16.mxu0 %v3298
    %4391 = vmatpush1.bf16.msra.mxu0 %v3297
    %4392 = vmatprep.subr.bf16.mxu0 %v3301
    %4393 = vmatpush1.bf16.msra.mxu0 %v3300
    %4394 = vmatprep.subr.bf16.mxu0 %v3304
    %4395 = vmatpush1.bf16.msra.mxu0 %v3303
    %4396 = vmatprep.subr.bf16.mxu0 %v3307
    %4397 = vmatpush1.bf16.msra.mxu0 %v3306
    %4398 = vmatprep.subr.bf16.mxu0 %v3310
    %4399 = vmatpush1.bf16.msra.mxu0 %v3309
    %4400 = vmatprep.subr.bf16.mxu0 %v3313
    %4401 = vmatpush1.bf16.msra.mxu0 %v3312
    %4402 = vmatprep.subr.bf16.mxu0 %v3316
    %4403 = vmatpush1.bf16.msra.mxu0 %v3315
    %4404 = vmatprep.subr.bf16.mxu0 %v3319
    %4405 = vmatpush1.bf16.msra.mxu0 %v3318
    %4406 = vmatprep.subr.bf16.mxu0 %v3322
    %4407 = vmatpush1.bf16.msra.mxu0 %v3321
    %4408 = vmatprep.subr.bf16.mxu0 %v3325
    %4409 = vmatpush1.bf16.msra.mxu0 %v3324
    %4410 = vmatprep.subr.bf16.mxu0 %v3328
    %4411 = vmatpush1.bf16.msra.mxu0 %v3327
    %4412 = vmatprep.subr.bf16.mxu0 %v3331
    %4413 = vmatpush1.bf16.msra.mxu0 %v3330
    %4414 = vmatprep.subr.bf16.mxu0 %v3334
    %4415 = vmatpush1.bf16.msra.mxu0 %v3333
    %4416 = vmatprep.mubr.bf16.mxu0 %v953
    %4417 = vmatmul.mubr.bf16.gmra.mrb[0].mxu0 %v952
    %v4418 = vpop.f32.mrb[0].mxu0
    %v4419 = vadd.f32 %v4378, %v4418
    %v4420 = vpop.f32.mrb[0].mxu0
    %v4421 = vadd.f32 %v4380, %v4420
    %v4422 = vpop.f32.mrb[0].mxu0
    %v4423 = vpop.f32.mrb[0].mxu0
    %4424 = vdwg.mxu0
    %4425 = vmatprep.subr.bf16.mxu0 %v3337
    %4426 = vmatpush1.bf16.msra.mxu0 %v3336
    %4427 = vmatprep.subr.bf16.mxu0 %v3340
    %4428 = vmatpush1.bf16.msra.mxu0 %v3339
    %4429 = vmatprep.subr.bf16.mxu0 %v3343
    %4430 = vmatpush1.bf16.msra.mxu0 %v3342
    %4431 = vmatprep.subr.bf16.mxu0 %v3346
    %4432 = vmatpush1.bf16.msra.mxu0 %v3345
    %4433 = vmatprep.subr.bf16.mxu0 %v3349
    %4434 = vmatpush1.bf16.msra.mxu0 %v3348
    %4435 = vmatprep.subr.bf16.mxu0 %v3352
    %4436 = vmatpush1.bf16.msra.mxu0 %v3351
    %4437 = vmatprep.subr.bf16.mxu0 %v3355
    %4438 = vmatpush1.bf16.msra.mxu0 %v3354
    %4439 = vmatprep.subr.bf16.mxu0 %v3358
    %4440 = vmatpush1.bf16.msra.mxu0 %v3357
    %4441 = vmatprep.subr.bf16.mxu0 %v3361
    %4442 = vmatpush1.bf16.msra.mxu0 %v3360
    %4443 = vmatprep.subr.bf16.mxu0 %v3364
    %4444 = vmatpush1.bf16.msra.mxu0 %v3363
    %4445 = vmatprep.subr.bf16.mxu0 %v3367
    %4446 = vmatpush1.bf16.msra.mxu0 %v3366
    %4447 = vmatprep.subr.bf16.mxu0 %v3370
    %4448 = vmatpush1.bf16.msra.mxu0 %v3369
    %4449 = vmatprep.subr.bf16.mxu0 %v3373
    %4450 = vmatpush1.bf16.msra.mxu0 %v3372
    %4451 = vmatprep.subr.bf16.mxu0 %v3376
    %4452 = vmatpush1.bf16.msra.mxu0 %v3375
    %4453 = vmatprep.subr.bf16.mxu0 %v3379
    %4454 = vmatpush1.bf16.msra.mxu0 %v3378
    %4455 = vmatprep.subr.bf16.mxu0 %v3382
    %4456 = vmatpush1.bf16.msra.mxu0 %v3381
    %4457 = vmatprep.mubr.bf16.mxu0 %v955
    %4458 = vmatmul.mubr.bf16.gmra.mrb[0].mxu0 %v954
    %v4459 = vpop.f32.mrb[0].mxu0
    %v4460 = vadd.f32 %v4419, %v4459
    %v4461 = vpop.f32.mrb[0].mxu0
    %v4462 = vadd.f32 %v4421, %v4461
    %v4463 = vpop.f32.mrb[0].mxu0
    %v4464 = vpop.f32.mrb[0].mxu0
    %4465 = vdwg.mxu0
    %4466 = vmatprep.subr.bf16.mxu0 %v3385
    %4467 = vmatpush1.bf16.msra.mxu0 %v3384
    %4468 = vmatprep.subr.bf16.mxu0 %v3388
    %4469 = vmatpush1.bf16.msra.mxu0 %v3387
    %4470 = vmatprep.subr.bf16.mxu0 %v3391
    %4471 = vmatpush1.bf16.msra.mxu0 %v3390
    %4472 = vmatprep.subr.bf16.mxu0 %v3394
    %4473 = vmatpush1.bf16.msra.mxu0 %v3393
    %4474 = vmatprep.subr.bf16.mxu0 %v3397
    %4475 = vmatpush1.bf16.msra.mxu0 %v3396
    %4476 = vmatprep.subr.bf16.mxu0 %v3400
    %4477 = vmatpush1.bf16.msra.mxu0 %v3399
    %4478 = vmatprep.subr.bf16.mxu0 %v3403
    %4479 = vmatpush1.bf16.msra.mxu0 %v3402
    %4480 = vmatprep.subr.bf16.mxu0 %v3406
    %4481 = vmatpush1.bf16.msra.mxu0 %v3405
    %4482 = vmatprep.subr.bf16.mxu0 %v3409
    %4483 = vmatpush1.bf16.msra.mxu0 %v3408
    %4484 = vmatprep.subr.bf16.mxu0 %v3412
    %4485 = vmatpush1.bf16.msra.mxu0 %v3411
    %4486 = vmatprep.subr.bf16.mxu0 %v3415
    %4487 = vmatpush1.bf16.msra.mxu0 %v3414
    %4488 = vmatprep.subr.bf16.mxu0 %v3418
    %4489 = vmatpush1.bf16.msra.mxu0 %v3417
    %4490 = vmatprep.subr.bf16.mxu0 %v3421
    %4491 = vmatpush1.bf16.msra.mxu0 %v3420
    %4492 = vmatprep.subr.bf16.mxu0 %v3424
    %4493 = vmatpush1.bf16.msra.mxu0 %v3423
    %4494 = vmatprep.subr.bf16.mxu0 %v3427
    %4495 = vmatpush1.bf16.msra.mxu0 %v3426
    %4496 = vmatprep.subr.bf16.mxu0 %v3430
    %4497 = vmatpush1.bf16.msra.mxu0 %v3429
    %4498 = vmatprep.mubr.bf16.mxu0 %v957
    %4499 = vmatmul.mubr.bf16.gmra.mrb[0].mxu0 %v956
    %v4500 = vpop.f32.mrb[0].mxu0
    %v4501 = vadd.f32 %v4460, %v4500
    %v4502 = vpop.f32.mrb[0].mxu0
    %v4503 = vadd.f32 %v4462, %v4502
    %v4504 = vpop.f32.mrb[0].mxu0
    %v4505 = vpop.f32.mrb[0].mxu0
    %4506 = vdwg.mxu0
    %4507 = vmatprep.subr.bf16.mxu0 %v3433
    %4508 = vmatpush1.bf16.msra.mxu0 %v3432
    %4509 = vmatprep.subr.bf16.mxu0 %v3436
    %4510 = vmatpush1.bf16.msra.mxu0 %v3435
    %4511 = vmatprep.subr.bf16.mxu0 %v3439
    %4512 = vmatpush1.bf16.msra.mxu0 %v3438
    %4513 = vmatprep.subr.bf16.mxu0 %v3442
    %4514 = vmatpush1.bf16.msra.mxu0 %v3441
    %4515 = vmatprep.subr.bf16.mxu0 %v3445
    %4516 = vmatpush1.bf16.msra.mxu0 %v3444
    %4517 = vmatprep.subr.bf16.mxu0 %v3448
    %4518 = vmatpush1.bf16.msra.mxu0 %v3447
    %4519 = vmatprep.subr.bf16.mxu0 %v3451
    %4520 = vmatpush1.bf16.msra.mxu0 %v3450
    %4521 = vmatprep.subr.bf16.mxu0 %v3454
    %4522 = vmatpush1.bf16.msra.mxu0 %v3453
    %4523 = vmatprep.subr.bf16.mxu0 %v3457
    %4524 = vmatpush1.bf16.msra.mxu0 %v3456
    %4525 = vmatprep.subr.bf16.mxu0 %v3460
    %4526 = vmatpush1.bf16.msra.mxu0 %v3459
    %4527 = vmatprep.subr.bf16.mxu0 %v3463
    %4528 = vmatpush1.bf16.msra.mxu0 %v3462
    %4529 = vmatprep.subr.bf16.mxu0 %v3466
    %4530 = vmatpush1.bf16.msra.mxu0 %v3465
    %4531 = vmatprep.subr.bf16.mxu0 %v3469
    %4532 = vmatpush1.bf16.msra.mxu0 %v3468
    %4533 = vmatprep.subr.bf16.mxu0 %v3472
    %4534 = vmatpush1.bf16.msra.mxu0 %v3471
    %4535 = vmatprep.subr.bf16.mxu0 %v3475
    %4536 = vmatpush1.bf16.msra.mxu0 %v3474
    %4537 = vmatprep.subr.bf16.mxu0 %v3478
    %4538 = vmatpush1.bf16.msra.mxu0 %v3477
    %4539 = vmatprep.mubr.bf16.mxu0 %v959
    %4540 = vmatmul.mubr.bf16.gmra.mrb[0].mxu0 %v958
    %v4541 = vpop.f32.mrb[0].mxu0
    %v4542 = vadd.f32 %v4501, %v4541
    %v4543 = vpop.f32.mrb[0].mxu0
    %v4544 = vadd.f32 %v4503, %v4543
    %v4545 = vpop.f32.mrb[0].mxu0
    %v4546 = vpop.f32.mrb[0].mxu0
    %4547 = vdwg.mxu0
    %4548 = vmatprep.subr.bf16.mxu0 0
    %4549 = vmatpush1.bf16.msra.mxu0 %v2906
    %4550 = vmatprep.subr.bf16.mxu0 0
    %4551 = vmatpush1.bf16.msra.mxu0 %v2909
    %4552 = vmatprep.subr.bf16.mxu0 0
    %4553 = vmatpush1.bf16.msra.mxu0 %v2912
    %4554 = vmatprep.subr.bf16.mxu0 0
    %4555 = vmatpush1.bf16.msra.mxu0 %v2915
    %4556 = vmatprep.subr.bf16.mxu0 0
    %4557 = vmatpush1.bf16.msra.mxu0 %v2918
    %4558 = vmatprep.subr.bf16.mxu0 0
    %4559 = vmatpush1.bf16.msra.mxu0 %v2921
    %4560 = vmatprep.subr.bf16.mxu0 0
    %4561 = vmatpush1.bf16.msra.mxu0 %v2924
    %4562 = vmatprep.subr.bf16.mxu0 0
    %4563 = vmatpush1.bf16.msra.mxu0 %v2927
    %4564 = vmatprep.subr.bf16.mxu0 0
    %4565 = vmatpush1.bf16.msra.mxu0 %v2930
    %4566 = vmatprep.subr.bf16.mxu0 0
    %4567 = vmatpush1.bf16.msra.mxu0 %v2933
    %4568 = vmatprep.subr.bf16.mxu0 0
    %4569 = vmatpush1.bf16.msra.mxu0 %v2936
    %4570 = vmatprep.subr.bf16.mxu0 0
    %4571 = vmatpush1.bf16.msra.mxu0 %v2939
    %4572 = vmatprep.subr.bf16.mxu0 0
    %4573 = vmatpush1.bf16.msra.mxu0 %v2942
    %4574 = vmatprep.subr.bf16.mxu0 0
    %4575 = vmatpush1.bf16.msra.mxu0 %v2945
    %4576 = vmatprep.subr.bf16.mxu0 0
    %4577 = vmatpush1.bf16.msra.mxu0 %v2948
    %4578 = vmatprep.subr.bf16.mxu0 0
    %4579 = vmatpush1.bf16.msra.mxu0 %v2951
    %4580 = vmatprep.mubr.bf16.mxu0 %v937
    %4581 = vmatmul.mubr.bf16.gmra.mrb[0].mxu0 %v936
    %v4582 = vpop.f32.mrb[0].mxu0
    %v4583 = vadd.f32 %v896, %v4582
    %v4584 = vpop.f32.mrb[0].mxu0
    %v4585 = vpop.f32.mrb[0].mxu0
    %v4586 = vpop.f32.mrb[0].mxu0
    %4587 = vdwg.mxu0
    %4588 = vmatprep.subr.bf16.mxu0 0
    %4589 = vmatpush1.bf16.msra.mxu0 %v2954
    %4590 = vmatprep.subr.bf16.mxu0 0
    %4591 = vmatpush1.bf16.msra.mxu0 %v2957
    %4592 = vmatprep.subr.bf16.mxu0 0
    %4593 = vmatpush1.bf16.msra.mxu0 %v2960
    %4594 = vmatprep.subr.bf16.mxu0 0
    %4595 = vmatpush1.bf16.msra.mxu0 %v2963
    %4596 = vmatprep.subr.bf16.mxu0 0
    %4597 = vmatpush1.bf16.msra.mxu0 %v2966
    %4598 = vmatprep.subr.bf16.mxu0 0
    %4599 = vmatpush1.bf16.msra.mxu0 %v2969
    %4600 = vmatprep.subr.bf16.mxu0 0
    %4601 = vmatpush1.bf16.msra.mxu0 %v2972
    %4602 = vmatprep.subr.bf16.mxu0 0
    %4603 = vmatpush1.bf16.msra.mxu0 %v2975
    %4604 = vmatprep.subr.bf16.mxu0 0
    %4605 = vmatpush1.bf16.msra.mxu0 %v2978
    %4606 = vmatprep.subr.bf16.mxu0 0
    %4607 = vmatpush1.bf16.msra.mxu0 %v2981
    %4608 = vmatprep.subr.bf16.mxu0 0
    %4609 = vmatpush1.bf16.msra.mxu0 %v2984
    %4610 = vmatprep.subr.bf16.mxu0 0
    %4611 = vmatpush1.bf16.msra.mxu0 %v2987
    %4612 = vmatprep.subr.bf16.mxu0 0
    %4613 = vmatpush1.bf16.msra.mxu0 %v2990
    %4614 = vmatprep.subr.bf16.mxu0 0
    %4615 = vmatpush1.bf16.msra.mxu0 %v2993
    %4616 = vmatprep.subr.bf16.mxu0 0
    %4617 = vmatpush1.bf16.msra.mxu0 %v2996
    %4618 = vmatprep.subr.bf16.mxu0 0
    %4619 = vmatpush1.bf16.msra.mxu0 %v2999
    %4620 = vmatprep.mubr.bf16.mxu0 %v939
    %4621 = vmatmul.mubr.bf16.gmra.mrb[0].mxu0 %v938
    %v4622 = vpop.f32.mrb[0].mxu0
    %v4623 = vadd.f32 %v4583, %v4622
    %v4624 = vpop.f32.mrb[0].mxu0
    %v4625 = vpop.f32.mrb[0].mxu0
    %v4626 = vpop.f32.mrb[0].mxu0
    %4627 = vdwg.mxu0
    %4628 = vmatprep.subr.bf16.mxu0 0
    %4629 = vmatpush1.bf16.msra.mxu0 %v3002
    %4630 = vmatprep.subr.bf16.mxu0 0
    %4631 = vmatpush1.bf16.msra.mxu0 %v3005
    %4632 = vmatprep.subr.bf16.mxu0 0
    %4633 = vmatpush1.bf16.msra.mxu0 %v3008
    %4634 = vmatprep.subr.bf16.mxu0 0
    %4635 = vmatpush1.bf16.msra.mxu0 %v3011
    %4636 = vmatprep.subr.bf16.mxu0 0
    %4637 = vmatpush1.bf16.msra.mxu0 %v3014
    %4638 = vmatprep.subr.bf16.mxu0 0
    %4639 = vmatpush1.bf16.msra.mxu0 %v3017
    %4640 = vmatprep.subr.bf16.mxu0 0
    %4641 = vmatpush1.bf16.msra.mxu0 %v3020
    %4642 = vmatprep.subr.bf16.mxu0 0
    %4643 = vmatpush1.bf16.msra.mxu0 %v3023
    %4644 = vmatprep.subr.bf16.mxu0 0
    %4645 = vmatpush1.bf16.msra.mxu0 %v3026
    %4646 = vmatprep.subr.bf16.mxu0 0
    %4647 = vmatpush1.bf16.msra.mxu0 %v3029
    %4648 = vmatprep.subr.bf16.mxu0 0
    %4649 = vmatpush1.bf16.msra.mxu0 %v3032
    %4650 = vmatprep.subr.bf16.mxu0 0
    %4651 = vmatpush1.bf16.msra.mxu0 %v3035
    %4652 = vmatprep.subr.bf16.mxu0 0
    %4653 = vmatpush1.bf16.msra.mxu0 %v3038
    %4654 = vmatprep.subr.bf16.mxu0 0
    %4655 = vmatpush1.bf16.msra.mxu0 %v3041
    %4656 = vmatprep.subr.bf16.mxu0 0
    %4657 = vmatpush1.bf16.msra.mxu0 %v3044
    %4658 = vmatprep.subr.bf16.mxu0 0
    %4659 = vmatpush1.bf16.msra.mxu0 %v3047
    %4660 = vmatprep.mubr.bf16.mxu0 %v941
    %4661 = vmatmul.mubr.bf16.gmra.mrb[0].mxu0 %v940
    %v4662 = vpop.f32.mrb[0].mxu0
    %v4663 = vadd.f32 %v4623, %v4662
    %v4664 = vpop.f32.mrb[0].mxu0
    %v4665 = vpop.f32.mrb[0].mxu0
    %v4666 = vpop.f32.mrb[0].mxu0
    %4667 = vdwg.mxu0
    %4668 = vmatprep.subr.bf16.mxu0 0
    %4669 = vmatpush1.bf16.msra.mxu0 %v3050
    %4670 = vmatprep.subr.bf16.mxu0 0
    %4671 = vmatpush1.bf16.msra.mxu0 %v3053
    %4672 = vmatprep.subr.bf16.mxu0 0
    %4673 = vmatpush1.bf16.msra.mxu0 %v3056
    %4674 = vmatprep.subr.bf16.mxu0 0
    %4675 = vmatpush1.bf16.msra.mxu0 %v3059
    %4676 = vmatprep.subr.bf16.mxu0 0
    %4677 = vmatpush1.bf16.msra.mxu0 %v3062
    %4678 = vmatprep.subr.bf16.mxu0 0
    %4679 = vmatpush1.bf16.msra.mxu0 %v3065
    %4680 = vmatprep.subr.bf16.mxu0 0
    %4681 = vmatpush1.bf16.msra.mxu0 %v3068
    %4682 = vmatprep.subr.bf16.mxu0 0
    %4683 = vmatpush1.bf16.msra.mxu0 %v3071
    %4684 = vmatprep.subr.bf16.mxu0 0
    %4685 = vmatpush1.bf16.msra.mxu0 %v3074
    %4686 = vmatprep.subr.bf16.mxu0 0
    %4687 = vmatpush1.bf16.msra.mxu0 %v3077
    %4688 = vmatprep.subr.bf16.mxu0 0
    %4689 = vmatpush1.bf16.msra.mxu0 %v3080
    %4690 = vmatprep.subr.bf16.mxu0 0
    %4691 = vmatpush1.bf16.msra.mxu0 %v3083
    %4692 = vmatprep.subr.bf16.mxu0 0
    %4693 = vmatpush1.bf16.msra.mxu0 %v3086
    %4694 = vmatprep.subr.bf16.mxu0 0
    %4695 = vmatpush1.bf16.msra.mxu0 %v3089
    %4696 = vmatprep.subr.bf16.mxu0 0
    %4697 = vmatpush1.bf16.msra.mxu0 %v3092
    %4698 = vmatprep.subr.bf16.mxu0 0
    %4699 = vmatpush1.bf16.msra.mxu0 %v3095
    %4700 = vmatprep.mubr.bf16.mxu0 %v943
    %4701 = vmatmul.mubr.bf16.gmra.mrb[0].mxu0 %v942
    %v4702 = vpop.f32.mrb[0].mxu0
    %v4703 = vadd.f32 %v4663, %v4702
    %v4704 = vpop.f32.mrb[0].mxu0
    %v4705 = vpop.f32.mrb[0].mxu0
    %v4706 = vpop.f32.mrb[0].mxu0
    %4707 = vdwg.mxu0
    %4708 = vmatprep.subr.bf16.mxu0 0
    %4709 = vmatpush1.bf16.msra.mxu0 %v3098
    %4710 = vmatprep.subr.bf16.mxu0 0
    %4711 = vmatpush1.bf16.msra.mxu0 %v3101
    %4712 = vmatprep.subr.bf16.mxu0 0
    %4713 = vmatpush1.bf16.msra.mxu0 %v3104
    %4714 = vmatprep.subr.bf16.mxu0 0
    %4715 = vmatpush1.bf16.msra.mxu0 %v3107
    %4716 = vmatprep.subr.bf16.mxu0 0
    %4717 = vmatpush1.bf16.msra.mxu0 %v3110
    %4718 = vmatprep.subr.bf16.mxu0 0
    %4719 = vmatpush1.bf16.msra.mxu0 %v3113
    %4720 = vmatprep.subr.bf16.mxu0 0
    %4721 = vmatpush1.bf16.msra.mxu0 %v3116
    %4722 = vmatprep.subr.bf16.mxu0 0
    %4723 = vmatpush1.bf16.msra.mxu0 %v3119
    %4724 = vmatprep.subr.bf16.mxu0 0
    %4725 = vmatpush1.bf16.msra.mxu0 %v3122
    %4726 = vmatprep.subr.bf16.mxu0 0
    %4727 = vmatpush1.bf16.msra.mxu0 %v3125
    %4728 = vmatprep.subr.bf16.mxu0 0
    %4729 = vmatpush1.bf16.msra.mxu0 %v3128
    %4730 = vmatprep.subr.bf16.mxu0 0
    %4731 = vmatpush1.bf16.msra.mxu0 %v3131
    %4732 = vmatprep.subr.bf16.mxu0 0
    %4733 = vmatpush1.bf16.msra.mxu0 %v3134
    %4734 = vmatprep.subr.bf16.mxu0 0
    %4735 = vmatpush1.bf16.msra.mxu0 %v3137
    %4736 = vmatprep.subr.bf16.mxu0 0
    %4737 = vmatpush1.bf16.msra.mxu0 %v3140
    %4738 = vmatprep.subr.bf16.mxu0 0
    %4739 = vmatpush1.bf16.msra.mxu0 %v3143
    %4740 = vmatprep.mubr.bf16.mxu0 %v945
    %4741 = vmatmul.mubr.bf16.gmra.mrb[0].mxu0 %v944
    %v4742 = vpop.f32.mrb[0].mxu0
    %v4743 = vadd.f32 %v4703, %v4742
    %v4744 = vpop.f32.mrb[0].mxu0
    %v4745 = vpop.f32.mrb[0].mxu0
    %v4746 = vpop.f32.mrb[0].mxu0
    %4747 = vdwg.mxu0
    %4748 = vmatprep.subr.bf16.mxu0 0
    %4749 = vmatpush1.bf16.msra.mxu0 %v3146
    %4750 = vmatprep.subr.bf16.mxu0 0
    %4751 = vmatpush1.bf16.msra.mxu0 %v3149
    %4752 = vmatprep.subr.bf16.mxu0 0
    %4753 = vmatpush1.bf16.msra.mxu0 %v3152
    %4754 = vmatprep.subr.bf16.mxu0 0
    %4755 = vmatpush1.bf16.msra.mxu0 %v3155
    %4756 = vmatprep.subr.bf16.mxu0 0
    %4757 = vmatpush1.bf16.msra.mxu0 %v3158
    %4758 = vmatprep.subr.bf16.mxu0 0
    %4759 = vmatpush1.bf16.msra.mxu0 %v3161
    %4760 = vmatprep.subr.bf16.mxu0 0
    %4761 = vmatpush1.bf16.msra.mxu0 %v3164
    %4762 = vmatprep.subr.bf16.mxu0 0
    %4763 = vmatpush1.bf16.msra.mxu0 %v3167
    %4764 = vmatprep.subr.bf16.mxu0 0
    %4765 = vmatpush1.bf16.msra.mxu0 %v3170
    %4766 = vmatprep.subr.bf16.mxu0 0
    %4767 = vmatpush1.bf16.msra.mxu0 %v3173
    %4768 = vmatprep.subr.bf16.mxu0 0
    %4769 = vmatpush1.bf16.msra.mxu0 %v3176
    %4770 = vmatprep.subr.bf16.mxu0 0
    %4771 = vmatpush1.bf16.msra.mxu0 %v3179
    %4772 = vmatprep.subr.bf16.mxu0 0
    %4773 = vmatpush1.bf16.msra.mxu0 %v3182
    %4774 = vmatprep.subr.bf16.mxu0 0
    %4775 = vmatpush1.bf16.msra.mxu0 %v3185
    %4776 = vmatprep.subr.bf16.mxu0 0
    %4777 = vmatpush1.bf16.msra.mxu0 %v3188
    %4778 = vmatprep.subr.bf16.mxu0 0
    %4779 = vmatpush1.bf16.msra.mxu0 %v3191
    %4780 = vmatprep.mubr.bf16.mxu0 %v947
    %4781 = vmatmul.mubr.bf16.gmra.mrb[0].mxu0 %v946
    %v4782 = vpop.f32.mrb[0].mxu0
    %v4783 = vadd.f32 %v4743, %v4782
    %v4784 = vpop.f32.mrb[0].mxu0
    %v4785 = vpop.f32.mrb[0].mxu0
    %v4786 = vpop.f32.mrb[0].mxu0
    %4787 = vdwg.mxu0
    %4788 = vmatprep.subr.bf16.mxu0 0
    %4789 = vmatpush1.bf16.msra.mxu0 %v3194
    %4790 = vmatprep.subr.bf16.mxu0 0
    %4791 = vmatpush1.bf16.msra.mxu0 %v3197
    %4792 = vmatprep.subr.bf16.mxu0 0
    %4793 = vmatpush1.bf16.msra.mxu0 %v3200
    %4794 = vmatprep.subr.bf16.mxu0 0
    %4795 = vmatpush1.bf16.msra.mxu0 %v3203
    %4796 = vmatprep.subr.bf16.mxu0 0
    %4797 = vmatpush1.bf16.msra.mxu0 %v3206
    %4798 = vmatprep.subr.bf16.mxu0 0
    %4799 = vmatpush1.bf16.msra.mxu0 %v3209
    %4800 = vmatprep.subr.bf16.mxu0 0
    %4801 = vmatpush1.bf16.msra.mxu0 %v3212
    %4802 = vmatprep.subr.bf16.mxu0 0
    %4803 = vmatpush1.bf16.msra.mxu0 %v3215
    %4804 = vmatprep.subr.bf16.mxu0 0
    %4805 = vmatpush1.bf16.msra.mxu0 %v3218
    %4806 = vmatprep.subr.bf16.mxu0 0
    %4807 = vmatpush1.bf16.msra.mxu0 %v3221
    %4808 = vmatprep.subr.bf16.mxu0 0
    %4809 = vmatpush1.bf16.msra.mxu0 %v3224
    %4810 = vmatprep.subr.bf16.mxu0 0
    %4811 = vmatpush1.bf16.msra.mxu0 %v3227
    %4812 = vmatprep.subr.bf16.mxu0 0
    %4813 = vmatpush1.bf16.msra.mxu0 %v3230
    %4814 = vmatprep.subr.bf16.mxu0 0
    %4815 = vmatpush1.bf16.msra.mxu0 %v3233
    %4816 = vmatprep.subr.bf16.mxu0 0
    %4817 = vmatpush1.bf16.msra.mxu0 %v3236
    %4818 = vmatprep.subr.bf16.mxu0 0
    %4819 = vmatpush1.bf16.msra.mxu0 %v3239
    %4820 = vmatprep.mubr.bf16.mxu0 %v949
    %4821 = vmatmul.mubr.bf16.gmra.mrb[0].mxu0 %v948
    %v4822 = vpop.f32.mrb[0].mxu0
    %v4823 = vadd.f32 %v4783, %v4822
    %v4824 = vpop.f32.mrb[0].mxu0
    %v4825 = vpop.f32.mrb[0].mxu0
    %v4826 = vpop.f32.mrb[0].mxu0
    %4827 = vdwg.mxu0
    %4828 = vmatprep.subr.bf16.mxu0 0
    %4829 = vmatpush1.bf16.msra.mxu0 %v3242
    %4830 = vmatprep.subr.bf16.mxu0 0
    %4831 = vmatpush1.bf16.msra.mxu0 %v3245
    %4832 = vmatprep.subr.bf16.mxu0 0
    %4833 = vmatpush1.bf16.msra.mxu0 %v3248
    %4834 = vmatprep.subr.bf16.mxu0 0
    %4835 = vmatpush1.bf16.msra.mxu0 %v3251
    %4836 = vmatprep.subr.bf16.mxu0 0
    %4837 = vmatpush1.bf16.msra.mxu0 %v3254
    %4838 = vmatprep.subr.bf16.mxu0 0
    %4839 = vmatpush1.bf16.msra.mxu0 %v3257
    %4840 = vmatprep.subr.bf16.mxu0 0
    %4841 = vmatpush1.bf16.msra.mxu0 %v3260
    %4842 = vmatprep.subr.bf16.mxu0 0
    %4843 = vmatpush1.bf16.msra.mxu0 %v3263
    %4844 = vmatprep.subr.bf16.mxu0 0
    %4845 = vmatpush1.bf16.msra.mxu0 %v3266
    %4846 = vmatprep.subr.bf16.mxu0 0
    %4847 = vmatpush1.bf16.msra.mxu0 %v3269
    %4848 = vmatprep.subr.bf16.mxu0 0
    %4849 = vmatpush1.bf16.msra.mxu0 %v3272
    %4850 = vmatprep.subr.bf16.mxu0 0
    %4851 = vmatpush1.bf16.msra.mxu0 %v3275
    %4852 = vmatprep.subr.bf16.mxu0 0
    %4853 = vmatpush1.bf16.msra.mxu0 %v3278
    %4854 = vmatprep.subr.bf16.mxu0 0
    %4855 = vmatpush1.bf16.msra.mxu0 %v3281
    %4856 = vmatprep.subr.bf16.mxu0 0
    %4857 = vmatpush1.bf16.msra.mxu0 %v3284
    %4858 = vmatprep.subr.bf16.mxu0 0
    %4859 = vmatpush1.bf16.msra.mxu0 %v3287
    %4860 = vmatprep.mubr.bf16.mxu0 %v951
    %4861 = vmatmul.mubr.bf16.gmra.mrb[0].mxu0 %v950
    %v4862 = vpop.f32.mrb[0].mxu0
    %v4863 = vadd.f32 %v4823, %v4862
    %v4864 = vpop.f32.mrb[0].mxu0
    %v4865 = vpop.f32.mrb[0].mxu0
    %v4866 = vpop.f32.mrb[0].mxu0
    %4867 = vdwg.mxu0
    %4868 = vmatprep.subr.bf16.mxu0 0
    %4869 = vmatpush1.bf16.msra.mxu0 %v3290
    %4870 = vmatprep.subr.bf16.mxu0 0
    %4871 = vmatpush1.bf16.msra.mxu0 %v3293
    %4872 = vmatprep.subr.bf16.mxu0 0
    %4873 = vmatpush1.bf16.msra.mxu0 %v3296
    %4874 = vmatprep.subr.bf16.mxu0 0
    %4875 = vmatpush1.bf16.msra.mxu0 %v3299
    %4876 = vmatprep.subr.bf16.mxu0 0
    %4877 = vmatpush1.bf16.msra.mxu0 %v3302
    %4878 = vmatprep.subr.bf16.mxu0 0
    %4879 = vmatpush1.bf16.msra.mxu0 %v3305
    %4880 = vmatprep.subr.bf16.mxu0 0
    %4881 = vmatpush1.bf16.msra.mxu0 %v3308
    %4882 = vmatprep.subr.bf16.mxu0 0
    %4883 = vmatpush1.bf16.msra.mxu0 %v3311
    %4884 = vmatprep.subr.bf16.mxu0 0
    %4885 = vmatpush1.bf16.msra.mxu0 %v3314
    %4886 = vmatprep.subr.bf16.mxu0 0
    %4887 = vmatpush1.bf16.msra.mxu0 %v3317
    %4888 = vmatprep.subr.bf16.mxu0 0
    %4889 = vmatpush1.bf16.msra.mxu0 %v3320
    %4890 = vmatprep.subr.bf16.mxu0 0
    %4891 = vmatpush1.bf16.msra.mxu0 %v3323
    %4892 = vmatprep.subr.bf16.mxu0 0
    %4893 = vmatpush1.bf16.msra.mxu0 %v3326
    %4894 = vmatprep.subr.bf16.mxu0 0
    %4895 = vmatpush1.bf16.msra.mxu0 %v3329
    %4896 = vmatprep.subr.bf16.mxu0 0
    %4897 = vmatpush1.bf16.msra.mxu0 %v3332
    %4898 = vmatprep.subr.bf16.mxu0 0
    %4899 = vmatpush1.bf16.msra.mxu0 %v3335
    %4900 = vmatprep.mubr.bf16.mxu0 %v953
    %4901 = vmatmul.mubr.bf16.gmra.mrb[0].mxu0 %v952
    %v4902 = vpop.f32.mrb[0].mxu0
    %v4903 = vadd.f32 %v4863, %v4902
    %v4904 = vpop.f32.mrb[0].mxu0
    %v4905 = vpop.f32.mrb[0].mxu0
    %v4906 = vpop.f32.mrb[0].mxu0
    %4907 = vdwg.mxu0
    %4908 = vmatprep.subr.bf16.mxu0 0
    %4909 = vmatpush1.bf16.msra.mxu0 %v3338
    %4910 = vmatprep.subr.bf16.mxu0 0
    %4911 = vmatpush1.bf16.msra.mxu0 %v3341
    %4912 = vmatprep.subr.bf16.mxu0 0
    %4913 = vmatpush1.bf16.msra.mxu0 %v3344
    %4914 = vmatprep.subr.bf16.mxu0 0
    %4915 = vmatpush1.bf16.msra.mxu0 %v3347
    %4916 = vmatprep.subr.bf16.mxu0 0
    %4917 = vmatpush1.bf16.msra.mxu0 %v3350
    %4918 = vmatprep.subr.bf16.mxu0 0
    %4919 = vmatpush1.bf16.msra.mxu0 %v3353
    %4920 = vmatprep.subr.bf16.mxu0 0
    %4921 = vmatpush1.bf16.msra.mxu0 %v3356
    %4922 = vmatprep.subr.bf16.mxu0 0
    %4923 = vmatpush1.bf16.msra.mxu0 %v3359
    %4924 = vmatprep.subr.bf16.mxu0 0
    %4925 = vmatpush1.bf16.msra.mxu0 %v3362
    %4926 = vmatprep.subr.bf16.mxu0 0
    %4927 = vmatpush1.bf16.msra.mxu0 %v3365
    %4928 = vmatprep.subr.bf16.mxu0 0
    %4929 = vmatpush1.bf16.msra.mxu0 %v3368
    %4930 = vmatprep.subr.bf16.mxu0 0
    %4931 = vmatpush1.bf16.msra.mxu0 %v3371
    %4932 = vmatprep.subr.bf16.mxu0 0
    %4933 = vmatpush1.bf16.msra.mxu0 %v3374
    %4934 = vmatprep.subr.bf16.mxu0 0
    %4935 = vmatpush1.bf16.msra.mxu0 %v3377
    %4936 = vmatprep.subr.bf16.mxu0 0
    %4937 = vmatpush1.bf16.msra.mxu0 %v3380
    %4938 = vmatprep.subr.bf16.mxu0 0
    %4939 = vmatpush1.bf16.msra.mxu0 %v3383
    %4940 = vmatprep.mubr.bf16.mxu0 %v955
    %4941 = vmatmul.mubr.bf16.gmra.mrb[0].mxu0 %v954
    %v4942 = vpop.f32.mrb[0].mxu0
    %v4943 = vadd.f32 %v4903, %v4942
    %v4944 = vpop.f32.mrb[0].mxu0
    %v4945 = vpop.f32.mrb[0].mxu0
    %v4946 = vpop.f32.mrb[0].mxu0
    %4947 = vdwg.mxu0
    %4948 = vmatprep.subr.bf16.mxu0 0
    %4949 = vmatpush1.bf16.msra.mxu0 %v3386
    %4950 = vmatprep.subr.bf16.mxu0 0
    %4951 = vmatpush1.bf16.msra.mxu0 %v3389
    %4952 = vmatprep.subr.bf16.mxu0 0
    %4953 = vmatpush1.bf16.msra.mxu0 %v3392
    %4954 = vmatprep.subr.bf16.mxu0 0
    %4955 = vmatpush1.bf16.msra.mxu0 %v3395
    %4956 = vmatprep.subr.bf16.mxu0 0
    %4957 = vmatpush1.bf16.msra.mxu0 %v3398
    %4958 = vmatprep.subr.bf16.mxu0 0
    %4959 = vmatpush1.bf16.msra.mxu0 %v3401
    %4960 = vmatprep.subr.bf16.mxu0 0
    %4961 = vmatpush1.bf16.msra.mxu0 %v3404
    %4962 = vmatprep.subr.bf16.mxu0 0
    %4963 = vmatpush1.bf16.msra.mxu0 %v3407
    %4964 = vmatprep.subr.bf16.mxu0 0
    %4965 = vmatpush1.bf16.msra.mxu0 %v3410
    %4966 = vmatprep.subr.bf16.mxu0 0
    %4967 = vmatpush1.bf16.msra.mxu0 %v3413
    %4968 = vmatprep.subr.bf16.mxu0 0
    %4969 = vmatpush1.bf16.msra.mxu0 %v3416
    %4970 = vmatprep.subr.bf16.mxu0 0
    %4971 = vmatpush1.bf16.msra.mxu0 %v3419
    %4972 = vmatprep.subr.bf16.mxu0 0
    %4973 = vmatpush1.bf16.msra.mxu0 %v3422
    %4974 = vmatprep.subr.bf16.mxu0 0
    %4975 = vmatpush1.bf16.msra.mxu0 %v3425
    %4976 = vmatprep.subr.bf16.mxu0 0
    %4977 = vmatpush1.bf16.msra.mxu0 %v3428
    %4978 = vmatprep.subr.bf16.mxu0 0
    %4979 = vmatpush1.bf16.msra.mxu0 %v3431
    %4980 = vmatprep.mubr.bf16.mxu0 %v957
    %4981 = vmatmul.mubr.bf16.gmra.mrb[0].mxu0 %v956
    %v4982 = vpop.f32.mrb[0].mxu0
    %v4983 = vadd.f32 %v4943, %v4982
    %v4984 = vpop.f32.mrb[0].mxu0
    %v4985 = vpop.f32.mrb[0].mxu0
    %v4986 = vpop.f32.mrb[0].mxu0
    %4987 = vdwg.mxu0
    %4988 = vmatprep.subr.bf16.mxu0 0
    %4989 = vmatpush1.bf16.msra.mxu0 %v3434
    %4990 = vmatprep.subr.bf16.mxu0 0
    %4991 = vmatpush1.bf16.msra.mxu0 %v3437
    %4992 = vmatprep.subr.bf16.mxu0 0
    %4993 = vmatpush1.bf16.msra.mxu0 %v3440
    %4994 = vmatprep.subr.bf16.mxu0 0
    %4995 = vmatpush1.bf16.msra.mxu0 %v3443
    %4996 = vmatprep.subr.bf16.mxu0 0
    %4997 = vmatpush1.bf16.msra.mxu0 %v3446
    %4998 = vmatprep.subr.bf16.mxu0 0
    %4999 = vmatpush1.bf16.msra.mxu0 %v3449
    %5000 = vmatprep.subr.bf16.mxu0 0
    %5001 = vmatpush1.bf16.msra.mxu0 %v3452
    %5002 = vmatprep.subr.bf16.mxu0 0
    %5003 = vmatpush1.bf16.msra.mxu0 %v3455
    %5004 = vmatprep.subr.bf16.mxu0 0
    %5005 = vmatpush1.bf16.msra.mxu0 %v3458
    %5006 = vmatprep.subr.bf16.mxu0 0
    %5007 = vmatpush1.bf16.msra.mxu0 %v3461
    %5008 = vmatprep.subr.bf16.mxu0 0
    %5009 = vmatpush1.bf16.msra.mxu0 %v3464
    %5010 = vmatprep.subr.bf16.mxu0 0
    %5011 = vmatpush1.bf16.msra.mxu0 %v3467
    %5012 = vmatprep.subr.bf16.mxu0 0
    %5013 = vmatpush1.bf16.msra.mxu0 %v3470
    %5014 = vmatprep.subr.bf16.mxu0 0
    %5015 = vmatpush1.bf16.msra.mxu0 %v3473
    %5016 = vmatprep.subr.bf16.mxu0 0
    %5017 = vmatpush1.bf16.msra.mxu0 %v3476
    %5018 = vmatprep.subr.bf16.mxu0 0
    %5019 = vmatpush1.bf16.msra.mxu0 %v3479
    %5020 = vmatprep.mubr.bf16.mxu0 %v959
    %5021 = vmatmul.mubr.bf16.gmra.mrb[0].mxu0 %v958
    %v5022 = vpop.f32.mrb[0].mxu0
    %v5023 = vadd.f32 %v4983, %v5022
    %v5024 = vpop.f32.mrb[0].mxu0
    %v5025 = vpop.f32.mrb[0].mxu0
    %v5026 = vpop.f32.mrb[0].mxu0
    %5027 = vdwg.mxu0
    %v5028 = vmax.f32 %v4542, 0.0
    %v5029 = vmax.f32 %v4544, 0.0
    %v5030 = vmax.f32 %v5023, 0.0
    %v5031 = vpack.c.bf16 %v5028, %v5028
    %v5032 = vpack.c.bf16 %v5029, %v5029
    %v5033 = vpack.c.bf16 %v5030, %v5030
    %v5034 = vld [vmem:[#allocation6] sm:$0xf]
    %v5035 = vld [vmem:[#allocation6 + $0x4] sm:$0xf]
    %v5036 = vld [vmem:[#allocation6 + $0x8] sm:$0xf]
    %v5037 = vld [vmem:[#allocation6 + $0xc] sm:$0xf]
    %v5038 = vld [vmem:[#allocation6 + $0x10] sm:$0xf]
    %v5039 = vld [vmem:[#allocation6 + $0x14] sm:$0xf]
    %v5040 = vld [vmem:[#allocation6 + $0x18] sm:$0xf]
    %v5041 = vld [vmem:[#allocation6 + $0x1c] sm:$0xf]
    %v5042 = vld [vmem:[#allocation6 + $0x20] sm:$0xf]
    %v5043 = vld [vmem:[#allocation6 + $0x24] sm:$0xf]
    %v5044 = vld [vmem:[#allocation6 + $0x28] sm:$0xf]
    %v5045 = vld [vmem:[#allocation6 + $0x2c] sm:$0xf]
    %v5046 = vld [vmem:[#allocation6 + $0x30] sm:$0xf]
    %v5047 = vld [vmem:[#allocation6 + $0x34] sm:$0xf]
    %v5048 = vld [vmem:[#allocation6 + $0x38] sm:$0xf]
    %v5049 = vld [vmem:[#allocation6 + $0x3c] sm:$0xf]
    %v5050 = vld [vmem:[#allocation6 + $0x40] sm:$0xf]
    %v5051 = vld [vmem:[#allocation6 + $0x44] sm:$0xf]
    %v5052 = vld [vmem:[#allocation6 + $0x48] sm:$0xf]
    %v5053 = vld [vmem:[#allocation6 + $0x4c] sm:$0xf]
    %v5054 = vld [vmem:[#allocation6 + $0x50] sm:$0xf]
    %v5055 = vld [vmem:[#allocation6 + $0x54] sm:$0xf]
    %v5056 = vld [vmem:[#allocation6 + $0x58] sm:$0xf]
    %v5057 = vld [vmem:[#allocation6 + $0x5c] sm:$0xf]
    %v5058 = vld [vmem:[#allocation6 + $0x60] sm:$0xf]
    %v5059 = vld [vmem:[#allocation6 + $0x64] sm:$0xf]
    %v5060 = vld [vmem:[#allocation6 + $0x68] sm:$0xf]
    %v5061 = vld [vmem:[#allocation6 + $0x6c] sm:$0xf]
    %v5062 = vld [vmem:[#allocation6 + $0x70] sm:$0xf]
    %v5063 = vld [vmem:[#allocation6 + $0x74] sm:$0xf]
    %v5064 = vld [vmem:[#allocation6 + $0x78] sm:$0xf]
    %v5065 = vld [vmem:[#allocation6 + $0x7c] sm:$0xf]
    %v5066 = vld [vmem:[#allocation6 + $0x80] sm:$0xf]
    %v5067 = vld [vmem:[#allocation6 + $0x84] sm:$0xf]
    %v5068 = vld [vmem:[#allocation6 + $0x88] sm:$0xf]
    %v5069 = vld [vmem:[#allocation6 + $0x8c] sm:$0xf]
    %v5070 = vld [vmem:[#allocation6 + $0x90] sm:$0xf]
    %v5071 = vld [vmem:[#allocation6 + $0x94] sm:$0xf]
    %v5072 = vld [vmem:[#allocation6 + $0x98] sm:$0xf]
    %v5073 = vld [vmem:[#allocation6 + $0x9c] sm:$0xf]
    %v5074 = vld [vmem:[#allocation6 + $0xa0] sm:$0xf]
    %v5075 = vld [vmem:[#allocation6 + $0xa4] sm:$0xf]
    %v5076 = vld [vmem:[#allocation6 + $0xa8] sm:$0xf]
    %v5077 = vld [vmem:[#allocation6 + $0xac] sm:$0xf]
    %v5078 = vld [vmem:[#allocation6 + $0xb0] sm:$0xf]
    %v5079 = vld [vmem:[#allocation6 + $0xb4] sm:$0xf]
    %v5080 = vld [vmem:[#allocation6 + $0xb8] sm:$0xf]
    %v5081 = vld [vmem:[#allocation6 + $0xbc] sm:$0xf]
    %v5082 = vld [vmem:[#allocation7] sm:$0x1]
    %v5084 = vlaneseq
    %v5085 = vshrl.u32 %v5084, 7
    %v5086 = vsub.s32 0, %v5085
    %v5087 = vrot.slane %v5082, %v5086
    %v5137 = vunpack.c.l.b16 %v5034
    %v5138 = vunpack.c.l.b16 %v5035
    %v5139 = vunpack.c.l.b16 %v5036
    %v5140 = vunpack.c.l.b16 %v5037
    %v5141 = vunpack.c.l.b16 %v5038
    %v5142 = vunpack.c.l.b16 %v5039
    %v5143 = vunpack.c.l.b16 %v5040
    %v5144 = vunpack.c.l.b16 %v5041
    %v5145 = vunpack.c.l.b16 %v5042
    %v5146 = vunpack.c.l.b16 %v5043
    %v5147 = vunpack.c.l.b16 %v5044
    %v5148 = vunpack.c.l.b16 %v5045
    %v5149 = vunpack.c.l.b16 %v5046
    %v5150 = vunpack.c.l.b16 %v5047
    %v5151 = vunpack.c.l.b16 %v5048
    %v5152 = vunpack.c.l.b16 %v5049
    %v5153 = vunpack.c.l.b16 %v5050
    %v5154 = vunpack.c.l.b16 %v5051
    %v5155 = vunpack.c.l.b16 %v5052
    %v5156 = vunpack.c.l.b16 %v5053
    %v5157 = vunpack.c.l.b16 %v5054
    %v5158 = vunpack.c.l.b16 %v5055
    %v5159 = vunpack.c.l.b16 %v5056
    %v5160 = vunpack.c.l.b16 %v5057
    %v5161 = vunpack.c.l.b16 %v5058
    %v5162 = vunpack.c.l.b16 %v5059
    %v5163 = vunpack.c.l.b16 %v5060
    %v5164 = vunpack.c.l.b16 %v5061
    %v5165 = vunpack.c.l.b16 %v5062
    %v5166 = vunpack.c.l.b16 %v5063
    %v5167 = vunpack.c.l.b16 %v5064
    %v5168 = vunpack.c.l.b16 %v5065
    %v5169 = vunpack.c.l.b16 %v5066
    %v5170 = vunpack.c.l.b16 %v5067
    %v5171 = vunpack.c.l.b16 %v5068
    %v5172 = vunpack.c.l.b16 %v5069
    %v5173 = vunpack.c.l.b16 %v5070
    %v5174 = vunpack.c.l.b16 %v5071
    %v5175 = vunpack.c.l.b16 %v5072
    %v5176 = vunpack.c.l.b16 %v5073
    %v5177 = vunpack.c.l.b16 %v5074
    %v5178 = vunpack.c.l.b16 %v5075
    %v5179 = vunpack.c.l.b16 %v5076
    %v5180 = vunpack.c.l.b16 %v5077
    %v5181 = vunpack.c.l.b16 %v5078
    %v5182 = vunpack.c.l.b16 %v5079
    %v5183 = vunpack.c.l.b16 %v5080
    %v5184 = vunpack.c.l.b16 %v5081
    %v5185 = vpack.c.b16 %v5138, %v5137
    %v5186 = vpack.c.b16 %v5140, %v5139
    %v5187 = vpack.c.b16 %v5142, %v5141
    %v5188 = vpack.c.b16 %v5144, %v5143
    %v5189 = vpack.c.b16 %v5146, %v5145
    %v5190 = vpack.c.b16 %v5148, %v5147
    %v5191 = vpack.c.b16 %v5150, %v5149
    %v5192 = vpack.c.b16 %v5152, %v5151
    %v5193 = vpack.c.b16 %v5154, %v5153
    %v5194 = vpack.c.b16 %v5156, %v5155
    %v5195 = vpack.c.b16 %v5158, %v5157
    %v5196 = vpack.c.b16 %v5160, %v5159
    %v5197 = vpack.c.b16 %v5162, %v5161
    %v5198 = vpack.c.b16 %v5164, %v5163
    %v5199 = vpack.c.b16 %v5166, %v5165
    %v5200 = vpack.c.b16 %v5168, %v5167
    %v5201 = vpack.c.b16 %v5170, %v5169
    %v5202 = vpack.c.b16 %v5172, %v5171
    %v5203 = vpack.c.b16 %v5174, %v5173
    %v5204 = vpack.c.b16 %v5176, %v5175
    %v5205 = vpack.c.b16 %v5178, %v5177
    %v5206 = vpack.c.b16 %v5180, %v5179
    %v5207 = vpack.c.b16 %v5182, %v5181
    %v5208 = vpack.c.b16 %v5184, %v5183
    %5233 = vmatprep.subr.bf16.mxu0 0
    %5234 = vmatpush1.bf16.msra.mxu0 %v5185
    %5235 = vmatprep.subr.bf16.mxu0 0
    %5236 = vmatpush1.bf16.msra.mxu0 %v5186
    %5237 = vmatprep.subr.bf16.mxu0 0
    %5238 = vmatpush1.bf16.msra.mxu0 %v5187
    %5239 = vmatprep.subr.bf16.mxu0 0
    %5240 = vmatpush1.bf16.msra.mxu0 %v5188
    %5241 = vmatprep.subr.bf16.mxu0 0
    %5242 = vmatpush1.bf16.msra.mxu0 %v5189
    %5243 = vmatprep.subr.bf16.mxu0 0
    %5244 = vmatpush1.bf16.msra.mxu0 %v5190
    %5245 = vmatprep.subr.bf16.mxu0 0
    %5246 = vmatpush1.bf16.msra.mxu0 %v5191
    %5247 = vmatprep.subr.bf16.mxu0 0
    %5248 = vmatpush1.bf16.msra.mxu0 %v5192
    %5249 = vmatprep.subr.bf16.mxu0 0
    %5250 = vmatpush1.bf16.msra.mxu0 %v5193
    %5251 = vmatprep.subr.bf16.mxu0 0
    %5252 = vmatpush1.bf16.msra.mxu0 %v5194
    %5253 = vmatprep.subr.bf16.mxu0 0
    %5254 = vmatpush1.bf16.msra.mxu0 %v5195
    %5255 = vmatprep.subr.bf16.mxu0 0
    %5256 = vmatpush1.bf16.msra.mxu0 %v5196
    %5257 = vmatprep.subr.bf16.mxu0 0
    %5258 = vmatpush1.bf16.msra.mxu0 %v5197
    %5259 = vmatprep.subr.bf16.mxu0 0
    %5260 = vmatpush1.bf16.msra.mxu0 %v5198
    %5261 = vmatprep.subr.bf16.mxu0 0
    %5262 = vmatpush1.bf16.msra.mxu0 %v5199
    %5263 = vmatprep.subr.bf16.mxu0 0
    %5264 = vmatpush1.bf16.msra.mxu0 %v5200
    %5265 = vmatprep.mubr.bf16.mxu0 %v5032
    %5266 = vmatmul.mubr.bf16.gmra.mrb[0].mxu0 %v5031
    %v5267 = vpop.f32.mrb[0].mxu0
    %v5268 = vadd.f32 %v5087, %v5267
    %v5269 = vpop.f32.mrb[0].mxu0
    %v5270 = vpop.f32.mrb[0].mxu0
    %v5271 = vpop.f32.mrb[0].mxu0
    %5272 = vdwg.mxu0
    %5273 = vmatprep.subr.bf16.mxu0 0
    %5274 = vmatpush1.bf16.msra.mxu0 %v5201
    %5275 = vmatprep.subr.bf16.mxu0 0
    %5276 = vmatpush1.bf16.msra.mxu0 %v5202
    %5277 = vmatprep.subr.bf16.mxu0 0
    %5278 = vmatpush1.bf16.msra.mxu0 %v5203
    %5279 = vmatprep.subr.bf16.mxu0 0
    %5280 = vmatpush1.bf16.msra.mxu0 %v5204
    %5281 = vmatprep.subr.bf16.mxu0 0
    %5282 = vmatpush1.bf16.msra.mxu0 %v5205
    %5283 = vmatprep.subr.bf16.mxu0 0
    %5284 = vmatpush1.bf16.msra.mxu0 %v5206
    %5285 = vmatprep.subr.bf16.mxu0 0
    %5286 = vmatpush1.bf16.msra.mxu0 %v5207
    %5287 = vmatprep.subr.bf16.mxu0 0
    %5288 = vmatpush1.bf16.msra.mxu0 %v5208
    %5289 = vmatprep.subr.bf16.mxu0 0
    %5290 = vmatpush1.bf16.msra.mxu0 0
    %5291 = vmatprep.subr.bf16.mxu0 0
    %5292 = vmatpush1.bf16.msra.mxu0 0
    %5293 = vmatprep.subr.bf16.mxu0 0
    %5294 = vmatpush1.bf16.msra.mxu0 0
    %5295 = vmatprep.subr.bf16.mxu0 0
    %5296 = vmatpush1.bf16.msra.mxu0 0
    %5297 = vmatprep.subr.bf16.mxu0 0
    %5298 = vmatpush1.bf16.msra.mxu0 0
    %5299 = vmatprep.subr.bf16.mxu0 0
    %5300 = vmatpush1.bf16.msra.mxu0 0
    %5301 = vmatprep.subr.bf16.mxu0 0
    %5302 = vmatpush1.bf16.msra.mxu0 0
    %5303 = vmatprep.subr.bf16.mxu0 0
    %5304 = vmatpush1.bf16.msra.mxu0 0
    %5305 = vmatprep.mubr.bf16.mxu0 0
    %5306 = vmatmul.mubr.bf16.gmra.mrb[0].mxu0 %v5033
    %v5307 = vpop.f32.mrb[0].mxu0
    %v5308 = vadd.f32 %v5268, %v5307
    %v5309 = vpop.f32.mrb[0].mxu0
    %v5310 = vpop.f32.mrb[0].mxu0
    %v5311 = vpop.f32.mrb[0].mxu0
    %5312 = vdwg.mxu0
    %v5313 = vmax.f32 %v5308, 0.0
    %v5314 = vpack.c.bf16 %v5313, %v5313
    %v5315 = vld [vmem:[#allocation9] sm:$0xf]
    %v5316 = vld [vmem:[#allocation9 + $0x4] sm:$0xf]
    %v5317 = vld [vmem:[#allocation9 + $0x8] sm:$0xf]
    %v5318 = vld [vmem:[#allocation9 + $0xc] sm:$0xf]
    %v5319 = vld [vmem:[#allocation9 + $0x10] sm:$0xf]
    %v5320 = vld [vmem:[#allocation9 + $0x14] sm:$0xf]
    %v5321 = vld [vmem:[#allocation9 + $0x18] sm:$0xf]
    %v5322 = vld [vmem:[#allocation9 + $0x1c] sm:$0xf]
    %v5323 = vld [vmem:[#allocation9 + $0x20] sm:$0xf]
    %v5324 = vld [vmem:[#allocation9 + $0x24] sm:$0xf]
    %v5325 = vld [vmem:[#allocation9 + $0x28] sm:$0xf]
    %v5326 = vld [vmem:[#allocation9 + $0x2c] sm:$0xf]
    %v5327 = vld [vmem:[#allocation9 + $0x30] sm:$0xf]
    %v5328 = vld [vmem:[#allocation9 + $0x34] sm:$0xf]
    %v5329 = vld [vmem:[#allocation9 + $0x38] sm:$0xf]
    %v5330 = vld [vmem:[#allocation9 + $0x3c] sm:$0xf]
    %v5331 = vld [vmem:[#allocation10] sm:$0x1]
    %v5333 = vlaneseq
    %v5334 = vshrl.u32 %v5333, 7
    %v5335 = vsub.s32 0, %v5334
    %v5336 = vrot.slane %v5331, %v5335
    %v5354 = vunpack.c.l.b16 %v5315
    %v5355 = vunpack.c.l.b16 %v5316
    %v5356 = vunpack.c.l.b16 %v5317
    %v5357 = vunpack.c.l.b16 %v5318
    %v5358 = vunpack.c.l.b16 %v5319
    %v5359 = vunpack.c.l.b16 %v5320
    %v5360 = vunpack.c.l.b16 %v5321
    %v5361 = vunpack.c.l.b16 %v5322
    %v5362 = vunpack.c.l.b16 %v5323
    %v5363 = vunpack.c.l.b16 %v5324
    %v5364 = vunpack.c.l.b16 %v5325
    %v5365 = vunpack.c.l.b16 %v5326
    %v5366 = vunpack.c.l.b16 %v5327
    %v5367 = vunpack.c.l.b16 %v5328
    %v5368 = vunpack.c.l.b16 %v5329
    %v5369 = vunpack.c.l.b16 %v5330
    %v5370 = vpack.c.b16 %v5355, %v5354
    %v5371 = vpack.c.b16 %v5357, %v5356
    %v5372 = vpack.c.b16 %v5359, %v5358
    %v5373 = vpack.c.b16 %v5361, %v5360
    %v5374 = vpack.c.b16 %v5363, %v5362
    %v5375 = vpack.c.b16 %v5365, %v5364
    %v5376 = vpack.c.b16 %v5367, %v5366
    %v5377 = vpack.c.b16 %v5369, %v5368
    %5386 = vmatprep.subr.bf16.mxu0 0
    %5387 = vmatpush1.bf16.msra.mxu0 %v5370
    %5388 = vmatprep.subr.bf16.mxu0 0
    %5389 = vmatpush1.bf16.msra.mxu0 %v5371
    %5390 = vmatprep.subr.bf16.mxu0 0
    %5391 = vmatpush1.bf16.msra.mxu0 %v5372
    %5392 = vmatprep.subr.bf16.mxu0 0
    %5393 = vmatpush1.bf16.msra.mxu0 %v5373
    %5394 = vmatprep.subr.bf16.mxu0 0
    %5395 = vmatpush1.bf16.msra.mxu0 %v5374
    %5396 = vmatprep.subr.bf16.mxu0 0
    %5397 = vmatpush1.bf16.msra.mxu0 %v5375
    %5398 = vmatprep.subr.bf16.mxu0 0
    %5399 = vmatpush1.bf16.msra.mxu0 %v5376
    %5400 = vmatprep.subr.bf16.mxu0 0
    %5401 = vmatpush1.bf16.msra.mxu0 %v5377
    %5402 = vmatprep.subr.bf16.mxu0 0
    %5403 = vmatpush1.bf16.msra.mxu0 0
    %5404 = vmatprep.subr.bf16.mxu0 0
    %5405 = vmatpush1.bf16.msra.mxu0 0
    %5406 = vmatprep.subr.bf16.mxu0 0
    %5407 = vmatpush1.bf16.msra.mxu0 0
    %5408 = vmatprep.subr.bf16.mxu0 0
    %5409 = vmatpush1.bf16.msra.mxu0 0
    %5410 = vmatprep.subr.bf16.mxu0 0
    %5411 = vmatpush1.bf16.msra.mxu0 0
    %5412 = vmatprep.subr.bf16.mxu0 0
    %5413 = vmatpush1.bf16.msra.mxu0 0
    %5414 = vmatprep.subr.bf16.mxu0 0
    %5415 = vmatpush1.bf16.msra.mxu0 0
    %5416 = vmatprep.subr.bf16.mxu0 0
    %5417 = vmatpush1.bf16.msra.mxu0 0
    %5418 = vmatprep.mubr.bf16.mxu0 0
    %5419 = vmatmul.mubr.bf16.gmra.mrb[0].mxu0 %v5314
    %v5420 = vpop.f32.mrb[0].mxu0
    %v5421 = vadd.f32 %v5336, %v5420
    %v5422 = vpop.f32.mrb[0].mxu0
    %v5423 = vpop.f32.mrb[0].mxu0
    %v5424 = vpop.f32.mrb[0].mxu0
    %5425 = vdwg.mxu0
    %5426 = vst [vmem:[%s7] sm:$0xff] %v5421
    // Predicated region
    $region54: #{lenet_300_100_cifar.1} parent=1 // pred_check
      _
    $region55: #{lenet_300_100_cifar.1} parent=1 // pred_check_branch
      %5428 = sbr.rel (0) target = $region57
    $region56: #{lenet_300_100_cifar.1} parent=1 // pred_region
      _
    $region57: #{lenet_300_100_cifar.1} parent=1 // pred_fallthru
      _
    // Predicated region
    $region58: #{lenet_300_100_cifar.1} parent=1 // pred_check
      _
    $region59: #{lenet_300_100_cifar.1} parent=1 // pred_check_branch
      %5430 = sbr.rel (0) target = $region61
    $region60: #{lenet_300_100_cifar.1} parent=1 // pred_region
      _
    $region61: #{lenet_300_100_cifar.1} parent=1 // pred_fallthru
      _
    %5431 = vsyncpa [#allocation3], 1
    %5432 = vsyncpa [#allocation5], 1
    %5433 = vsyncpa [#allocation8], 1
    %5434 = vsyncpa [#allocation11], 1

</llo_original>
